<compile_context>
chip_gen: v7x
topology: tpu7x:2x2x1
jax: 0.10.0
libtpu: 0.0.40
codegen_flags: <defaults>
</compile_context>

<pallas_src>
import functools
import math

import jax
import jax.numpy as jnp
from jax.experimental import pallas as pl
from jax.experimental.pallas import tpu as pltpu


# ----------------------------- math helpers --------------------------------

def _layernorm(x, g, b, eps=1e-5):
    # normalize over last (lane) axis; matches torch.nn.LayerNorm(eps=1e-5)
    mu = jnp.mean(x, axis=-1, keepdims=True)
    xc = x - mu
    var = jnp.mean(xc * xc, axis=-1, keepdims=True)
    return xc * jax.lax.rsqrt(var + eps) * g + b


def _gelu_exact(x):
    # exact (erf-based) GELU, matching torch.nn.GELU() default
    # (tanh-approx GELU would use the EUP but deviates from torch parity).
    return 0.5 * x * (1.0 + jax.lax.erf(x * (1.0 / math.sqrt(2.0))))


_BLOCK_PARAM_ORDER = ('g1', 'be1', 'wqkv', 'bqkv', 'wp', 'bp',
                      'g2', 'be2', 'w1', 'b1', 'w2', 'b2')


# --------------------------- fused encoder kernel ---------------------------

def _fused_encoder_kernel(
        # inputs (VMEM)
        xcat_ref,                                  # (bt, Kp)  f32 [src|rel|dst] padded
        fwd_ref,                                   # (bt, T)   int32 shuffle indexes
        wc_ref, bc_ref,                            # (Kp, 3C), (1, 3C)
        pos_ref, cls_ref,                          # (T, C), (1, C)
        g1_ref, be1_ref, wqkv_ref, bqkv_ref, wp_ref, bp_ref,
        g2_ref, be2_ref, w1_ref, b1_ref, w2_ref, b2_ref,
        lng_ref, lnb_ref,                          # (1, C) each
        # outputs (VMEM)
        feat_ref,                                  # (Tt, bt, C) f32  (time-major)
        conv_ref,                                  # (bt, T*C)   f32  (flattened [h|r|t])
        *, approx_recip: bool):
    Tt, bt, C = feat_ref.shape
    T = pos_ref.shape[0]
    L = wqkv_ref.shape[0]
    remain_T = Tt - 1

    def mm(a, w):
        # operand cast to the (bf16/f32) weight dtype once; f32 accumulation
        return jnp.dot(a.astype(w.dtype), w, preferred_element_type=jnp.float32)

    # --- fused h/r/t input projection: one (bt,Kp) @ (Kp,3C) matmul ---------
    proj = mm(xcat_ref[...], wc_ref[...]) + bc_ref[...]       # (bt, 3C) = [h | r | t]

    # conv_input (pre pos-embedding): single lane-dense store; the wrapper
    # reshapes the contiguous (bt, 3C) rows to (bt, 3, C) for free.
    conv_ref[...] = proj

    # per-hop patch tiles with positional embedding (lane-aligned slices)
    patch = [proj[:, j * C:(j + 1) * C] + pos_ref[j:j + 1, :] for j in range(T)]

    # --- PatchShuffle gather, vectorized over (bt, C) tiles ------------------
    # token stream row order is time-major: rows [t*bt, (t+1)*bt) hold token t
    blocks = [jnp.broadcast_to(cls_ref[...], (bt, C))]        # cls token (t = 0)
    for s in range(remain_T):
        idx_s = fwd_ref[:, s:s + 1]                           # (bt, 1) int32
        g = jnp.zeros((bt, C), jnp.float32)
        for j in range(T):                                    # one-hot mask MAC
            g = g + (idx_s == j).astype(jnp.float32) * patch[j]
        blocks.append(g)
    x = jnp.concatenate(blocks, axis=0)                       # (Tt*bt, C)

    # --- transformer blocks ---------------------------------------------------
    for l in range(L):
        # attention branch; 1/sqrt(C) already folded into wqkv/bqkv Q columns
        xn = _layernorm(x, g1_ref[l], be1_ref[l])
        qkv = mm(xn, wqkv_ref[l]) + bqkv_ref[l]               # one (R, 3C) matmul
        q = qkv[:, 0:C]
        k = qkv[:, C:2 * C]
        v = qkv[:, 2 * C:3 * C]
        k_rows = [k[t * bt:(t + 1) * bt, :] for t in range(Tt)]
        v_rows = [v[t * bt:(t + 1) * bt, :] for t in range(Tt)]

        attn_rows = []
        for qi in range(Tt):                                  # tiny TtxTt attention,
            q_t = q[qi * bt:(qi + 1) * bt, :]                 # kept off the MXU
            sc = [jnp.sum(q_t * k_rows[ki], axis=-1, keepdims=True)
                  for ki in range(Tt)]                        # Tt x (bt, 1)
            m = sc[0]
            for s_ in sc[1:]:
                m = jnp.maximum(m, s_)
            ps = [jnp.exp(s_ - m) for s_ in sc]
            den = ps[0]
            for p_ in ps[1:]:
                den = den + p_
            inv = pl.reciprocal(den, approx=approx_recip)     # EUP on fast path
            o = ps[0] * v_rows[0]
            for ki in range(1, Tt):
                o = o + ps[ki] * v_rows[ki]
            attn_rows.append(o * inv)
        a = jnp.concatenate(attn_rows, axis=0)                # (R, C), time-major
        x = x + mm(a, wp_ref[l]) + bp_ref[l]

        # MLP branch (exact erf GELU == torch.nn.GELU default)
        xn2 = _layernorm(x, g2_ref[l], be2_ref[l])
        h = _gelu_exact(mm(xn2, w1_ref[l]) + b1_ref[l])
        x = x + mm(h, w2_ref[l]) + b2_ref[l]

    # --- final LayerNorm + single lane-dense (t, b, c) store ------------------
    x = _layernorm(x, lng_ref[...], lnb_ref[...])
    feat_ref[...] = x.reshape(Tt, bt, C)


def _fused_encoder_call(fp, x_cat, fwd_bt, *, Tt, bt, approx_recip):
    B, Kp = x_cat.shape
    T, C = fp['pos'].shape
    assert B % bt == 0
    nt = B // bt

    def rep(arr):
        zeros = (0,) * arr.ndim
        return pl.BlockSpec(arr.shape, lambda i, z=zeros: z)

    ordered = ([x_cat, fwd_bt, fp['w_comb'], fp['b_comb'], fp['pos'], fp['cls']]
               + [fp[name] for name in _BLOCK_PARAM_ORDER]
               + [fp['ln_g'], fp['ln_b']])
    in_specs = ([pl.BlockSpec((bt, Kp), lambda i: (i, 0)),
                 pl.BlockSpec((bt, T), lambda i: (i, 0))]
                + [rep(a) for a in ordered[2:]])

    grid_spec = pltpu.PrefetchScalarGridSpec(
        num_scalar_prefetch=0,
        grid=(nt,),
        in_specs=in_specs,
        out_specs=[pl.BlockSpec((Tt, bt, C), lambda i: (0, i, 0)),
                   pl.BlockSpec((bt, T * C), lambda i: (i, 0))],
    )
    kernel = functools.partial(_fused_encoder_kernel, approx_recip=approx_recip)
    feats, conv_flat = pl.pallas_call(
        kernel,
        grid_spec=grid_spec,
        out_shape=[jax.ShapeDtypeStruct((Tt, B, C), jnp.float32),
                   jax.ShapeDtypeStruct((B, T * C), jnp.float32)],
        compiler_params=pltpu.CompilerParams(
            dimension_semantics=("parallel",)),
    )(*ordered)
    return feats, conv_flat.reshape(B, T, C)


# ------------------------------ parameters ---------------------------------

def init_params(key, emb_dim=128, num_layer=2, num_hops=3,
                h_dim=25, t_dim=26, r_dim=1, mlp_ratio=4.0):
    def nxt():
        nonlocal key
        key, sub = jax.random.split(key)
        return sub

    def lin(in_d, out_d):
        w = jax.random.normal(nxt(), (in_d, out_d), jnp.float32) * 0.02
        b = jax.random.normal(nxt(), (1, out_d), jnp.float32) * 0.02
        return w, b

    params = {}
    # trunc_normal_(std=0.02) approximated with plain normal*0.02 (deterministic)
    params['cls_token'] = jax.random.normal(nxt(), (1, 1, emb_dim), jnp.float32) * 0.02
    params['pos_embedding'] = jax.random.normal(nxt(), (num_hops, 1, emb_dim), jnp.float32) * 0.02
    params['wh'], params['bh'] = lin(h_dim, emb_dim)
    params['wt'], params['bt'] = lin(t_dim, emb_dim)
    params['wr'], params['br'] = lin(r_dim, emb_dim)

    hidden = int(emb_dim * mlp_ratio)
    blocks = []
    for _ in range(num_layer):
        blk = {}
        blk['g1'] = jnp.ones((1, emb_dim), jnp.float32)
        blk['be1'] = jnp.zeros((1, emb_dim), jnp.float32)
        blk['wq'], blk['bq'] = lin(emb_dim, emb_dim)
        blk['wk'], blk['bk'] = lin(emb_dim, emb_dim)
        blk['wv'], blk['bv'] = lin(emb_dim, emb_dim)
        blk['wp'], blk['bp'] = lin(emb_dim, emb_dim)
        blk['g2'] = jnp.ones((1, emb_dim), jnp.float32)
        blk['be2'] = jnp.zeros((1, emb_dim), jnp.float32)
        blk['w1'], blk['b1'] = lin(emb_dim, hidden)
        blk['w2'], blk['b2'] = lin(hidden, emb_dim)
        blocks.append(blk)
    params['blocks'] = blocks
    params['ln_g'] = jnp.ones((1, emb_dim), jnp.float32)
    params['ln_b'] = jnp.zeros((1, emb_dim), jnp.float32)
    return params


def prepare_fused_params(params, use_bf16=True):
    """One-time prep: padded block-diagonal input projection, fused QKV weight
    (qk 1/sqrt(C) folded into the Q columns), per-layer params stacked, matmul
    weights optionally in bf16 (f32 path kept for tight-tolerance debugging)."""
    C = params['cls_token'].shape[-1]
    wdt = jnp.bfloat16 if use_bf16 else jnp.float32
    wh, wr, wt = params['wh'], params['wr'], params['wt']
    h_dim, r_dim, t_dim = wh.shape[0], wr.shape[0], wt.shape[0]
    K = h_dim + r_dim + t_dim
    Kp = max(128, ((K + 127) // 128) * 128)

    # block-diagonal combined weight: [src_x | src_dst_x | dst_x] -> [h | r | t]
    w_comb = jnp.zeros((Kp, 3 * C), jnp.float32)
    w_comb = w_comb.at[:h_dim, 0:C].set(wh)
    w_comb = w_comb.at[h_dim:h_dim + r_dim, C:2 * C].set(wr)
    w_comb = w_comb.at[h_dim + r_dim:K, 2 * C:3 * C].set(wt)
    b_comb = jnp.concatenate([params['bh'], params['br'], params['bt']], axis=1)

    fp = {
        'w_comb': w_comb.astype(wdt),
        'b_comb': b_comb,
        'pos': params['pos_embedding'][:, 0, :],     # (T, C)
        'cls': params['cls_token'][0],               # (1, C)
        'ln_g': params['ln_g'],
        'ln_b': params['ln_b'],
    }

    scale = 1.0 / math.sqrt(C)                       # attention scales by sqrt(dim)
    stack = lambda name: jnp.stack([blk[name] for blk in params['blocks']], axis=0)

    # fused QKV, 1/sqrt(C) folded into the Q slice
    wqkv = jnp.concatenate([stack('wq') * scale, stack('wk'), stack('wv')], axis=-1)
    bqkv = jnp.concatenate([stack('bq') * scale, stack('bk'), stack('bv')], axis=-1)
    fp['wqkv'] = wqkv.astype(wdt)                    # (L, C, 3C)
    fp['bqkv'] = bqkv                                # (L, 1, 3C) f32
    for name in ('g1', 'be1', 'g2', 'be2', 'bp', 'b1', 'b2'):
        fp[name] = stack(name)
    for name in ('wp', 'w1', 'w2'):
        fp[name] = stack(name).astype(wdt)
    return fp


# ------------------------- shuffle index generation -------------------------

def make_shuffle_indexes(key, T, B):
    """Device-side replacement for PatchShuffle's per-sample numpy permutation."""
    # TODO(synk): PatchShuffle uses host-side np.random.shuffle; reproduced with
    # jax.random.permutation per sample (same semantics, different RNG stream).
    keys = jax.random.split(key, B)
    fwd = jax.vmap(lambda k: jax.random.permutation(k, T))(keys)   # (B, T)
    fwd = jnp.transpose(fwd).astype(jnp.int32)                     # (T, B)
    bwd = jnp.argsort(fwd, axis=0).astype(jnp.int32)               # (T, B)
    return fwd, bwd


# ------------------------------- forward ------------------------------------

def mae_encoder_pretrain_forward(fp, src_x, dst_x, src_dst_x, fwd_idx, bwd_idx,
                                 *, mask_ratio):
    B = src_x.shape[0]
    T, C = fp['pos'].shape
    remain_T = int(T * (1 - mask_ratio))
    if remain_T < 1:
        # module default mask_ratio=0.75 keeps int(3*0.25)=0 patches (degenerate)
        raise ValueError("mask_ratio leaves no visible patches (remain_T == 0)")
    Tt = remain_T + 1
    Kp = fp['w_comb'].shape[0]
    K = src_x.shape[1] + src_dst_x.shape[1] + dst_x.shape[1]

    # single tiny concat+pad (weights were padded once at prep time)
    x_cat = jnp.concatenate(
        [src_x, src_dst_x, dst_x, jnp.zeros((B, Kp - K), jnp.float32)], axis=1)
    fwd_bt = jnp.transpose(fwd_idx).astype(jnp.int32)            # (B, T)

    # grid: split across batch only when both v7x TensorCores get >= 256 rows
    # of 8-aligned work per step; on single-TC v5e/v6e a split is pure overhead.
    bt = B
    if B % 2 == 0:
        half = B // 2
        if half % 8 == 0 and half * Tt >= 256:
            bt = half

    approx = fp['wqkv'].dtype == jnp.bfloat16        # exact softmax on f32 path
    feats, conv_input = _fused_encoder_call(fp, x_cat, fwd_bt, Tt=Tt, bt=bt,
                                            approx_recip=approx)
    # feats already emitted time-major (Tt, B, C) by the kernel
    return feats, bwd_idx, conv_input


# ----------------------- pure-JAX f32 reference ------------------------------

def reference_forward(params, src_x, dst_x, src_dst_x, fwd_idx, mask_ratio):
    P = jax.lax.Precision.HIGHEST
    C = params['cls_token'].shape[-1]
    h = jnp.dot(src_x, params['wh'], precision=P) + params['bh']
    t = jnp.dot(dst_x, params['wt'], precision=P) + params['bt']
    r = jnp.dot(src_dst_x, params['wr'], precision=P) + params['br']
    conv_input = jnp.stack([h, r, t], axis=1)                      # (B, 3, C)
    patches = jnp.transpose(conv_input, (1, 0, 2)) + params['pos_embedding']
    T, B, _ = patches.shape
    remain_T = int(T * (1 - mask_ratio))
    gidx = jnp.broadcast_to(fwd_idx[:, :, None], patches.shape)
    patches = jnp.take_along_axis(patches, gidx, axis=0)[:remain_T]
    cls = jnp.broadcast_to(params['cls_token'], (1, B, C))
    x = jnp.transpose(jnp.concatenate([cls, patches], axis=0), (1, 0, 2))
    for blk in params['blocks']:
        xn = _layernorm(x, blk['g1'], blk['be1'])
        q = jnp.einsum('btc,cd->btd', xn, blk['wq'], precision=P) + blk['bq']
        k = jnp.einsum('btc,cd->btd', xn, blk['wk'], precision=P) + blk['bk']
        v = jnp.einsum('btc,cd->btd', xn, blk['wv'], precision=P) + blk['bv']
        s = jnp.einsum('bqc,bkc->bqk', q, k, precision=P) / math.sqrt(C)
        p = jax.nn.softmax(s, axis=-1)
        a = jnp.einsum('bqk,bkc->bqc', p, v, precision=P)
        a = jnp.einsum('btc,cd->btd', a, blk['wp'], precision=P) + blk['bp']
        x = x + a
        xn2 = _layernorm(x, blk['g2'], blk['be2'])
        hh = _gelu_exact(jnp.einsum('btc,ch->bth', xn2, blk['w1'], precision=P) + blk['b1'])
        x = x + jnp.einsum('bth,hc->btc', hh, blk['w2'], precision=P) + blk['b2']
    x = _layernorm(x, params['ln_g'], params['ln_b'])
    return jnp.transpose(x, (1, 0, 2)), conv_input


# --------------------------------- main -------------------------------------

if __name__ == "__main__":
    B = 2
    emb_dim, num_layer, num_hops = 128, 2, 3
    h_dim, t_dim, r_dim = 25, 26, 1
    # NOTE: the module default mask_ratio=0.75 keeps int(3*0.25)=0 patches
    # (degenerate empty sequence); use 0.25 so remain_T=2.
    mask_ratio = 0.25

    key = jax.random.PRNGKey(0)
    kp, k1, k2, k3, ks = jax.random.split(key, 5)
    params = init_params(kp, emb_dim=emb_dim, num_layer=num_layer,
                         num_hops=num_hops, h_dim=h_dim, t_dim=t_dim, r_dim=r_dim)

    src_x = jax.random.normal(k1, (B, h_dim), jnp.float32)
    dst_x = jax.random.normal(k2, (B, t_dim), jnp.float32)
    src_dst_x = jax.random.normal(k3, (B, r_dim), jnp.float32)

    # PatchShuffle permutations generated on device, fed to the kernel as VMEM ints
    fwd_idx, bwd_idx = make_shuffle_indexes(ks, num_hops, B)

    remain_T = int(num_hops * (1 - mask_ratio))
    feat_shape = (remain_T + 1, B, emb_dim)

    # pure-JAX f32 reference
    feat_ref_v, conv_ref_v = reference_forward(params, src_x, dst_x, src_dst_x,
                                               fwd_idx, mask_ratio)

    fwd_fn = jax.jit(functools.partial(mae_encoder_pretrain_forward,
                                       mask_ratio=mask_ratio))

    # --- f32 debug path: exact weights + exact softmax, tight tolerance -----
    fp_f32 = prepare_fused_params(params, use_bf16=False)
    f32_feats, f32_bwd, f32_conv = fwd_fn(fp_f32, src_x, dst_x, src_dst_x,
                                          fwd_idx, bwd_idx)
    jax.block_until_ready((f32_feats, f32_bwd, f32_conv))
    assert f32_feats.shape == feat_shape
    assert f32_bwd.shape == (num_hops, B)
    assert f32_conv.shape == (B, 3, emb_dim)
    assert bool(jnp.all(jnp.isfinite(f32_feats)))
    assert float(jnp.max(jnp.abs(f32_conv - conv_ref_v))) < 3e-3
    assert float(jnp.max(jnp.abs(f32_feats - feat_ref_v))) < 3e-2

    # --- bf16 fast path: bf16 MXU operands + approx softmax reciprocal ------
    fp_bf16 = prepare_fused_params(params, use_bf16=True)
    features, backward_indexes, conv_input = fwd_fn(fp_bf16, src_x, dst_x,
                                                    src_dst_x, fwd_idx, bwd_idx)
    jax.block_until_ready((features, backward_indexes, conv_input))
    assert features.shape == feat_shape
    assert backward_indexes.shape == (num_hops, B)
    assert conv_input.shape == (B, 3, emb_dim)
    assert bool(jnp.all(jnp.isfinite(features)))
    assert float(jnp.max(jnp.abs(conv_input - conv_ref_v))) < 5e-2
    assert float(jnp.max(jnp.abs(features - feat_ref_v))) < 3e-1

    print("KERNEL_OK")
</pallas_src>

<mosaic_0001>
module attributes {stable_mosaic.version = 11 : i64} {
  func.func @_fused_encoder_kernel(%arg0: i32, %arg1: memref<2x128xf32, #tpu.memory_space<vmem>>, %arg2: memref<2x3xi32, #tpu.memory_space<vmem>>, %arg3: memref<128x384xf32, #tpu.memory_space<vmem>>, %arg4: memref<1x384xf32, #tpu.memory_space<vmem>>, %arg5: memref<3x128xf32, #tpu.memory_space<vmem>>, %arg6: memref<1x128xf32, #tpu.memory_space<vmem>>, %arg7: memref<2x1x128xf32, #tpu.memory_space<vmem>>, %arg8: memref<2x1x128xf32, #tpu.memory_space<vmem>>, %arg9: memref<2x128x384xf32, #tpu.memory_space<vmem>>, %arg10: memref<2x1x384xf32, #tpu.memory_space<vmem>>, %arg11: memref<2x128x128xf32, #tpu.memory_space<vmem>>, %arg12: memref<2x1x128xf32, #tpu.memory_space<vmem>>, %arg13: memref<2x1x128xf32, #tpu.memory_space<vmem>>, %arg14: memref<2x1x128xf32, #tpu.memory_space<vmem>>, %arg15: memref<2x128x512xf32, #tpu.memory_space<vmem>>, %arg16: memref<2x1x512xf32, #tpu.memory_space<vmem>>, %arg17: memref<2x512x128xf32, #tpu.memory_space<vmem>>, %arg18: memref<2x1x128xf32, #tpu.memory_space<vmem>>, %arg19: memref<1x128xf32, #tpu.memory_space<vmem>>, %arg20: memref<1x128xf32, #tpu.memory_space<vmem>>, %arg21: memref<3x2x128xf32, #tpu.memory_space<vmem>>, %arg22: memref<2x384xf32, #tpu.memory_space<vmem>>) attributes {dimension_semantics = [#tpu.dimension_semantics<parallel>], iteration_bounds = array<i64: 1>, scalar_prefetch = 0 : i64, scratch_operands = 0 : i64, tpu.core_type = #tpu.core_type<tc>, window_params = [{transform_indices = @transform_0, window_bounds = array<i64: 2, 128>}, {transform_indices = @transform_1, window_bounds = array<i64: 2, 3>}, {pipeline_mode = #tpu.pipeline_mode<synchronous>, transform_indices = @transform_2, window_bounds = array<i64: 128, 384>}, {pipeline_mode = #tpu.pipeline_mode<synchronous>, transform_indices = @transform_3, window_bounds = array<i64: 1, 384>}, {pipeline_mode = #tpu.pipeline_mode<synchronous>, transform_indices = @transform_4, window_bounds = array<i64: 3, 128>}, {pipeline_mode = #tpu.pipeline_mode<synchronous>, transform_indices = @transform_5, window_bounds = array<i64: 1, 128>}, {pipeline_mode = #tpu.pipeline_mode<synchronous>, transform_indices = @transform_6, window_bounds = array<i64: 2, 1, 128>}, {pipeline_mode = #tpu.pipeline_mode<synchronous>, transform_indices = @transform_7, window_bounds = array<i64: 2, 1, 128>}, {pipeline_mode = #tpu.pipeline_mode<synchronous>, transform_indices = @transform_8, window_bounds = array<i64: 2, 128, 384>}, {pipeline_mode = #tpu.pipeline_mode<synchronous>, transform_indices = @transform_9, window_bounds = array<i64: 2, 1, 384>}, {pipeline_mode = #tpu.pipeline_mode<synchronous>, transform_indices = @transform_10, window_bounds = array<i64: 2, 128, 128>}, {pipeline_mode = #tpu.pipeline_mode<synchronous>, transform_indices = @transform_11, window_bounds = array<i64: 2, 1, 128>}, {pipeline_mode = #tpu.pipeline_mode<synchronous>, transform_indices = @transform_12, window_bounds = array<i64: 2, 1, 128>}, {pipeline_mode = #tpu.pipeline_mode<synchronous>, transform_indices = @transform_13, window_bounds = array<i64: 2, 1, 128>}, {pipeline_mode = #tpu.pipeline_mode<synchronous>, transform_indices = @transform_14, window_bounds = array<i64: 2, 128, 512>}, {pipeline_mode = #tpu.pipeline_mode<synchronous>, transform_indices = @transform_15, window_bounds = array<i64: 2, 1, 512>}, {pipeline_mode = #tpu.pipeline_mode<synchronous>, transform_indices = @transform_16, window_bounds = array<i64: 2, 512, 128>}, {pipeline_mode = #tpu.pipeline_mode<synchronous>, transform_indices = @transform_17, window_bounds = array<i64: 2, 1, 128>}, {pipeline_mode = #tpu.pipeline_mode<synchronous>, transform_indices = @transform_18, window_bounds = array<i64: 1, 128>}, {pipeline_mode = #tpu.pipeline_mode<synchronous>, transform_indices = @transform_19, window_bounds = array<i64: 1, 128>}, {transform_indices = @transform_20, window_bounds = array<i64: 3, 2, 128>}, {transform_indices = @transform_21, window_bounds = array<i64: 2, 384>}]} {
    %c0 = arith.constant 0 : index
    %c0_0 = arith.constant 0 : index
    %0 = vector.load %arg1[%c0, %c0_0] : memref<2x128xf32, #tpu.memory_space<vmem>>, vector<2x128xf32>
    %c0_1 = arith.constant 0 : index
    %c0_2 = arith.constant 0 : index
    %1 = vector.load %arg3[%c0_1, %c0_2] : memref<128x384xf32, #tpu.memory_space<vmem>>, vector<128x384xf32>
    %cst = arith.constant dense<0.000000e+00> : vector<2x384xf32>
    %2 = tpu.matmul %0, %1, %cst {dimension_numbers = #tpu.dot_dimension_numbers<[1], [0], [0], [1], [0, 0, 1, 1], [], []>} : vector<2x128xf32>, vector<128x384xf32>, vector<2x384xf32> -> vector<2x384xf32>
    %c0_3 = arith.constant 0 : index
    %c0_4 = arith.constant 0 : index
    %3 = vector.load %arg4[%c0_3, %c0_4] : memref<1x384xf32, #tpu.memory_space<vmem>>, vector<1x384xf32>
    %4 = vector.broadcast %3 : vector<1x384xf32> to vector<2x384xf32>
    %5 = arith.addf %2, %4 : vector<2x384xf32>
    %c0_5 = arith.constant 0 : index
    %c0_6 = arith.constant 0 : index
    %6 = vector.load %arg22[%c0_5, %c0_6] : memref<2x384xf32, #tpu.memory_space<vmem>>, vector<2x384xf32>
    tpu.vector_store %arg22[%c0_5, %c0_6], %5 {strides = array<i32>} : memref<2x384xf32, #tpu.memory_space<vmem>>, vector<2x384xf32>,
    %7 = vector.extract_strided_slice %5 {offsets = [0, 0], sizes = [2, 128], strides = [1, 1]} : vector<2x384xf32> to vector<2x128xf32>
    %c0_7 = arith.constant 0 : index
    %c0_8 = arith.constant 0 : index
    %8 = vector.load %arg5[%c0_7, %c0_8] : memref<3x128xf32, #tpu.memory_space<vmem>>, vector<1x128xf32>
    %9 = vector.broadcast %8 : vector<1x128xf32> to vector<2x128xf32>
    %10 = arith.addf %7, %9 : vector<2x128xf32>
    %11 = vector.extract_strided_slice %5 {offsets = [0, 128], sizes = [2, 128], strides = [1, 1]} : vector<2x384xf32> to vector<2x128xf32>
    %c1 = arith.constant 1 : index
    %c0_9 = arith.constant 0 : index
    %12 = vector.load %arg5[%c1, %c0_9] : memref<3x128xf32, #tpu.memory_space<vmem>>, vector<1x128xf32>
    %13 = vector.broadcast %12 : vector<1x128xf32> to vector<2x128xf32>
    %14 = arith.addf %11, %13 : vector<2x128xf32>
    %15 = vector.extract_strided_slice %5 {offsets = [0, 256], sizes = [2, 128], strides = [1, 1]} : vector<2x384xf32> to vector<2x128xf32>
    %c2 = arith.constant 2 : index
    %c0_10 = arith.constant 0 : index
    %16 = vector.load %arg5[%c2, %c0_10] : memref<3x128xf32, #tpu.memory_space<vmem>>, vector<1x128xf32>
    %17 = vector.broadcast %16 : vector<1x128xf32> to vector<2x128xf32>
    %18 = arith.addf %15, %17 : vector<2x128xf32>
    %c0_11 = arith.constant 0 : index
    %c0_12 = arith.constant 0 : index
    %19 = vector.load %arg6[%c0_11, %c0_12] : memref<1x128xf32, #tpu.memory_space<vmem>>, vector<1x128xf32>
    %20 = vector.shape_cast %19 : vector<1x128xf32> to vector<1x128xf32>
    %21 = vector.broadcast %20 : vector<1x128xf32> to vector<2x128xf32>
    %c0_13 = arith.constant 0 : index
    %c0_14 = arith.constant 0 : index
    %22 = vector.load %arg2[%c0_13, %c0_14] : memref<2x3xi32, #tpu.memory_space<vmem>>, vector<2x1xi32>
    %cst_15 = arith.constant 0.000000e+00 : f32
    %23 = vector.broadcast %cst_15 : f32 to vector<2x128xf32>
    %c0_i32 = arith.constant 0 : i32
    %24 = vector.broadcast %c0_i32 : i32 to vector<2x1xi32>
    %25 = arith.cmpi eq, %22, %24 : vector<2x1xi32>
    %26 = arith.extui %25 : vector<2x1xi1> to vector<2x1xi32>
    %27 = arith.sitofp %26 : vector<2x1xi32> to vector<2x1xf32>
    %28 = vector.broadcast %27 : vector<2x1xf32> to vector<2x128xf32>
    %29 = arith.mulf %28, %10 : vector<2x128xf32>
    %30 = arith.addf %23, %29 : vector<2x128xf32>
    %c1_i32 = arith.constant 1 : i32
    %31 = vector.broadcast %c1_i32 : i32 to vector<2x1xi32>
    %32 = arith.cmpi eq, %22, %31 : vector<2x1xi32>
    %33 = arith.extui %32 : vector<2x1xi1> to vector<2x1xi32>
    %34 = arith.sitofp %33 : vector<2x1xi32> to vector<2x1xf32>
    %35 = vector.broadcast %34 : vector<2x1xf32> to vector<2x128xf32>
    %36 = arith.mulf %35, %14 : vector<2x128xf32>
    %37 = arith.addf %30, %36 : vector<2x128xf32>
    %c2_i32 = arith.constant 2 : i32
    %38 = vector.broadcast %c2_i32 : i32 to vector<2x1xi32>
    %39 = arith.cmpi eq, %22, %38 : vector<2x1xi32>
    %40 = arith.extui %39 : vector<2x1xi1> to vector<2x1xi32>
    %41 = arith.sitofp %40 : vector<2x1xi32> to vector<2x1xf32>
    %42 = vector.broadcast %41 : vector<2x1xf32> to vector<2x128xf32>
    %43 = arith.mulf %42, %18 : vector<2x128xf32>
    %44 = arith.addf %37, %43 : vector<2x128xf32>
    %c0_16 = arith.constant 0 : index
    %c1_17 = arith.constant 1 : index
    %45 = vector.load %arg2[%c0_16, %c1_17] : memref<2x3xi32, #tpu.memory_space<vmem>>, vector<2x1xi32>
    %cst_18 = arith.constant 0.000000e+00 : f32
    %46 = vector.broadcast %cst_18 : f32 to vector<2x128xf32>
    %c0_i32_19 = arith.constant 0 : i32
    %47 = vector.broadcast %c0_i32_19 : i32 to vector<2x1xi32>
    %48 = arith.cmpi eq, %45, %47 : vector<2x1xi32>
    %49 = arith.extui %48 : vector<2x1xi1> to vector<2x1xi32>
    %50 = arith.sitofp %49 : vector<2x1xi32> to vector<2x1xf32>
    %51 = vector.broadcast %50 : vector<2x1xf32> to vector<2x128xf32>
    %52 = arith.mulf %51, %10 : vector<2x128xf32>
    %53 = arith.addf %46, %52 : vector<2x128xf32>
    %c1_i32_20 = arith.constant 1 : i32
    %54 = vector.broadcast %c1_i32_20 : i32 to vector<2x1xi32>
    %55 = arith.cmpi eq, %45, %54 : vector<2x1xi32>
    %56 = arith.extui %55 : vector<2x1xi1> to vector<2x1xi32>
    %57 = arith.sitofp %56 : vector<2x1xi32> to vector<2x1xf32>
    %58 = vector.broadcast %57 : vector<2x1xf32> to vector<2x128xf32>
    %59 = arith.mulf %58, %14 : vector<2x128xf32>
    %60 = arith.addf %53, %59 : vector<2x128xf32>
    %c2_i32_21 = arith.constant 2 : i32
    %61 = vector.broadcast %c2_i32_21 : i32 to vector<2x1xi32>
    %62 = arith.cmpi eq, %45, %61 : vector<2x1xi32>
    %63 = arith.extui %62 : vector<2x1xi1> to vector<2x1xi32>
    %64 = arith.sitofp %63 : vector<2x1xi32> to vector<2x1xf32>
    %65 = vector.broadcast %64 : vector<2x1xf32> to vector<2x128xf32>
    %66 = arith.mulf %65, %18 : vector<2x128xf32>
    %67 = arith.addf %60, %66 : vector<2x128xf32>
    %68 = tpu.concatenate %21, %44, %67 in 0 : vector<2x128xf32>, vector<2x128xf32>, vector<2x128xf32> -> vector<6x128xf32>
    %c0_22 = arith.constant 0 : index
    %c0_23 = arith.constant 0 : index
    %c0_24 = arith.constant 0 : index
    %69 = vector.load %arg7[%c0_22, %c0_23, %c0_24] : memref<2x1x128xf32, #tpu.memory_space<vmem>>, vector<1x1x128xf32>
    %70 = vector.shape_cast %69 : vector<1x1x128xf32> to vector<1x128xf32>
    %c0_25 = arith.constant 0 : index
    %c0_26 = arith.constant 0 : index
    %c0_27 = arith.constant 0 : index
    %71 = vector.load %arg8[%c0_25, %c0_26, %c0_27] : memref<2x1x128xf32, #tpu.memory_space<vmem>>, vector<1x1x128xf32>
    %72 = vector.shape_cast %71 : vector<1x1x128xf32> to vector<1x128xf32>
    %cst_28 = arith.constant dense<0.000000e+00> : vector<6xf32>
    %73 = vector.multi_reduction <add>, %68, %cst_28 [1] : vector<6x128xf32> to vector<6xf32>
    %74 = vector.shape_cast %73 : vector<6xf32> to vector<6x1xf32>
    %cst_29 = arith.constant 1.280000e+02 : f32
    %75 = vector.broadcast %cst_29 : f32 to vector<6x1xf32>
    %76 = arith.divf %74, %75 : vector<6x1xf32>
    %77 = vector.broadcast %76 : vector<6x1xf32> to vector<6x128xf32>
    %78 = arith.subf %68, %77 : vector<6x128xf32>
    %79 = arith.mulf %78, %78 : vector<6x128xf32>
    %cst_30 = arith.constant dense<0.000000e+00> : vector<6xf32>
    %80 = vector.multi_reduction <add>, %79, %cst_30 [1] : vector<6x128xf32> to vector<6xf32>
    %81 = vector.shape_cast %80 : vector<6xf32> to vector<6x1xf32>
    %cst_31 = arith.constant 1.280000e+02 : f32
    %82 = vector.broadcast %cst_31 : f32 to vector<6x1xf32>
    %83 = arith.divf %81, %82 : vector<6x1xf32>
    %cst_32 = arith.constant 9.99999974E-6 : f32
    %84 = vector.broadcast %cst_32 : f32 to vector<6x1xf32>
    %85 = arith.addf %83, %84 : vector<6x1xf32>
    %86 = math.rsqrt %85 : vector<6x1xf32>
    %87 = vector.broadcast %86 : vector<6x1xf32> to vector<6x128xf32>
    %88 = arith.mulf %78, %87 : vector<6x128xf32>
    %89 = vector.broadcast %70 : vector<1x128xf32> to vector<6x128xf32>
    %90 = arith.mulf %88, %89 : vector<6x128xf32>
    %91 = vector.broadcast %72 : vector<1x128xf32> to vector<6x128xf32>
    %92 = arith.addf %90, %91 : vector<6x128xf32>
    %c0_33 = arith.constant 0 : index
    %c0_34 = arith.constant 0 : index
    %c0_35 = arith.constant 0 : index
    %93 = vector.load %arg9[%c0_33, %c0_34, %c0_35] : memref<2x128x384xf32, #tpu.memory_space<vmem>>, vector<1x128x384xf32>
    %94 = vector.shape_cast %93 : vector<1x128x384xf32> to vector<128x384xf32>
    %cst_36 = arith.constant dense<0.000000e+00> : vector<6x384xf32>
    %95 = tpu.matmul %92, %94, %cst_36 {dimension_numbers = #tpu.dot_dimension_numbers<[1], [0], [0], [1], [0, 0, 1, 1], [], []>} : vector<6x128xf32>, vector<128x384xf32>, vector<6x384xf32> -> vector<6x384xf32>
    %c0_37 = arith.constant 0 : index
    %c0_38 = arith.constant 0 : index
    %c0_39 = arith.constant 0 : index
    %96 = vector.load %arg10[%c0_37, %c0_38, %c0_39] : memref<2x1x384xf32, #tpu.memory_space<vmem>>, vector<1x1x384xf32>
    %97 = vector.shape_cast %96 : vector<1x1x384xf32> to vector<1x384xf32>
    %98 = vector.broadcast %97 : vector<1x384xf32> to vector<6x384xf32>
    %99 = arith.addf %95, %98 : vector<6x384xf32>
    %100 = vector.extract_strided_slice %99 {offsets = [0, 0], sizes = [6, 128], strides = [1, 1]} : vector<6x384xf32> to vector<6x128xf32>
    %101 = vector.extract_strided_slice %99 {offsets = [0, 128], sizes = [6, 128], strides = [1, 1]} : vector<6x384xf32> to vector<6x128xf32>
    %102 = vector.extract_strided_slice %99 {offsets = [0, 256], sizes = [6, 128], strides = [1, 1]} : vector<6x384xf32> to vector<6x128xf32>
    %103 = vector.extract_strided_slice %101 {offsets = [0, 0], sizes = [2, 128], strides = [1, 1]} : vector<6x128xf32> to vector<2x128xf32>
    %104 = vector.extract_strided_slice %101 {offsets = [2, 0], sizes = [2, 128], strides = [1, 1]} : vector<6x128xf32> to vector<2x128xf32>
    %105 = vector.extract_strided_slice %101 {offsets = [4, 0], sizes = [2, 128], strides = [1, 1]} : vector<6x128xf32> to vector<2x128xf32>
    %106 = vector.extract_strided_slice %102 {offsets = [0, 0], sizes = [2, 128], strides = [1, 1]} : vector<6x128xf32> to vector<2x128xf32>
    %107 = vector.extract_strided_slice %102 {offsets = [2, 0], sizes = [2, 128], strides = [1, 1]} : vector<6x128xf32> to vector<2x128xf32>
    %108 = vector.extract_strided_slice %102 {offsets = [4, 0], sizes = [2, 128], strides = [1, 1]} : vector<6x128xf32> to vector<2x128xf32>
    %109 = vector.extract_strided_slice %100 {offsets = [0, 0], sizes = [2, 128], strides = [1, 1]} : vector<6x128xf32> to vector<2x128xf32>
    %110 = arith.mulf %109, %103 : vector<2x128xf32>
    %cst_40 = arith.constant dense<0.000000e+00> : vector<2xf32>
    %111 = vector.multi_reduction <add>, %110, %cst_40 [1] : vector<2x128xf32> to vector<2xf32>
    %112 = vector.shape_cast %111 : vector<2xf32> to vector<2x1xf32>
    %113 = arith.mulf %109, %104 : vector<2x128xf32>
    %cst_41 = arith.constant dense<0.000000e+00> : vector<2xf32>
    %114 = vector.multi_reduction <add>, %113, %cst_41 [1] : vector<2x128xf32> to vector<2xf32>
    %115 = vector.shape_cast %114 : vector<2xf32> to vector<2x1xf32>
    %116 = arith.mulf %109, %105 : vector<2x128xf32>
    %cst_42 = arith.constant dense<0.000000e+00> : vector<2xf32>
    %117 = vector.multi_reduction <add>, %116, %cst_42 [1] : vector<2x128xf32> to vector<2xf32>
    %118 = vector.shape_cast %117 : vector<2xf32> to vector<2x1xf32>
    %119 = arith.maximumf %112, %115 : vector<2x1xf32>
    %120 = arith.maximumf %119, %118 : vector<2x1xf32>
    %121 = arith.subf %112, %120 : vector<2x1xf32>
    %122 = math.exp %121 : vector<2x1xf32>
    %123 = arith.subf %115, %120 : vector<2x1xf32>
    %124 = math.exp %123 : vector<2x1xf32>
    %125 = arith.subf %118, %120 : vector<2x1xf32>
    %126 = math.exp %125 : vector<2x1xf32>
    %127 = arith.addf %122, %124 : vector<2x1xf32>
    %128 = arith.addf %127, %126 : vector<2x1xf32>
    %129 = tpu.reciprocal %128 : vector<2x1xf32> -> vector<2x1xf32>
    %130 = vector.broadcast %122 : vector<2x1xf32> to vector<2x128xf32>
    %131 = arith.mulf %130, %106 : vector<2x128xf32>
    %132 = vector.broadcast %124 : vector<2x1xf32> to vector<2x128xf32>
    %133 = arith.mulf %132, %107 : vector<2x128xf32>
    %134 = arith.addf %131, %133 : vector<2x128xf32>
    %135 = vector.broadcast %126 : vector<2x1xf32> to vector<2x128xf32>
    %136 = arith.mulf %135, %108 : vector<2x128xf32>
    %137 = arith.addf %134, %136 : vector<2x128xf32>
    %138 = vector.broadcast %129 : vector<2x1xf32> to vector<2x128xf32>
    %139 = arith.mulf %137, %138 : vector<2x128xf32>
    %140 = vector.extract_strided_slice %100 {offsets = [2, 0], sizes = [2, 128], strides = [1, 1]} : vector<6x128xf32> to vector<2x128xf32>
    %141 = arith.mulf %140, %103 : vector<2x128xf32>
    %cst_43 = arith.constant dense<0.000000e+00> : vector<2xf32>
    %142 = vector.multi_reduction <add>, %141, %cst_43 [1] : vector<2x128xf32> to vector<2xf32>
    %143 = vector.shape_cast %142 : vector<2xf32> to vector<2x1xf32>
    %144 = arith.mulf %140, %104 : vector<2x128xf32>
    %cst_44 = arith.constant dense<0.000000e+00> : vector<2xf32>
    %145 = vector.multi_reduction <add>, %144, %cst_44 [1] : vector<2x128xf32> to vector<2xf32>
    %146 = vector.shape_cast %145 : vector<2xf32> to vector<2x1xf32>
    %147 = arith.mulf %140, %105 : vector<2x128xf32>
    %cst_45 = arith.constant dense<0.000000e+00> : vector<2xf32>
    %148 = vector.multi_reduction <add>, %147, %cst_45 [1] : vector<2x128xf32> to vector<2xf32>
    %149 = vector.shape_cast %148 : vector<2xf32> to vector<2x1xf32>
    %150 = arith.maximumf %143, %146 : vector<2x1xf32>
    %151 = arith.maximumf %150, %149 : vector<2x1xf32>
    %152 = arith.subf %143, %151 : vector<2x1xf32>
    %153 = math.exp %152 : vector<2x1xf32>
    %154 = arith.subf %146, %151 : vector<2x1xf32>
    %155 = math.exp %154 : vector<2x1xf32>
    %156 = arith.subf %149, %151 : vector<2x1xf32>
    %157 = math.exp %156 : vector<2x1xf32>
    %158 = arith.addf %153, %155 : vector<2x1xf32>
    %159 = arith.addf %158, %157 : vector<2x1xf32>
    %160 = tpu.reciprocal %159 : vector<2x1xf32> -> vector<2x1xf32>
    %161 = vector.broadcast %153 : vector<2x1xf32> to vector<2x128xf32>
    %162 = arith.mulf %161, %106 : vector<2x128xf32>
    %163 = vector.broadcast %155 : vector<2x1xf32> to vector<2x128xf32>
    %164 = arith.mulf %163, %107 : vector<2x128xf32>
    %165 = arith.addf %162, %164 : vector<2x128xf32>
    %166 = vector.broadcast %157 : vector<2x1xf32> to vector<2x128xf32>
    %167 = arith.mulf %166, %108 : vector<2x128xf32>
    %168 = arith.addf %165, %167 : vector<2x128xf32>
    %169 = vector.broadcast %160 : vector<2x1xf32> to vector<2x128xf32>
    %170 = arith.mulf %168, %169 : vector<2x128xf32>
    %171 = vector.extract_strided_slice %100 {offsets = [4, 0], sizes = [2, 128], strides = [1, 1]} : vector<6x128xf32> to vector<2x128xf32>
    %172 = arith.mulf %171, %103 : vector<2x128xf32>
    %cst_46 = arith.constant dense<0.000000e+00> : vector<2xf32>
    %173 = vector.multi_reduction <add>, %172, %cst_46 [1] : vector<2x128xf32> to vector<2xf32>
    %174 = vector.shape_cast %173 : vector<2xf32> to vector<2x1xf32>
    %175 = arith.mulf %171, %104 : vector<2x128xf32>
    %cst_47 = arith.constant dense<0.000000e+00> : vector<2xf32>
    %176 = vector.multi_reduction <add>, %175, %cst_47 [1] : vector<2x128xf32> to vector<2xf32>
    %177 = vector.shape_cast %176 : vector<2xf32> to vector<2x1xf32>
    %178 = arith.mulf %171, %105 : vector<2x128xf32>
    %cst_48 = arith.constant dense<0.000000e+00> : vector<2xf32>
    %179 = vector.multi_reduction <add>, %178, %cst_48 [1] : vector<2x128xf32> to vector<2xf32>
    %180 = vector.shape_cast %179 : vector<2xf32> to vector<2x1xf32>
    %181 = arith.maximumf %174, %177 : vector<2x1xf32>
    %182 = arith.maximumf %181, %180 : vector<2x1xf32>
    %183 = arith.subf %174, %182 : vector<2x1xf32>
    %184 = math.exp %183 : vector<2x1xf32>
    %185 = arith.subf %177, %182 : vector<2x1xf32>
    %186 = math.exp %185 : vector<2x1xf32>
    %187 = arith.subf %180, %182 : vector<2x1xf32>
    %188 = math.exp %187 : vector<2x1xf32>
    %189 = arith.addf %184, %186 : vector<2x1xf32>
    %190 = arith.addf %189, %188 : vector<2x1xf32>
    %191 = tpu.reciprocal %190 : vector<2x1xf32> -> vector<2x1xf32>
    %192 = vector.broadcast %184 : vector<2x1xf32> to vector<2x128xf32>
    %193 = arith.mulf %192, %106 : vector<2x128xf32>
    %194 = vector.broadcast %186 : vector<2x1xf32> to vector<2x128xf32>
    %195 = arith.mulf %194, %107 : vector<2x128xf32>
    %196 = arith.addf %193, %195 : vector<2x128xf32>
    %197 = vector.broadcast %188 : vector<2x1xf32> to vector<2x128xf32>
    %198 = arith.mulf %197, %108 : vector<2x128xf32>
    %199 = arith.addf %196, %198 : vector<2x128xf32>
    %200 = vector.broadcast %191 : vector<2x1xf32> to vector<2x128xf32>
    %201 = arith.mulf %199, %200 : vector<2x128xf32>
    %202 = tpu.concatenate %139, %170, %201 in 0 : vector<2x128xf32>, vector<2x128xf32>, vector<2x128xf32> -> vector<6x128xf32>
    %c0_49 = arith.constant 0 : index
    %c0_50 = arith.constant 0 : index
    %c0_51 = arith.constant 0 : index
    %203 = vector.load %arg11[%c0_49, %c0_50, %c0_51] : memref<2x128x128xf32, #tpu.memory_space<vmem>>, vector<1x128x128xf32>
    %204 = vector.shape_cast %203 : vector<1x128x128xf32> to vector<128x128xf32>
    %cst_52 = arith.constant dense<0.000000e+00> : vector<6x128xf32>
    %205 = tpu.matmul %202, %204, %cst_52 {dimension_numbers = #tpu.dot_dimension_numbers<[1], [0], [0], [1], [0, 0, 1, 1], [], []>} : vector<6x128xf32>, vector<128x128xf32>, vector<6x128xf32> -> vector<6x128xf32>
    %206 = arith.addf %68, %205 : vector<6x128xf32>
    %c0_53 = arith.constant 0 : index
    %c0_54 = arith.constant 0 : index
    %c0_55 = arith.constant 0 : index
    %207 = vector.load %arg12[%c0_53, %c0_54, %c0_55] : memref<2x1x128xf32, #tpu.memory_space<vmem>>, vector<1x1x128xf32>
    %208 = vector.shape_cast %207 : vector<1x1x128xf32> to vector<1x128xf32>
    %209 = vector.broadcast %208 : vector<1x128xf32> to vector<6x128xf32>
    %210 = arith.addf %206, %209 : vector<6x128xf32>
    %c0_56 = arith.constant 0 : index
    %c0_57 = arith.constant 0 : index
    %c0_58 = arith.constant 0 : index
    %211 = vector.load %arg13[%c0_56, %c0_57, %c0_58] : memref<2x1x128xf32, #tpu.memory_space<vmem>>, vector<1x1x128xf32>
    %212 = vector.shape_cast %211 : vector<1x1x128xf32> to vector<1x128xf32>
    %c0_59 = arith.constant 0 : index
    %c0_60 = arith.constant 0 : index
    %c0_61 = arith.constant 0 : index
    %213 = vector.load %arg14[%c0_59, %c0_60, %c0_61] : memref<2x1x128xf32, #tpu.memory_space<vmem>>, vector<1x1x128xf32>
    %214 = vector.shape_cast %213 : vector<1x1x128xf32> to vector<1x128xf32>
    %cst_62 = arith.constant dense<0.000000e+00> : vector<6xf32>
    %215 = vector.multi_reduction <add>, %210, %cst_62 [1] : vector<6x128xf32> to vector<6xf32>
    %216 = vector.shape_cast %215 : vector<6xf32> to vector<6x1xf32>
    %cst_63 = arith.constant 1.280000e+02 : f32
    %217 = vector.broadcast %cst_63 : f32 to vector<6x1xf32>
    %218 = arith.divf %216, %217 : vector<6x1xf32>
    %219 = vector.broadcast %218 : vector<6x1xf32> to vector<6x128xf32>
    %220 = arith.subf %210, %219 : vector<6x128xf32>
    %221 = arith.mulf %220, %220 : vector<6x128xf32>
    %cst_64 = arith.constant dense<0.000000e+00> : vector<6xf32>
    %222 = vector.multi_reduction <add>, %221, %cst_64 [1] : vector<6x128xf32> to vector<6xf32>
    %223 = vector.shape_cast %222 : vector<6xf32> to vector<6x1xf32>
    %cst_65 = arith.constant 1.280000e+02 : f32
    %224 = vector.broadcast %cst_65 : f32 to vector<6x1xf32>
    %225 = arith.divf %223, %224 : vector<6x1xf32>
    %cst_66 = arith.constant 9.99999974E-6 : f32
    %226 = vector.broadcast %cst_66 : f32 to vector<6x1xf32>
    %227 = arith.addf %225, %226 : vector<6x1xf32>
    %228 = math.rsqrt %227 : vector<6x1xf32>
    %229 = vector.broadcast %228 : vector<6x1xf32> to vector<6x128xf32>
    %230 = arith.mulf %220, %229 : vector<6x128xf32>
    %231 = vector.broadcast %212 : vector<1x128xf32> to vector<6x128xf32>
    %232 = arith.mulf %230, %231 : vector<6x128xf32>
    %233 = vector.broadcast %214 : vector<1x128xf32> to vector<6x128xf32>
    %234 = arith.addf %232, %233 : vector<6x128xf32>
    %c0_67 = arith.constant 0 : index
    %c0_68 = arith.constant 0 : index
    %c0_69 = arith.constant 0 : index
    %235 = vector.load %arg15[%c0_67, %c0_68, %c0_69] : memref<2x128x512xf32, #tpu.memory_space<vmem>>, vector<1x128x512xf32>
    %236 = vector.shape_cast %235 : vector<1x128x512xf32> to vector<128x512xf32>
    %cst_70 = arith.constant dense<0.000000e+00> : vector<6x512xf32>
    %237 = tpu.matmul %234, %236, %cst_70 {dimension_numbers = #tpu.dot_dimension_numbers<[1], [0], [0], [1], [0, 0, 1, 1], [], []>} : vector<6x128xf32>, vector<128x512xf32>, vector<6x512xf32> -> vector<6x512xf32>
    %c0_71 = arith.constant 0 : index
    %c0_72 = arith.constant 0 : index
    %c0_73 = arith.constant 0 : index
    %238 = vector.load %arg16[%c0_71, %c0_72, %c0_73] : memref<2x1x512xf32, #tpu.memory_space<vmem>>, vector<1x1x512xf32>
    %239 = vector.shape_cast %238 : vector<1x1x512xf32> to vector<1x512xf32>
    %240 = vector.broadcast %239 : vector<1x512xf32> to vector<6x512xf32>
    %241 = arith.addf %237, %240 : vector<6x512xf32>
    %cst_74 = arith.constant 5.000000e-01 : f32
    %242 = vector.broadcast %cst_74 : f32 to vector<6x512xf32>
    %243 = arith.mulf %242, %241 : vector<6x512xf32>
    %cst_75 = arith.constant 0.707106769 : f32
    %244 = vector.broadcast %cst_75 : f32 to vector<6x512xf32>
    %245 = arith.mulf %241, %244 : vector<6x512xf32>
    %246 = math.erf %245 : vector<6x512xf32>
    %cst_76 = arith.constant 1.000000e+00 : f32
    %247 = vector.broadcast %cst_76 : f32 to vector<6x512xf32>
    %248 = arith.addf %247, %246 : vector<6x512xf32>
    %249 = arith.mulf %243, %248 : vector<6x512xf32>
    %c0_77 = arith.constant 0 : index
    %c0_78 = arith.constant 0 : index
    %c0_79 = arith.constant 0 : index
    %250 = vector.load %arg17[%c0_77, %c0_78, %c0_79] : memref<2x512x128xf32, #tpu.memory_space<vmem>>, vector<1x512x128xf32>
    %251 = vector.shape_cast %250 : vector<1x512x128xf32> to vector<512x128xf32>
    %cst_80 = arith.constant dense<0.000000e+00> : vector<6x128xf32>
    %252 = tpu.matmul %249, %251, %cst_80 {dimension_numbers = #tpu.dot_dimension_numbers<[1], [0], [0], [1], [0, 0, 1, 1], [], []>} : vector<6x512xf32>, vector<512x128xf32>, vector<6x128xf32> -> vector<6x128xf32>
    %253 = arith.addf %210, %252 : vector<6x128xf32>
    %c0_81 = arith.constant 0 : index
    %c0_82 = arith.constant 0 : index
    %c0_83 = arith.constant 0 : index
    %254 = vector.load %arg18[%c0_81, %c0_82, %c0_83] : memref<2x1x128xf32, #tpu.memory_space<vmem>>, vector<1x1x128xf32>
    %255 = vector.shape_cast %254 : vector<1x1x128xf32> to vector<1x128xf32>
    %256 = vector.broadcast %255 : vector<1x128xf32> to vector<6x128xf32>
    %257 = arith.addf %253, %256 : vector<6x128xf32>
    %c1_84 = arith.constant 1 : index
    %c0_85 = arith.constant 0 : index
    %c0_86 = arith.constant 0 : index
    %258 = vector.load %arg7[%c1_84, %c0_85, %c0_86] : memref<2x1x128xf32, #tpu.memory_space<vmem>>, vector<1x1x128xf32>
    %259 = vector.shape_cast %258 : vector<1x1x128xf32> to vector<1x128xf32>
    %c1_87 = arith.constant 1 : index
    %c0_88 = arith.constant 0 : index
    %c0_89 = arith.constant 0 : index
    %260 = vector.load %arg8[%c1_87, %c0_88, %c0_89] : memref<2x1x128xf32, #tpu.memory_space<vmem>>, vector<1x1x128xf32>
    %261 = vector.shape_cast %260 : vector<1x1x128xf32> to vector<1x128xf32>
    %cst_90 = arith.constant dense<0.000000e+00> : vector<6xf32>
    %262 = vector.multi_reduction <add>, %257, %cst_90 [1] : vector<6x128xf32> to vector<6xf32>
    %263 = vector.shape_cast %262 : vector<6xf32> to vector<6x1xf32>
    %cst_91 = arith.constant 1.280000e+02 : f32
    %264 = vector.broadcast %cst_91 : f32 to vector<6x1xf32>
    %265 = arith.divf %263, %264 : vector<6x1xf32>
    %266 = vector.broadcast %265 : vector<6x1xf32> to vector<6x128xf32>
    %267 = arith.subf %257, %266 : vector<6x128xf32>
    %268 = arith.mulf %267, %267 : vector<6x128xf32>
    %cst_92 = arith.constant dense<0.000000e+00> : vector<6xf32>
    %269 = vector.multi_reduction <add>, %268, %cst_92 [1] : vector<6x128xf32> to vector<6xf32>
    %270 = vector.shape_cast %269 : vector<6xf32> to vector<6x1xf32>
    %cst_93 = arith.constant 1.280000e+02 : f32
    %271 = vector.broadcast %cst_93 : f32 to vector<6x1xf32>
    %272 = arith.divf %270, %271 : vector<6x1xf32>
    %cst_94 = arith.constant 9.99999974E-6 : f32
    %273 = vector.broadcast %cst_94 : f32 to vector<6x1xf32>
    %274 = arith.addf %272, %273 : vector<6x1xf32>
    %275 = math.rsqrt %274 : vector<6x1xf32>
    %276 = vector.broadcast %275 : vector<6x1xf32> to vector<6x128xf32>
    %277 = arith.mulf %267, %276 : vector<6x128xf32>
    %278 = vector.broadcast %259 : vector<1x128xf32> to vector<6x128xf32>
    %279 = arith.mulf %277, %278 : vector<6x128xf32>
    %280 = vector.broadcast %261 : vector<1x128xf32> to vector<6x128xf32>
    %281 = arith.addf %279, %280 : vector<6x128xf32>
    %c1_95 = arith.constant 1 : index
    %c0_96 = arith.constant 0 : index
    %c0_97 = arith.constant 0 : index
    %282 = vector.load %arg9[%c1_95, %c0_96, %c0_97] : memref<2x128x384xf32, #tpu.memory_space<vmem>>, vector<1x128x384xf32>
    %283 = vector.shape_cast %282 : vector<1x128x384xf32> to vector<128x384xf32>
    %cst_98 = arith.constant dense<0.000000e+00> : vector<6x384xf32>
    %284 = tpu.matmul %281, %283, %cst_98 {dimension_numbers = #tpu.dot_dimension_numbers<[1], [0], [0], [1], [0, 0, 1, 1], [], []>} : vector<6x128xf32>, vector<128x384xf32>, vector<6x384xf32> -> vector<6x384xf32>
    %c1_99 = arith.constant 1 : index
    %c0_100 = arith.constant 0 : index
    %c0_101 = arith.constant 0 : index
    %285 = vector.load %arg10[%c1_99, %c0_100, %c0_101] : memref<2x1x384xf32, #tpu.memory_space<vmem>>, vector<1x1x384xf32>
    %286 = vector.shape_cast %285 : vector<1x1x384xf32> to vector<1x384xf32>
    %287 = vector.broadcast %286 : vector<1x384xf32> to vector<6x384xf32>
    %288 = arith.addf %284, %287 : vector<6x384xf32>
    %289 = vector.extract_strided_slice %288 {offsets = [0, 0], sizes = [6, 128], strides = [1, 1]} : vector<6x384xf32> to vector<6x128xf32>
    %290 = vector.extract_strided_slice %288 {offsets = [0, 128], sizes = [6, 128], strides = [1, 1]} : vector<6x384xf32> to vector<6x128xf32>
    %291 = vector.extract_strided_slice %288 {offsets = [0, 256], sizes = [6, 128], strides = [1, 1]} : vector<6x384xf32> to vector<6x128xf32>
    %292 = vector.extract_strided_slice %290 {offsets = [0, 0], sizes = [2, 128], strides = [1, 1]} : vector<6x128xf32> to vector<2x128xf32>
    %293 = vector.extract_strided_slice %290 {offsets = [2, 0], sizes = [2, 128], strides = [1, 1]} : vector<6x128xf32> to vector<2x128xf32>
    %294 = vector.extract_strided_slice %290 {offsets = [4, 0], sizes = [2, 128], strides = [1, 1]} : vector<6x128xf32> to vector<2x128xf32>
    %295 = vector.extract_strided_slice %291 {offsets = [0, 0], sizes = [2, 128], strides = [1, 1]} : vector<6x128xf32> to vector<2x128xf32>
    %296 = vector.extract_strided_slice %291 {offsets = [2, 0], sizes = [2, 128], strides = [1, 1]} : vector<6x128xf32> to vector<2x128xf32>
    %297 = vector.extract_strided_slice %291 {offsets = [4, 0], sizes = [2, 128], strides = [1, 1]} : vector<6x128xf32> to vector<2x128xf32>
    %298 = vector.extract_strided_slice %289 {offsets = [0, 0], sizes = [2, 128], strides = [1, 1]} : vector<6x128xf32> to vector<2x128xf32>
    %299 = arith.mulf %298, %292 : vector<2x128xf32>
    %cst_102 = arith.constant dense<0.000000e+00> : vector<2xf32>
    %300 = vector.multi_reduction <add>, %299, %cst_102 [1] : vector<2x128xf32> to vector<2xf32>
    %301 = vector.shape_cast %300 : vector<2xf32> to vector<2x1xf32>
    %302 = arith.mulf %298, %293 : vector<2x128xf32>
    %cst_103 = arith.constant dense<0.000000e+00> : vector<2xf32>
    %303 = vector.multi_reduction <add>, %302, %cst_103 [1] : vector<2x128xf32> to vector<2xf32>
    %304 = vector.shape_cast %303 : vector<2xf32> to vector<2x1xf32>
    %305 = arith.mulf %298, %294 : vector<2x128xf32>
    %cst_104 = arith.constant dense<0.000000e+00> : vector<2xf32>
    %306 = vector.multi_reduction <add>, %305, %cst_104 [1] : vector<2x128xf32> to vector<2xf32>
    %307 = vector.shape_cast %306 : vector<2xf32> to vector<2x1xf32>
    %308 = arith.maximumf %301, %304 : vector<2x1xf32>
    %309 = arith.maximumf %308, %307 : vector<2x1xf32>
    %310 = arith.subf %301, %309 : vector<2x1xf32>
    %311 = math.exp %310 : vector<2x1xf32>
    %312 = arith.subf %304, %309 : vector<2x1xf32>
    %313 = math.exp %312 : vector<2x1xf32>
    %314 = arith.subf %307, %309 : vector<2x1xf32>
    %315 = math.exp %314 : vector<2x1xf32>
    %316 = arith.addf %311, %313 : vector<2x1xf32>
    %317 = arith.addf %316, %315 : vector<2x1xf32>
    %318 = tpu.reciprocal %317 : vector<2x1xf32> -> vector<2x1xf32>
    %319 = vector.broadcast %311 : vector<2x1xf32> to vector<2x128xf32>
    %320 = arith.mulf %319, %295 : vector<2x128xf32>
    %321 = vector.broadcast %313 : vector<2x1xf32> to vector<2x128xf32>
    %322 = arith.mulf %321, %296 : vector<2x128xf32>
    %323 = arith.addf %320, %322 : vector<2x128xf32>
    %324 = vector.broadcast %315 : vector<2x1xf32> to vector<2x128xf32>
    %325 = arith.mulf %324, %297 : vector<2x128xf32>
    %326 = arith.addf %323, %325 : vector<2x128xf32>
    %327 = vector.broadcast %318 : vector<2x1xf32> to vector<2x128xf32>
    %328 = arith.mulf %326, %327 : vector<2x128xf32>
    %329 = vector.extract_strided_slice %289 {offsets = [2, 0], sizes = [2, 128], strides = [1, 1]} : vector<6x128xf32> to vector<2x128xf32>
    %330 = arith.mulf %329, %292 : vector<2x128xf32>
    %cst_105 = arith.constant dense<0.000000e+00> : vector<2xf32>
    %331 = vector.multi_reduction <add>, %330, %cst_105 [1] : vector<2x128xf32> to vector<2xf32>
    %332 = vector.shape_cast %331 : vector<2xf32> to vector<2x1xf32>
    %333 = arith.mulf %329, %293 : vector<2x128xf32>
    %cst_106 = arith.constant dense<0.000000e+00> : vector<2xf32>
    %334 = vector.multi_reduction <add>, %333, %cst_106 [1] : vector<2x128xf32> to vector<2xf32>
    %335 = vector.shape_cast %334 : vector<2xf32> to vector<2x1xf32>
    %336 = arith.mulf %329, %294 : vector<2x128xf32>
    %cst_107 = arith.constant dense<0.000000e+00> : vector<2xf32>
    %337 = vector.multi_reduction <add>, %336, %cst_107 [1] : vector<2x128xf32> to vector<2xf32>
    %338 = vector.shape_cast %337 : vector<2xf32> to vector<2x1xf32>
    %339 = arith.maximumf %332, %335 : vector<2x1xf32>
    %340 = arith.maximumf %339, %338 : vector<2x1xf32>
    %341 = arith.subf %332, %340 : vector<2x1xf32>
    %342 = math.exp %341 : vector<2x1xf32>
    %343 = arith.subf %335, %340 : vector<2x1xf32>
    %344 = math.exp %343 : vector<2x1xf32>
    %345 = arith.subf %338, %340 : vector<2x1xf32>
    %346 = math.exp %345 : vector<2x1xf32>
    %347 = arith.addf %342, %344 : vector<2x1xf32>
    %348 = arith.addf %347, %346 : vector<2x1xf32>
    %349 = tpu.reciprocal %348 : vector<2x1xf32> -> vector<2x1xf32>
    %350 = vector.broadcast %342 : vector<2x1xf32> to vector<2x128xf32>
    %351 = arith.mulf %350, %295 : vector<2x128xf32>
    %352 = vector.broadcast %344 : vector<2x1xf32> to vector<2x128xf32>
    %353 = arith.mulf %352, %296 : vector<2x128xf32>
    %354 = arith.addf %351, %353 : vector<2x128xf32>
    %355 = vector.broadcast %346 : vector<2x1xf32> to vector<2x128xf32>
    %356 = arith.mulf %355, %297 : vector<2x128xf32>
    %357 = arith.addf %354, %356 : vector<2x128xf32>
    %358 = vector.broadcast %349 : vector<2x1xf32> to vector<2x128xf32>
    %359 = arith.mulf %357, %358 : vector<2x128xf32>
    %360 = vector.extract_strided_slice %289 {offsets = [4, 0], sizes = [2, 128], strides = [1, 1]} : vector<6x128xf32> to vector<2x128xf32>
    %361 = arith.mulf %360, %292 : vector<2x128xf32>
    %cst_108 = arith.constant dense<0.000000e+00> : vector<2xf32>
    %362 = vector.multi_reduction <add>, %361, %cst_108 [1] : vector<2x128xf32> to vector<2xf32>
    %363 = vector.shape_cast %362 : vector<2xf32> to vector<2x1xf32>
    %364 = arith.mulf %360, %293 : vector<2x128xf32>
    %cst_109 = arith.constant dense<0.000000e+00> : vector<2xf32>
    %365 = vector.multi_reduction <add>, %364, %cst_109 [1] : vector<2x128xf32> to vector<2xf32>
    %366 = vector.shape_cast %365 : vector<2xf32> to vector<2x1xf32>
    %367 = arith.mulf %360, %294 : vector<2x128xf32>
    %cst_110 = arith.constant dense<0.000000e+00> : vector<2xf32>
    %368 = vector.multi_reduction <add>, %367, %cst_110 [1] : vector<2x128xf32> to vector<2xf32>
    %369 = vector.shape_cast %368 : vector<2xf32> to vector<2x1xf32>
    %370 = arith.maximumf %363, %366 : vector<2x1xf32>
    %371 = arith.maximumf %370, %369 : vector<2x1xf32>
    %372 = arith.subf %363, %371 : vector<2x1xf32>
    %373 = math.exp %372 : vector<2x1xf32>
    %374 = arith.subf %366, %371 : vector<2x1xf32>
    %375 = math.exp %374 : vector<2x1xf32>
    %376 = arith.subf %369, %371 : vector<2x1xf32>
    %377 = math.exp %376 : vector<2x1xf32>
    %378 = arith.addf %373, %375 : vector<2x1xf32>
    %379 = arith.addf %378, %377 : vector<2x1xf32>
    %380 = tpu.reciprocal %379 : vector<2x1xf32> -> vector<2x1xf32>
    %381 = vector.broadcast %373 : vector<2x1xf32> to vector<2x128xf32>
    %382 = arith.mulf %381, %295 : vector<2x128xf32>
    %383 = vector.broadcast %375 : vector<2x1xf32> to vector<2x128xf32>
    %384 = arith.mulf %383, %296 : vector<2x128xf32>
    %385 = arith.addf %382, %384 : vector<2x128xf32>
    %386 = vector.broadcast %377 : vector<2x1xf32> to vector<2x128xf32>
    %387 = arith.mulf %386, %297 : vector<2x128xf32>
    %388 = arith.addf %385, %387 : vector<2x128xf32>
    %389 = vector.broadcast %380 : vector<2x1xf32> to vector<2x128xf32>
    %390 = arith.mulf %388, %389 : vector<2x128xf32>
    %391 = tpu.concatenate %328, %359, %390 in 0 : vector<2x128xf32>, vector<2x128xf32>, vector<2x128xf32> -> vector<6x128xf32>
    %c1_111 = arith.constant 1 : index
    %c0_112 = arith.constant 0 : index
    %c0_113 = arith.constant 0 : index
    %392 = vector.load %arg11[%c1_111, %c0_112, %c0_113] : memref<2x128x128xf32, #tpu.memory_space<vmem>>, vector<1x128x128xf32>
    %393 = vector.shape_cast %392 : vector<1x128x128xf32> to vector<128x128xf32>
    %cst_114 = arith.constant dense<0.000000e+00> : vector<6x128xf32>
    %394 = tpu.matmul %391, %393, %cst_114 {dimension_numbers = #tpu.dot_dimension_numbers<[1], [0], [0], [1], [0, 0, 1, 1], [], []>} : vector<6x128xf32>, vector<128x128xf32>, vector<6x128xf32> -> vector<6x128xf32>
    %395 = arith.addf %257, %394 : vector<6x128xf32>
    %c1_115 = arith.constant 1 : index
    %c0_116 = arith.constant 0 : index
    %c0_117 = arith.constant 0 : index
    %396 = vector.load %arg12[%c1_115, %c0_116, %c0_117] : memref<2x1x128xf32, #tpu.memory_space<vmem>>, vector<1x1x128xf32>
    %397 = vector.shape_cast %396 : vector<1x1x128xf32> to vector<1x128xf32>
    %398 = vector.broadcast %397 : vector<1x128xf32> to vector<6x128xf32>
    %399 = arith.addf %395, %398 : vector<6x128xf32>
    %c1_118 = arith.constant 1 : index
    %c0_119 = arith.constant 0 : index
    %c0_120 = arith.constant 0 : index
    %400 = vector.load %arg13[%c1_118, %c0_119, %c0_120] : memref<2x1x128xf32, #tpu.memory_space<vmem>>, vector<1x1x128xf32>
    %401 = vector.shape_cast %400 : vector<1x1x128xf32> to vector<1x128xf32>
    %c1_121 = arith.constant 1 : index
    %c0_122 = arith.constant 0 : index
    %c0_123 = arith.constant 0 : index
    %402 = vector.load %arg14[%c1_121, %c0_122, %c0_123] : memref<2x1x128xf32, #tpu.memory_space<vmem>>, vector<1x1x128xf32>
    %403 = vector.shape_cast %402 : vector<1x1x128xf32> to vector<1x128xf32>
    %cst_124 = arith.constant dense<0.000000e+00> : vector<6xf32>
    %404 = vector.multi_reduction <add>, %399, %cst_124 [1] : vector<6x128xf32> to vector<6xf32>
    %405 = vector.shape_cast %404 : vector<6xf32> to vector<6x1xf32>
    %cst_125 = arith.constant 1.280000e+02 : f32
    %406 = vector.broadcast %cst_125 : f32 to vector<6x1xf32>
    %407 = arith.divf %405, %406 : vector<6x1xf32>
    %408 = vector.broadcast %407 : vector<6x1xf32> to vector<6x128xf32>
    %409 = arith.subf %399, %408 : vector<6x128xf32>
    %410 = arith.mulf %409, %409 : vector<6x128xf32>
    %cst_126 = arith.constant dense<0.000000e+00> : vector<6xf32>
    %411 = vector.multi_reduction <add>, %410, %cst_126 [1] : vector<6x128xf32> to vector<6xf32>
    %412 = vector.shape_cast %411 : vector<6xf32> to vector<6x1xf32>
    %cst_127 = arith.constant 1.280000e+02 : f32
    %413 = vector.broadcast %cst_127 : f32 to vector<6x1xf32>
    %414 = arith.divf %412, %413 : vector<6x1xf32>
    %cst_128 = arith.constant 9.99999974E-6 : f32
    %415 = vector.broadcast %cst_128 : f32 to vector<6x1xf32>
    %416 = arith.addf %414, %415 : vector<6x1xf32>
    %417 = math.rsqrt %416 : vector<6x1xf32>
    %418 = vector.broadcast %417 : vector<6x1xf32> to vector<6x128xf32>
    %419 = arith.mulf %409, %418 : vector<6x128xf32>
    %420 = vector.broadcast %401 : vector<1x128xf32> to vector<6x128xf32>
    %421 = arith.mulf %419, %420 : vector<6x128xf32>
    %422 = vector.broadcast %403 : vector<1x128xf32> to vector<6x128xf32>
    %423 = arith.addf %421, %422 : vector<6x128xf32>
    %c1_129 = arith.constant 1 : index
    %c0_130 = arith.constant 0 : index
    %c0_131 = arith.constant 0 : index
    %424 = vector.load %arg15[%c1_129, %c0_130, %c0_131] : memref<2x128x512xf32, #tpu.memory_space<vmem>>, vector<1x128x512xf32>
    %425 = vector.shape_cast %424 : vector<1x128x512xf32> to vector<128x512xf32>
    %cst_132 = arith.constant dense<0.000000e+00> : vector<6x512xf32>
    %426 = tpu.matmul %423, %425, %cst_132 {dimension_numbers = #tpu.dot_dimension_numbers<[1], [0], [0], [1], [0, 0, 1, 1], [], []>} : vector<6x128xf32>, vector<128x512xf32>, vector<6x512xf32> -> vector<6x512xf32>
    %c1_133 = arith.constant 1 : index
    %c0_134 = arith.constant 0 : index
    %c0_135 = arith.constant 0 : index
    %427 = vector.load %arg16[%c1_133, %c0_134, %c0_135] : memref<2x1x512xf32, #tpu.memory_space<vmem>>, vector<1x1x512xf32>
    %428 = vector.shape_cast %427 : vector<1x1x512xf32> to vector<1x512xf32>
    %429 = vector.broadcast %428 : vector<1x512xf32> to vector<6x512xf32>
    %430 = arith.addf %426, %429 : vector<6x512xf32>
    %cst_136 = arith.constant 5.000000e-01 : f32
    %431 = vector.broadcast %cst_136 : f32 to vector<6x512xf32>
    %432 = arith.mulf %431, %430 : vector<6x512xf32>
    %cst_137 = arith.constant 0.707106769 : f32
    %433 = vector.broadcast %cst_137 : f32 to vector<6x512xf32>
    %434 = arith.mulf %430, %433 : vector<6x512xf32>
    %435 = math.erf %434 : vector<6x512xf32>
    %cst_138 = arith.constant 1.000000e+00 : f32
    %436 = vector.broadcast %cst_138 : f32 to vector<6x512xf32>
    %437 = arith.addf %436, %435 : vector<6x512xf32>
    %438 = arith.mulf %432, %437 : vector<6x512xf32>
    %c1_139 = arith.constant 1 : index
    %c0_140 = arith.constant 0 : index
    %c0_141 = arith.constant 0 : index
    %439 = vector.load %arg17[%c1_139, %c0_140, %c0_141] : memref<2x512x128xf32, #tpu.memory_space<vmem>>, vector<1x512x128xf32>
    %440 = vector.shape_cast %439 : vector<1x512x128xf32> to vector<512x128xf32>
    %cst_142 = arith.constant dense<0.000000e+00> : vector<6x128xf32>
    %441 = tpu.matmul %438, %440, %cst_142 {dimension_numbers = #tpu.dot_dimension_numbers<[1], [0], [0], [1], [0, 0, 1, 1], [], []>} : vector<6x512xf32>, vector<512x128xf32>, vector<6x128xf32> -> vector<6x128xf32>
    %442 = arith.addf %399, %441 : vector<6x128xf32>
    %c1_143 = arith.constant 1 : index
    %c0_144 = arith.constant 0 : index
    %c0_145 = arith.constant 0 : index
    %443 = vector.load %arg18[%c1_143, %c0_144, %c0_145] : memref<2x1x128xf32, #tpu.memory_space<vmem>>, vector<1x1x128xf32>
    %444 = vector.shape_cast %443 : vector<1x1x128xf32> to vector<1x128xf32>
    %445 = vector.broadcast %444 : vector<1x128xf32> to vector<6x128xf32>
    %446 = arith.addf %442, %445 : vector<6x128xf32>
    %c0_146 = arith.constant 0 : index
    %c0_147 = arith.constant 0 : index
    %447 = vector.load %arg19[%c0_146, %c0_147] : memref<1x128xf32, #tpu.memory_space<vmem>>, vector<1x128xf32>
    %c0_148 = arith.constant 0 : index
    %c0_149 = arith.constant 0 : index
    %448 = vector.load %arg20[%c0_148, %c0_149] : memref<1x128xf32, #tpu.memory_space<vmem>>, vector<1x128xf32>
    %cst_150 = arith.constant dense<0.000000e+00> : vector<6xf32>
    %449 = vector.multi_reduction <add>, %446, %cst_150 [1] : vector<6x128xf32> to vector<6xf32>
    %450 = vector.shape_cast %449 : vector<6xf32> to vector<6x1xf32>
    %cst_151 = arith.constant 1.280000e+02 : f32
    %451 = vector.broadcast %cst_151 : f32 to vector<6x1xf32>
    %452 = arith.divf %450, %451 : vector<6x1xf32>
    %453 = vector.broadcast %452 : vector<6x1xf32> to vector<6x128xf32>
    %454 = arith.subf %446, %453 : vector<6x128xf32>
    %455 = arith.mulf %454, %454 : vector<6x128xf32>
    %cst_152 = arith.constant dense<0.000000e+00> : vector<6xf32>
    %456 = vector.multi_reduction <add>, %455, %cst_152 [1] : vector<6x128xf32> to vector<6xf32>
    %457 = vector.shape_cast %456 : vector<6xf32> to vector<6x1xf32>
    %cst_153 = arith.constant 1.280000e+02 : f32
    %458 = vector.broadcast %cst_153 : f32 to vector<6x1xf32>
    %459 = arith.divf %457, %458 : vector<6x1xf32>
    %cst_154 = arith.constant 9.99999974E-6 : f32
    %460 = vector.broadcast %cst_154 : f32 to vector<6x1xf32>
    %461 = arith.addf %459, %460 : vector<6x1xf32>
    %462 = math.rsqrt %461 : vector<6x1xf32>
    %463 = vector.broadcast %462 : vector<6x1xf32> to vector<6x128xf32>
    %464 = arith.mulf %454, %463 : vector<6x128xf32>
    %465 = vector.broadcast %447 : vector<1x128xf32> to vector<6x128xf32>
    %466 = arith.mulf %464, %465 : vector<6x128xf32>
    %467 = vector.broadcast %448 : vector<1x128xf32> to vector<6x128xf32>
    %468 = arith.addf %466, %467 : vector<6x128xf32>
    %469 = vector.shape_cast %468 : vector<6x128xf32> to vector<3x2x128xf32>
    %c0_155 = arith.constant 0 : index
    %c0_156 = arith.constant 0 : index
    %c0_157 = arith.constant 0 : index
    %470 = vector.load %arg21[%c0_155, %c0_156, %c0_157] : memref<3x2x128xf32, #tpu.memory_space<vmem>>, vector<3x2x128xf32>
    tpu.vector_store %arg21[%c0_155, %c0_156, %c0_157], %469 {strides = array<i32>} : memref<3x2x128xf32, #tpu.memory_space<vmem>>, vector<3x2x128xf32>,
    return
  }
  func.func @transform_0(%arg0: i32) -> (i32, i32) {
    %c0_i32 = arith.constant 0 : i32
    %c0_i32_0 = arith.constant 0 : i32
    return %arg0, %c0_i32 : i32, i32
  }
  func.func @transform_1(%arg0: i32) -> (i32, i32) {
    %c0_i32 = arith.constant 0 : i32
    %c0_i32_0 = arith.constant 0 : i32
    return %arg0, %c0_i32 : i32, i32
  }
  func.func @transform_2(%arg0: i32) -> (i32, i32) {
    %c0_i32 = arith.constant 0 : i32
    %c0_i32_0 = arith.constant 0 : i32
    %c0_i32_1 = arith.constant 0 : i32
    return %c0_i32, %c0_i32_0 : i32, i32
  }
  func.func @transform_3(%arg0: i32) -> (i32, i32) {
    %c0_i32 = arith.constant 0 : i32
    %c0_i32_0 = arith.constant 0 : i32
    %c0_i32_1 = arith.constant 0 : i32
    return %c0_i32, %c0_i32_0 : i32, i32
  }
  func.func @transform_4(%arg0: i32) -> (i32, i32) {
    %c0_i32 = arith.constant 0 : i32
    %c0_i32_0 = arith.constant 0 : i32
    %c0_i32_1 = arith.constant 0 : i32
    return %c0_i32, %c0_i32_0 : i32, i32
  }
  func.func @transform_5(%arg0: i32) -> (i32, i32) {
    %c0_i32 = arith.constant 0 : i32
    %c0_i32_0 = arith.constant 0 : i32
    %c0_i32_1 = arith.constant 0 : i32
    return %c0_i32, %c0_i32_0 : i32, i32
  }
  func.func @transform_6(%arg0: i32) -> (i32, i32, i32) {
    %c0_i32 = arith.constant 0 : i32
    %c0_i32_0 = arith.constant 0 : i32
    %c0_i32_1 = arith.constant 0 : i32
    %c0_i32_2 = arith.constant 0 : i32
    return %c0_i32, %c0_i32_0, %c0_i32_1 : i32, i32, i32
  }
  func.func @transform_7(%arg0: i32) -> (i32, i32, i32) {
    %c0_i32 = arith.constant 0 : i32
    %c0_i32_0 = arith.constant 0 : i32
    %c0_i32_1 = arith.constant 0 : i32
    %c0_i32_2 = arith.constant 0 : i32
    return %c0_i32, %c0_i32_0, %c0_i32_1 : i32, i32, i32
  }
  func.func @transform_8(%arg0: i32) -> (i32, i32, i32) {
    %c0_i32 = arith.constant 0 : i32
    %c0_i32_0 = arith.constant 0 : i32
    %c0_i32_1 = arith.constant 0 : i32
    %c0_i32_2 = arith.constant 0 : i32
    return %c0_i32, %c0_i32_0, %c0_i32_1 : i32, i32, i32
  }
  func.func @transform_9(%arg0: i32) -> (i32, i32, i32) {
    %c0_i32 = arith.constant 0 : i32
    %c0_i32_0 = arith.constant 0 : i32
    %c0_i32_1 = arith.constant 0 : i32
    %c0_i32_2 = arith.constant 0 : i32
    return %c0_i32, %c0_i32_0, %c0_i32_1 : i32, i32, i32
  }
  func.func @transform_10(%arg0: i32) -> (i32, i32, i32) {
    %c0_i32 = arith.constant 0 : i32
    %c0_i32_0 = arith.constant 0 : i32
    %c0_i32_1 = arith.constant 0 : i32
    %c0_i32_2 = arith.constant 0 : i32
    return %c0_i32, %c0_i32_0, %c0_i32_1 : i32, i32, i32
  }
  func.func @transform_11(%arg0: i32) -> (i32, i32, i32) {
    %c0_i32 = arith.constant 0 : i32
    %c0_i32_0 = arith.constant 0 : i32
    %c0_i32_1 = arith.constant 0 : i32
    %c0_i32_2 = arith.constant 0 : i32
    return %c0_i32, %c0_i32_0, %c0_i32_1 : i32, i32, i32
  }
  func.func @transform_12(%arg0: i32) -> (i32, i32, i32) {
    %c0_i32 = arith.constant 0 : i32
    %c0_i32_0 = arith.constant 0 : i32
    %c0_i32_1 = arith.constant 0 : i32
    %c0_i32_2 = arith.constant 0 : i32
    return %c0_i32, %c0_i32_0, %c0_i32_1 : i32, i32, i32
  }
  func.func @transform_13(%arg0: i32) -> (i32, i32, i32) {
    %c0_i32 = arith.constant 0 : i32
    %c0_i32_0 = arith.constant 0 : i32
    %c0_i32_1 = arith.constant 0 : i32
    %c0_i32_2 = arith.constant 0 : i32
    return %c0_i32, %c0_i32_0, %c0_i32_1 : i32, i32, i32
  }
  func.func @transform_14(%arg0: i32) -> (i32, i32, i32) {
    %c0_i32 = arith.constant 0 : i32
    %c0_i32_0 = arith.constant 0 : i32
    %c0_i32_1 = arith.constant 0 : i32
    %c0_i32_2 = arith.constant 0 : i32
    return %c0_i32, %c0_i32_0, %c0_i32_1 : i32, i32, i32
  }
  func.func @transform_15(%arg0: i32) -> (i32, i32, i32) {
    %c0_i32 = arith.constant 0 : i32
    %c0_i32_0 = arith.constant 0 : i32
    %c0_i32_1 = arith.constant 0 : i32
    %c0_i32_2 = arith.constant 0 : i32
    return %c0_i32, %c0_i32_0, %c0_i32_1 : i32, i32, i32
  }
  func.func @transform_16(%arg0: i32) -> (i32, i32, i32) {
    %c0_i32 = arith.constant 0 : i32
    %c0_i32_0 = arith.constant 0 : i32
    %c0_i32_1 = arith.constant 0 : i32
    %c0_i32_2 = arith.constant 0 : i32
    return %c0_i32, %c0_i32_0, %c0_i32_1 : i32, i32, i32
  }
  func.func @transform_17(%arg0: i32) -> (i32, i32, i32) {
    %c0_i32 = arith.constant 0 : i32
    %c0_i32_0 = arith.constant 0 : i32
    %c0_i32_1 = arith.constant 0 : i32
    %c0_i32_2 = arith.constant 0 : i32
    return %c0_i32, %c0_i32_0, %c0_i32_1 : i32, i32, i32
  }
  func.func @transform_18(%arg0: i32) -> (i32, i32) {
    %c0_i32 = arith.constant 0 : i32
    %c0_i32_0 = arith.constant 0 : i32
    %c0_i32_1 = arith.constant 0 : i32
    return %c0_i32, %c0_i32_0 : i32, i32
  }
  func.func @transform_19(%arg0: i32) -> (i32, i32) {
    %c0_i32 = arith.constant 0 : i32
    %c0_i32_0 = arith.constant 0 : i32
    %c0_i32_1 = arith.constant 0 : i32
    return %c0_i32, %c0_i32_0 : i32, i32
  }
  func.func @transform_20(%arg0: i32) -> (i32, i32, i32) {
    %c0_i32 = arith.constant 0 : i32
    %c0_i32_0 = arith.constant 0 : i32
    %c0_i32_1 = arith.constant 0 : i32
    return %c0_i32, %arg0, %c0_i32_0 : i32, i32, i32
  }
  func.func @transform_21(%arg0: i32) -> (i32, i32) {
    %c0_i32 = arith.constant 0 : i32
    %c0_i32_0 = arith.constant 0 : i32
    return %arg0, %c0_i32 : i32, i32
  }
}

</mosaic_0001>

<llo_original>
// kernel: mae_encoder_pretrain_forward.1
$region0: #{mae_encoder_pretrain_forward.1}
  #allocation0 [shape = 'u32[]', space=smem, size = 0x4, offset = 0x4, fixed_abs, tag = 'smem constant byte address 0x4 - core index']
  #allocation1 [shape = 'u32[144,128]{1,0:T(1,128)}', space=vmem, size = 0x12000, scoped, tag = 'internal scratch']
  %s0 = inlined_call_operand.vmem [shape: f32[2,128], index: 0, kind: input, shape index: {}]
  %s1 = inlined_call_operand.vmem [shape: s32[2,3], index: 1, kind: input, shape index: {}]
  %s2 = inlined_call_operand.hbm [shape: f32[128,384], index: 2, kind: input, shape index: {}]
  %s3 = inlined_call_operand.vmem [shape: f32[1,384], index: 3, kind: input, shape index: {}]
  %s4 = inlined_call_operand.vmem [shape: f32[3,128], index: 4, kind: input, shape index: {}]
  %s5 = inlined_call_operand.vmem [shape: f32[1,128], index: 5, kind: input, shape index: {}]
  %s6 = inlined_call_operand.vmem [shape: f32[2,1,128], index: 6, kind: input, shape index: {}]
  %s7 = inlined_call_operand.vmem [shape: f32[2,1,128], index: 7, kind: input, shape index: {}]
  %s8 = inlined_call_operand.hbm [shape: f32[2,128,384], index: 8, kind: input, shape index: {}]
  %s9 = inlined_call_operand.vmem [shape: f32[2,1,384], index: 9, kind: input, shape index: {}]
  %s10 = inlined_call_operand.hbm [shape: f32[2,128,128], index: 10, kind: input, shape index: {}]
  %s11 = inlined_call_operand.vmem [shape: f32[2,1,128], index: 11, kind: input, shape index: {}]
  %s12 = inlined_call_operand.vmem [shape: f32[2,1,128], index: 12, kind: input, shape index: {}]
  %s13 = inlined_call_operand.vmem [shape: f32[2,1,128], index: 13, kind: input, shape index: {}]
  %s14 = inlined_call_operand.hbm [shape: f32[2,128,512], index: 14, kind: input, shape index: {}]
  %s15 = inlined_call_operand.vmem [shape: f32[2,1,512], index: 15, kind: input, shape index: {}]
  %s16 = inlined_call_operand.hbm [shape: f32[2,512,128], index: 16, kind: input, shape index: {}]
  %s17 = inlined_call_operand.vmem [shape: f32[2,1,128], index: 17, kind: input, shape index: {}]
  %s18 = inlined_call_operand.vmem [shape: f32[1,128], index: 18, kind: input, shape index: {}]
  %s19 = inlined_call_operand.vmem [shape: f32[1,128], index: 19, kind: input, shape index: {}]
  %s20 = inlined_call_operand.hbm [shape: f32[3,2,128], index: 20, kind: output, shape index: {0}]
  %s21 = inlined_call_operand.hbm [shape: f32[2,384], index: 21, kind: output, shape index: {1}]
  %22 = xla_tuple %s20, %s21
  %s23 = sld [smem:[#allocation0]]
  $region118: #{mae_encoder_pretrain_forward.1} parent=0
    _
  %s25 = ssub.s32 1, %s23
  %s26 = scalar_select 0, %s25, %s23
  $region1: #{mae_encoder_pretrain_forward.1} parent=0
    #allocation2 [shape = 'u8[196608]{0}', space=vmem, size = 0x30000, scoped, tag = 'input window, operand 2, single buffered']
    #allocation3 [shape = 's32[1]{0}', space=sflag, size = 0x4, scoped, tag = 'scoped memory for mae_encoder_pretrain_forward.1']
    #allocation4 [shape = 's32[1]{0}', space=sflag, size = 0x4, scoped, tag = 'scoped memory for mae_encoder_pretrain_forward.1']
    #allocation5 [shape = 'u8[393216]{0}', space=vmem, size = 0x60000, scoped, tag = 'input window, operand 8, single buffered']
    #allocation6 [shape = 's32[1]{0}', space=sflag, size = 0x4, scoped, tag = 'scoped memory for mae_encoder_pretrain_forward.1']
    #allocation7 [shape = 'u8[131072]{0}', space=vmem, size = 0x20000, scoped, tag = 'input window, operand 10, single buffered']
    #allocation8 [shape = 'u8[524288]{0}', space=vmem, size = 0x80000, scoped, tag = 'input window, operand 14, single buffered']
    #allocation9 [shape = 's32[1]{0}', space=sflag, size = 0x4, scoped, tag = 'scoped memory for mae_encoder_pretrain_forward.1']
    #allocation10 [shape = 'u8[524288]{0}', space=vmem, size = 0x80000, scoped, tag = 'input window, operand 16, single buffered']
    #allocation11 [shape = 'u8[3072]{0}', space=vmem, size = 0xc00, scoped, tag = 'output window, operand 0, single buffered']
    #allocation12 [shape = 'u8[3072]{0}', space=vmem, size = 0xc00, scoped, tag = 'output window, operand 1, single buffered']
    #allocation13 [shape = 's32[1]{0}', space=sflag, size = 0x4, scoped, tag = 'scoped memory for mae_encoder_pretrain_forward.1']
    %27 = vsyncpa [#allocation3], 0
    %28 = vsyncpa [#allocation6], 0
    %29 = vsyncpa [#allocation9], 0
    %30 = vsyncpa [#allocation4], 0
    %31 = vsyncpa [#allocation13], 0
    // Predicated region
    $region2: #{mae_encoder_pretrain_forward.1} parent=1 // pred_check
      _
    $region3: #{mae_encoder_pretrain_forward.1} parent=1 // pred_check_branch
      %33 = sbr.rel (0) target = $region5
    $region4: #{mae_encoder_pretrain_forward.1} parent=1 // pred_region
      _
    $region5: #{mae_encoder_pretrain_forward.1} parent=1 // pred_fallthru
      _
    // Predicated region
    $region6: #{mae_encoder_pretrain_forward.1} parent=1 // pred_check
      _
    $region7: #{mae_encoder_pretrain_forward.1} parent=1 // pred_check_branch
      %35 = sbr.rel (0) target = $region9
    $region8: #{mae_encoder_pretrain_forward.1} parent=1 // pred_region
      _
    $region9: #{mae_encoder_pretrain_forward.1} parent=1 // pred_fallthru
      _
    // Predicated region
    $region10: #{mae_encoder_pretrain_forward.1} parent=1 // pred_check
      _
    $region11: #{mae_encoder_pretrain_forward.1} parent=1 // pred_check_branch
      %37 = sbr.rel (0) target = $region13
    $region12: #{mae_encoder_pretrain_forward.1} parent=1 // pred_region
      %s39 = ssub.s32 6144, 6144
      %40 = vsyncadd [#allocation3], %s39
      %s41 = sshll.u32 [#allocation2], 4
      %s42 = int_to_ptr.vmem [resolvable:$true] %s41
      %47 = dma.hbm_to_vmem [thread:$0]  %s2, 6144, %s42, [#allocation3], 384, 384, 24
    $region13: #{mae_encoder_pretrain_forward.1} parent=1 // pred_fallthru
      _
    // Predicated region
    $region14: #{mae_encoder_pretrain_forward.1} parent=1 // pred_check
      _
    $region15: #{mae_encoder_pretrain_forward.1} parent=1 // pred_check_branch
      %49 = sbr.rel (0) target = $region17
    $region16: #{mae_encoder_pretrain_forward.1} parent=1 // pred_region
      _
    $region17: #{mae_encoder_pretrain_forward.1} parent=1 // pred_fallthru
      _
    // Predicated region
    $region18: #{mae_encoder_pretrain_forward.1} parent=1 // pred_check
      _
    $region19: #{mae_encoder_pretrain_forward.1} parent=1 // pred_check_branch
      %51 = sbr.rel (0) target = $region21
    $region20: #{mae_encoder_pretrain_forward.1} parent=1 // pred_region
      _
    $region21: #{mae_encoder_pretrain_forward.1} parent=1 // pred_fallthru
      _
    // Predicated region
    $region22: #{mae_encoder_pretrain_forward.1} parent=1 // pred_check
      _
    $region23: #{mae_encoder_pretrain_forward.1} parent=1 // pred_check_branch
      %53 = sbr.rel (0) target = $region25
    $region24: #{mae_encoder_pretrain_forward.1} parent=1 // pred_region
      _
    $region25: #{mae_encoder_pretrain_forward.1} parent=1 // pred_fallthru
      _
    // Predicated region
    $region26: #{mae_encoder_pretrain_forward.1} parent=1 // pred_check
      _
    $region27: #{mae_encoder_pretrain_forward.1} parent=1 // pred_check_branch
      %55 = sbr.rel (0) target = $region29
    $region28: #{mae_encoder_pretrain_forward.1} parent=1 // pred_region
      _
    $region29: #{mae_encoder_pretrain_forward.1} parent=1 // pred_fallthru
      _
    // Predicated region
    $region30: #{mae_encoder_pretrain_forward.1} parent=1 // pred_check
      _
    $region31: #{mae_encoder_pretrain_forward.1} parent=1 // pred_check_branch
      %57 = sbr.rel (0) target = $region33
    $region32: #{mae_encoder_pretrain_forward.1} parent=1 // pred_region
      _
    $region33: #{mae_encoder_pretrain_forward.1} parent=1 // pred_fallthru
      _
    // Predicated region
    $region34: #{mae_encoder_pretrain_forward.1} parent=1 // pred_check
      _
    $region35: #{mae_encoder_pretrain_forward.1} parent=1 // pred_check_branch
      %59 = sbr.rel (0) target = $region37
    $region36: #{mae_encoder_pretrain_forward.1} parent=1 // pred_region
      %s61 = ssub.s32 12288, 12288
      %62 = vsyncadd [#allocation6], %s61
      %s63 = sshll.u32 [#allocation5], 4
      %s64 = int_to_ptr.vmem [resolvable:$true] %s63
      %69 = dma.hbm_to_vmem [thread:$0]  %s8, 12288, %s64, [#allocation6], 384, 384, 24
    $region37: #{mae_encoder_pretrain_forward.1} parent=1 // pred_fallthru
      _
    // Predicated region
    $region38: #{mae_encoder_pretrain_forward.1} parent=1 // pred_check
      _
    $region39: #{mae_encoder_pretrain_forward.1} parent=1 // pred_check_branch
      %71 = sbr.rel (0) target = $region41
    $region40: #{mae_encoder_pretrain_forward.1} parent=1 // pred_region
      _
    $region41: #{mae_encoder_pretrain_forward.1} parent=1 // pred_fallthru
      _
    // Predicated region
    $region42: #{mae_encoder_pretrain_forward.1} parent=1 // pred_check
      _
    $region43: #{mae_encoder_pretrain_forward.1} parent=1 // pred_check_branch
      %73 = sbr.rel (0) target = $region45
    $region44: #{mae_encoder_pretrain_forward.1} parent=1 // pred_region
      %s75 = ssub.s32 4096, 4096
      %76 = vsyncadd [#allocation6], %s75
      %s77 = sshll.u32 [#allocation7], 4
      %s78 = int_to_ptr.vmem [resolvable:$true] %s77
      %83 = dma.hbm_to_vmem [thread:$0]  %s10, 4096, %s78, [#allocation6], 128, 128, 8
    $region45: #{mae_encoder_pretrain_forward.1} parent=1 // pred_fallthru
      _
    // Predicated region
    $region46: #{mae_encoder_pretrain_forward.1} parent=1 // pred_check
      _
    $region47: #{mae_encoder_pretrain_forward.1} parent=1 // pred_check_branch
      %85 = sbr.rel (0) target = $region49
    $region48: #{mae_encoder_pretrain_forward.1} parent=1 // pred_region
      _
    $region49: #{mae_encoder_pretrain_forward.1} parent=1 // pred_fallthru
      _
    // Predicated region
    $region50: #{mae_encoder_pretrain_forward.1} parent=1 // pred_check
      _
    $region51: #{mae_encoder_pretrain_forward.1} parent=1 // pred_check_branch
      %87 = sbr.rel (0) target = $region53
    $region52: #{mae_encoder_pretrain_forward.1} parent=1 // pred_region
      _
    $region53: #{mae_encoder_pretrain_forward.1} parent=1 // pred_fallthru
      _
    // Predicated region
    $region54: #{mae_encoder_pretrain_forward.1} parent=1 // pred_check
      _
    $region55: #{mae_encoder_pretrain_forward.1} parent=1 // pred_check_branch
      %89 = sbr.rel (0) target = $region57
    $region56: #{mae_encoder_pretrain_forward.1} parent=1 // pred_region
      _
    $region57: #{mae_encoder_pretrain_forward.1} parent=1 // pred_fallthru
      _
    // Predicated region
    $region58: #{mae_encoder_pretrain_forward.1} parent=1 // pred_check
      _
    $region59: #{mae_encoder_pretrain_forward.1} parent=1 // pred_check_branch
      %91 = sbr.rel (0) target = $region61
    $region60: #{mae_encoder_pretrain_forward.1} parent=1 // pred_region
      %s93 = ssub.s32 16384, 16384
      %94 = vsyncadd [#allocation9], %s93
      %s95 = sshll.u32 [#allocation8], 4
      %s96 = int_to_ptr.vmem [resolvable:$true] %s95
      %101 = dma.hbm_to_vmem [thread:$0]  %s14, 16384, %s96, [#allocation9], 512, 512, 32
    $region61: #{mae_encoder_pretrain_forward.1} parent=1 // pred_fallthru
      _
    // Predicated region
    $region62: #{mae_encoder_pretrain_forward.1} parent=1 // pred_check
      _
    $region63: #{mae_encoder_pretrain_forward.1} parent=1 // pred_check_branch
      %103 = sbr.rel (0) target = $region65
    $region64: #{mae_encoder_pretrain_forward.1} parent=1 // pred_region
      _
    $region65: #{mae_encoder_pretrain_forward.1} parent=1 // pred_fallthru
      _
    // Predicated region
    $region66: #{mae_encoder_pretrain_forward.1} parent=1 // pred_check
      _
    $region67: #{mae_encoder_pretrain_forward.1} parent=1 // pred_check_branch
      %105 = sbr.rel (0) target = $region69
    $region68: #{mae_encoder_pretrain_forward.1} parent=1 // pred_region
      %s107 = ssub.s32 16384, 16384
      %108 = vsyncadd [#allocation9], %s107
      %s109 = sshll.u32 [#allocation10], 4
      %s110 = int_to_ptr.vmem [resolvable:$true] %s109
      %115 = dma.hbm_to_vmem [thread:$0]  %s16, 16384, %s110, [#allocation9], 128, 128, 8
    $region69: #{mae_encoder_pretrain_forward.1} parent=1 // pred_fallthru
      _
    // Predicated region
    $region70: #{mae_encoder_pretrain_forward.1} parent=1 // pred_check
      _
    $region71: #{mae_encoder_pretrain_forward.1} parent=1 // pred_check_branch
      %117 = sbr.rel (0) target = $region73
    $region72: #{mae_encoder_pretrain_forward.1} parent=1 // pred_region
      _
    $region73: #{mae_encoder_pretrain_forward.1} parent=1 // pred_fallthru
      _
    // Predicated region
    $region74: #{mae_encoder_pretrain_forward.1} parent=1 // pred_check
      _
    $region75: #{mae_encoder_pretrain_forward.1} parent=1 // pred_check_branch
      %119 = sbr.rel (0) target = $region77
    $region76: #{mae_encoder_pretrain_forward.1} parent=1 // pred_region
      _
    $region77: #{mae_encoder_pretrain_forward.1} parent=1 // pred_fallthru
      _
    // Predicated region
    $region78: #{mae_encoder_pretrain_forward.1} parent=1 // pred_check
      _
    $region79: #{mae_encoder_pretrain_forward.1} parent=1 // pred_check_branch
      %121 = sbr.rel (0) target = $region81
    $region80: #{mae_encoder_pretrain_forward.1} parent=1 // pred_region
      _
    $region81: #{mae_encoder_pretrain_forward.1} parent=1 // pred_fallthru
      _
    // Predicated region
    $region82: #{mae_encoder_pretrain_forward.1} parent=1 // pred_check
      _
    $region83: #{mae_encoder_pretrain_forward.1} parent=1 // pred_check_branch
      %123 = sbr.rel (0) target = $region85
    $region84: #{mae_encoder_pretrain_forward.1} parent=1 // pred_region
      %124 = dma.done [#allocation3], 6144
    $region85: #{mae_encoder_pretrain_forward.1} parent=1 // pred_fallthru
      _
    // Predicated region
    $region86: #{mae_encoder_pretrain_forward.1} parent=1 // pred_check
      _
    $region87: #{mae_encoder_pretrain_forward.1} parent=1 // pred_check_branch
      %126 = sbr.rel (0) target = $region89
    $region88: #{mae_encoder_pretrain_forward.1} parent=1 // pred_region
      %127 = dma.done [#allocation6], 12288
    $region89: #{mae_encoder_pretrain_forward.1} parent=1 // pred_fallthru
      _
    // Predicated region
    $region90: #{mae_encoder_pretrain_forward.1} parent=1 // pred_check
      _
    $region91: #{mae_encoder_pretrain_forward.1} parent=1 // pred_check_branch
      %129 = sbr.rel (0) target = $region93
    $region92: #{mae_encoder_pretrain_forward.1} parent=1 // pred_region
      %130 = dma.done [#allocation6], 4096
    $region93: #{mae_encoder_pretrain_forward.1} parent=1 // pred_fallthru
      _
    // Predicated region
    $region94: #{mae_encoder_pretrain_forward.1} parent=1 // pred_check
      _
    $region95: #{mae_encoder_pretrain_forward.1} parent=1 // pred_check_branch
      %132 = sbr.rel (0) target = $region97
    $region96: #{mae_encoder_pretrain_forward.1} parent=1 // pred_region
      %133 = dma.done [#allocation9], 16384
    $region97: #{mae_encoder_pretrain_forward.1} parent=1 // pred_fallthru
      _
    // Predicated region
    $region98: #{mae_encoder_pretrain_forward.1} parent=1 // pred_check
      _
    $region99: #{mae_encoder_pretrain_forward.1} parent=1 // pred_check_branch
      %135 = sbr.rel (0) target = $region101
    $region100: #{mae_encoder_pretrain_forward.1} parent=1 // pred_region
      %136 = dma.done [#allocation9], 16384
    $region101: #{mae_encoder_pretrain_forward.1} parent=1 // pred_fallthru
      _
    %v137 = vld [vmem:[%s0] sm:$0x3]
    %v138 = vld [vmem:[#allocation2] sm:$0xff]
    %v139 = vld [vmem:[#allocation2 + $0x8] sm:$0xff]
    %v140 = vld [vmem:[#allocation2 + $0x10] sm:$0xff]
    %v141 = vld [vmem:[#allocation2 + $0x18] sm:$0xff]
    %v142 = vld [vmem:[#allocation2 + $0x20] sm:$0xff]
    %v143 = vld [vmem:[#allocation2 + $0x28] sm:$0xff]
    %v144 = vld [vmem:[#allocation2 + $0x30] sm:$0xff]
    %v145 = vld [vmem:[#allocation2 + $0x38] sm:$0xff]
    %v146 = vld [vmem:[#allocation2 + $0x40] sm:$0xff]
    %v147 = vld [vmem:[#allocation2 + $0x48] sm:$0xff]
    %v148 = vld [vmem:[#allocation2 + $0x50] sm:$0xff]
    %v149 = vld [vmem:[#allocation2 + $0x58] sm:$0xff]
    %v150 = vld [vmem:[#allocation2 + $0x60] sm:$0xff]
    %v151 = vld [vmem:[#allocation2 + $0x68] sm:$0xff]
    %v152 = vld [vmem:[#allocation2 + $0x70] sm:$0xff]
    %v153 = vld [vmem:[#allocation2 + $0x78] sm:$0xff]
    %v154 = vld [vmem:[#allocation2 + $0x80] sm:$0xff]
    %v155 = vld [vmem:[#allocation2 + $0x88] sm:$0xff]
    %v156 = vld [vmem:[#allocation2 + $0x90] sm:$0xff]
    %v157 = vld [vmem:[#allocation2 + $0x98] sm:$0xff]
    %v158 = vld [vmem:[#allocation2 + $0xa0] sm:$0xff]
    %v159 = vld [vmem:[#allocation2 + $0xa8] sm:$0xff]
    %v160 = vld [vmem:[#allocation2 + $0xb0] sm:$0xff]
    %v161 = vld [vmem:[#allocation2 + $0xb8] sm:$0xff]
    %v162 = vld [vmem:[#allocation2 + $0xc0] sm:$0xff]
    %v163 = vld [vmem:[#allocation2 + $0xc8] sm:$0xff]
    %v164 = vld [vmem:[#allocation2 + $0xd0] sm:$0xff]
    %v165 = vld [vmem:[#allocation2 + $0xd8] sm:$0xff]
    %v166 = vld [vmem:[#allocation2 + $0xe0] sm:$0xff]
    %v167 = vld [vmem:[#allocation2 + $0xe8] sm:$0xff]
    %v168 = vld [vmem:[#allocation2 + $0xf0] sm:$0xff]
    %v169 = vld [vmem:[#allocation2 + $0xf8] sm:$0xff]
    %v170 = vld [vmem:[#allocation2 + $0x100] sm:$0xff]
    %v171 = vld [vmem:[#allocation2 + $0x108] sm:$0xff]
    %v172 = vld [vmem:[#allocation2 + $0x110] sm:$0xff]
    %v173 = vld [vmem:[#allocation2 + $0x118] sm:$0xff]
    %v174 = vld [vmem:[#allocation2 + $0x120] sm:$0xff]
    %v175 = vld [vmem:[#allocation2 + $0x128] sm:$0xff]
    %v176 = vld [vmem:[#allocation2 + $0x130] sm:$0xff]
    %v177 = vld [vmem:[#allocation2 + $0x138] sm:$0xff]
    %v178 = vld [vmem:[#allocation2 + $0x140] sm:$0xff]
    %v179 = vld [vmem:[#allocation2 + $0x148] sm:$0xff]
    %v180 = vld [vmem:[#allocation2 + $0x150] sm:$0xff]
    %v181 = vld [vmem:[#allocation2 + $0x158] sm:$0xff]
    %v182 = vld [vmem:[#allocation2 + $0x160] sm:$0xff]
    %v183 = vld [vmem:[#allocation2 + $0x168] sm:$0xff]
    %v184 = vld [vmem:[#allocation2 + $0x170] sm:$0xff]
    %v185 = vld [vmem:[#allocation2 + $0x178] sm:$0xff]
    %v186 = vld [vmem:[%s3] sm:$0x7]
    %v188 = vlaneseq
    %v189 = vshrl.u32 %v188, 7
    %v190 = vsub.s32 0, %v189
    %v191 = vrot.slane %v186, %v190
    %v192 = vlaneseq
    %v193 = vshrl.u32 %v192, 7
    %v194 = vsub.s32 1, %v193
    %v195 = vrot.slane %v186, %v194
    %v196 = vlaneseq
    %v197 = vshrl.u32 %v196, 7
    %v198 = vsub.s32 2, %v197
    %v199 = vrot.slane %v186, %v198
    %203 = vmatprep.subr.mxu0 %v139
    %204 = vmatpush1.msra.mxu0 %v138
    %205 = vmatprep.subr.mxu0 %v142
    %206 = vmatpush1.msra.mxu0 %v141
    %207 = vmatprep.subr.mxu0 %v145
    %208 = vmatpush1.msra.mxu0 %v144
    %209 = vmatprep.subr.mxu0 %v148
    %210 = vmatpush1.msra.mxu0 %v147
    %211 = vmatprep.subr.mxu0 %v151
    %212 = vmatpush1.msra.mxu0 %v150
    %213 = vmatprep.subr.mxu0 %v154
    %214 = vmatpush1.msra.mxu0 %v153
    %215 = vmatprep.subr.mxu0 %v157
    %216 = vmatpush1.msra.mxu0 %v156
    %217 = vmatprep.subr.mxu0 %v160
    %218 = vmatpush1.msra.mxu0 %v159
    %219 = vmatprep.subr.mxu0 %v163
    %220 = vmatpush1.msra.mxu0 %v162
    %221 = vmatprep.subr.mxu0 %v166
    %222 = vmatpush1.msra.mxu0 %v165
    %223 = vmatprep.subr.mxu0 %v169
    %224 = vmatpush1.msra.mxu0 %v168
    %225 = vmatprep.subr.mxu0 %v172
    %226 = vmatpush1.msra.mxu0 %v171
    %227 = vmatprep.subr.mxu0 %v175
    %228 = vmatpush1.msra.mxu0 %v174
    %229 = vmatprep.subr.mxu0 %v178
    %230 = vmatpush1.msra.mxu0 %v177
    %231 = vmatprep.subr.mxu0 %v181
    %232 = vmatpush1.msra.mxu0 %v180
    %233 = vmatprep.subr.mxu0 %v184
    %234 = vmatpush1.msra.mxu0 %v183
    %235 = vmatprep.subr.mxu0 0.0
    %236 = vmatpush1.msra.mxu0 0.0
    %237 = vmatprep.subr.mxu0 0.0
    %238 = vmatpush1.msra.mxu0 0.0
    %239 = vmatprep.subr.mxu0 0.0
    %240 = vmatpush1.msra.mxu0 0.0
    %241 = vmatprep.subr.mxu0 0.0
    %242 = vmatpush1.msra.mxu0 0.0
    %243 = vmatprep.subr.mxu0 0.0
    %244 = vmatpush1.msra.mxu0 0.0
    %245 = vmatprep.subr.mxu0 0.0
    %246 = vmatpush1.msra.mxu0 0.0
    %247 = vmatprep.subr.mxu0 0.0
    %248 = vmatpush1.msra.mxu0 0.0
    %249 = vmatprep.subr.mxu0 0.0
    %250 = vmatpush1.msra.mxu0 0.0
    %251 = vmatprep.subr.mxu0 0.0
    %252 = vmatpush1.msra.mxu0 0.0
    %253 = vmatprep.subr.mxu0 0.0
    %254 = vmatpush1.msra.mxu0 0.0
    %255 = vmatprep.subr.mxu0 0.0
    %256 = vmatpush1.msra.mxu0 0.0
    %257 = vmatprep.subr.mxu0 0.0
    %258 = vmatpush1.msra.mxu0 0.0
    %259 = vmatprep.subr.mxu0 0.0
    %260 = vmatpush1.msra.mxu0 0.0
    %261 = vmatprep.subr.mxu0 0.0
    %262 = vmatpush1.msra.mxu0 0.0
    %263 = vmatprep.subr.mxu0 0.0
    %264 = vmatpush1.msra.mxu0 0.0
    %265 = vmatprep.subr.mxu0 0.0
    %266 = vmatpush1.msra.mxu0 0.0
    %267 = vmatprep.mubr.f32.mxu0 0.0
    %268 = vmatmul.mubr.f32.gmra.mrb[0].mxu0 %v137
    %v269 = vpop.f32.mrb[0].mxu0
    %v270 = vadd.f32 %v191, %v269
    %v271 = vpop.f32.mrb[0].mxu0
    %v272 = vadd.f32 %v195, %v271
    %273 = vdwg.mxu0
    %274 = vmatprep.subr.mxu0 0.0
    %275 = vmatpush1.msra.mxu0 %v140
    %276 = vmatprep.subr.mxu0 0.0
    %277 = vmatpush1.msra.mxu0 %v143
    %278 = vmatprep.subr.mxu0 0.0
    %279 = vmatpush1.msra.mxu0 %v146
    %280 = vmatprep.subr.mxu0 0.0
    %281 = vmatpush1.msra.mxu0 %v149
    %282 = vmatprep.subr.mxu0 0.0
    %283 = vmatpush1.msra.mxu0 %v152
    %284 = vmatprep.subr.mxu0 0.0
    %285 = vmatpush1.msra.mxu0 %v155
    %286 = vmatprep.subr.mxu0 0.0
    %287 = vmatpush1.msra.mxu0 %v158
    %288 = vmatprep.subr.mxu0 0.0
    %289 = vmatpush1.msra.mxu0 %v161
    %290 = vmatprep.subr.mxu0 0.0
    %291 = vmatpush1.msra.mxu0 %v164
    %292 = vmatprep.subr.mxu0 0.0
    %293 = vmatpush1.msra.mxu0 %v167
    %294 = vmatprep.subr.mxu0 0.0
    %295 = vmatpush1.msra.mxu0 %v170
    %296 = vmatprep.subr.mxu0 0.0
    %297 = vmatpush1.msra.mxu0 %v173
    %298 = vmatprep.subr.mxu0 0.0
    %299 = vmatpush1.msra.mxu0 %v176
    %300 = vmatprep.subr.mxu0 0.0
    %301 = vmatpush1.msra.mxu0 %v179
    %302 = vmatprep.subr.mxu0 0.0
    %303 = vmatpush1.msra.mxu0 %v182
    %304 = vmatprep.subr.mxu0 0.0
    %305 = vmatpush1.msra.mxu0 %v185
    %306 = vmatprep.subr.mxu0 0.0
    %307 = vmatpush1.msra.mxu0 0.0
    %308 = vmatprep.subr.mxu0 0.0
    %309 = vmatpush1.msra.mxu0 0.0
    %310 = vmatprep.subr.mxu0 0.0
    %311 = vmatpush1.msra.mxu0 0.0
    %312 = vmatprep.subr.mxu0 0.0
    %313 = vmatpush1.msra.mxu0 0.0
    %314 = vmatprep.subr.mxu0 0.0
    %315 = vmatpush1.msra.mxu0 0.0
    %316 = vmatprep.subr.mxu0 0.0
    %317 = vmatpush1.msra.mxu0 0.0
    %318 = vmatprep.subr.mxu0 0.0
    %319 = vmatpush1.msra.mxu0 0.0
    %320 = vmatprep.subr.mxu0 0.0
    %321 = vmatpush1.msra.mxu0 0.0
    %322 = vmatprep.subr.mxu0 0.0
    %323 = vmatpush1.msra.mxu0 0.0
    %324 = vmatprep.subr.mxu0 0.0
    %325 = vmatpush1.msra.mxu0 0.0
    %326 = vmatprep.subr.mxu0 0.0
    %327 = vmatpush1.msra.mxu0 0.0
    %328 = vmatprep.subr.mxu0 0.0
    %329 = vmatpush1.msra.mxu0 0.0
    %330 = vmatprep.subr.mxu0 0.0
    %331 = vmatpush1.msra.mxu0 0.0
    %332 = vmatprep.subr.mxu0 0.0
    %333 = vmatpush1.msra.mxu0 0.0
    %334 = vmatprep.subr.mxu0 0.0
    %335 = vmatpush1.msra.mxu0 0.0
    %336 = vmatprep.subr.mxu0 0.0
    %337 = vmatpush1.msra.mxu0 0.0
    %338 = vmatprep.mubr.f32.mxu0 0.0
    %339 = vmatmul.mubr.f32.gmra.mrb[0].mxu0 %v137
    %v340 = vpop.f32.mrb[0].mxu0
    %v341 = vadd.f32 %v199, %v340
    %v342 = vpop.f32.mrb[0].mxu0
    %343 = vdwg.mxu0
    %v347 = vcombine.low %v270, %v272
    %v349 = vunpack.c.l.s4 1983009808
    %v350 = vunpack.c.0.s8 %v349
    %v351 = vlaneseq
    %v352 = vshrl.u32 %v351, 7
    %v353 = vsub.s32 %v350, %v352
    %v354 = vrot.slane %v347, %v353
    %v356 = vunpack.c.l.s4 1983009808
    %v357 = vunpack.c.0.s8 %v356
    %v358 = vlaneseq
    %v359 = vshrl.u32 %v358, 7
    %v360 = vsub.s32 %v357, %v359
    %v361 = vrot.slane %v341, %v360
    %v362 = vcombine.low %v354, %v361
    %364 = vst [vmem:[#allocation12] sm:$0x3f] %v362
    %v365 = vld [vmem:[%s4] sm:$0x1]
    %v366 = vlaneseq
    %v367 = vshrl.u32 %v366, 7
    %v368 = vsub.s32 0, %v367
    %v369 = vrot.slane %v365, %v368
    %v370 = vadd.f32 %v270, %v369
    %v371 = vld [vmem:[%s4 + $0x1] sm:$0x1]
    %v372 = vlaneseq
    %v373 = vshrl.u32 %v372, 7
    %v374 = vsub.s32 0, %v373
    %v375 = vrot.slane %v371, %v374
    %v376 = vadd.f32 %v272, %v375
    %v377 = vld [vmem:[%s4 + $0x2] sm:$0x1]
    %v378 = vlaneseq
    %v379 = vshrl.u32 %v378, 7
    %v380 = vsub.s32 0, %v379
    %v381 = vrot.slane %v377, %v380
    %v382 = vadd.f32 %v341, %v381
    %v383 = vld [vmem:[%s5] sm:$0x1]
    %v385 = vlaneseq
    %v386 = vshrl.u32 %v385, 7
    %v387 = vsub.s32 0, %v386
    %v388 = vrot.slane %v383, %v387
    %v390 = vld [vmem:[%s1] sm:$0x3]
    %vm391 = vcmp.eq.s32.totalorder %v390, 0
    %v392 = vsel %vm391, 1, 0
    %v393 = vcvt.s32.f32 %v392
    %395 = vset.pattern.permute.xlu0 0
    %396 = vperm.xlu0 %395, %v393
    %v397 = vpop.permute.xlu0 %396
    %v399 = vmul.f32 %v397, %v370
    %v400 = vadd.f32 %v399, 0.0
    %vm401 = vcmp.eq.s32.totalorder %v390, 1
    %v402 = vsel %vm401, 1, 0
    %v403 = vcvt.s32.f32 %v402
    %405 = vset.pattern.permute.xlu0 0
    %406 = vperm.xlu0 %405, %v403
    %v407 = vpop.permute.xlu0 %406
    %v409 = vmul.f32 %v407, %v376
    %v410 = vadd.f32 %v400, %v409
    %vm411 = vcmp.eq.s32.totalorder %v390, 2
    %v412 = vsel %vm411, 1, 0
    %v413 = vcvt.s32.f32 %v412
    %415 = vset.pattern.permute.xlu0 0
    %416 = vperm.xlu0 %415, %v413
    %v417 = vpop.permute.xlu0 %416
    %v419 = vmul.f32 %v417, %v382
    %v420 = vadd.f32 %v410, %v419
    %421 = vset.pattern.permute.xlu0 1
    %422 = vperm.xlu0 %421, %v393
    %v423 = vpop.permute.xlu0 %422
    %v425 = vmul.f32 %v423, %v370
    %v426 = vadd.f32 %v425, 0.0
    %427 = vset.pattern.permute.xlu0 1
    %428 = vperm.xlu0 %427, %v403
    %v429 = vpop.permute.xlu0 %428
    %v431 = vmul.f32 %v429, %v376
    %v432 = vadd.f32 %v426, %v431
    %433 = vset.pattern.permute.xlu0 1
    %434 = vperm.xlu0 %433, %v413
    %v435 = vpop.permute.xlu0 %434
    %v437 = vmul.f32 %v435, %v382
    %v438 = vadd.f32 %v432, %v437
    %v440 = vrot.slane %v420, 6
    %v443 = vrot.slane %v438, 4
    %vm445 = vcmask 1041408
    %v446 = vsel %vm445, %v388, %v440
    %vm447 = vcmask 1043456
    %v448 = vsel %vm447, %v446, %v443
    %v449 = vld [vmem:[%s6] sm:$0x1]
    %v450 = vld [vmem:[%s7] sm:$0x1]
    %vm451 = vcmask 1045504
    %v452 = vsel %vm451, %v448, 0.0
    %453 = vadd.xlane.f32.xlu0 %v452
    %v454 = vpop.xlane.xlu0 %453
    %v455 = vrcp.pop 128.0
    %v456 = vmul.f32 %v454, %v455
    %v457 = vsub.f32 %v448, %v456
    %v458 = vmul.f32 %v457, %v457
    %v459 = vsel %vm451, %v458, 0.0
    %460 = vadd.xlane.f32.xlu0 %v459
    %v461 = vpop.xlane.xlu0 %460
    %v462 = vmul.f32 %v461, %v455
    %v463 = vadd.f32 %v462, 1e-05
    %v464 = vrsqrt.pop %v463
    %v465 = vmul.f32 %v457, %v464
    %v467 = vlaneseq
    %v468 = vshrl.u32 %v467, 7
    %v469 = vsub.s32 0, %v468
    %v470 = vrot.slane %v449, %v469
    %v472 = vmul.f32 %v465, %v470
    %v474 = vlaneseq
    %v475 = vshrl.u32 %v474, 7
    %v476 = vsub.s32 0, %v475
    %v477 = vrot.slane %v450, %v476
    %v479 = vadd.f32 %v472, %v477
    %v480 = vld [vmem:[#allocation5] sm:$0xff]
    %v481 = vld [vmem:[#allocation5 + $0x8] sm:$0xff]
    %v482 = vld [vmem:[#allocation5 + $0x10] sm:$0xff]
    %v483 = vld [vmem:[#allocation5 + $0x18] sm:$0xff]
    %v484 = vld [vmem:[#allocation5 + $0x20] sm:$0xff]
    %v485 = vld [vmem:[#allocation5 + $0x28] sm:$0xff]
    %v486 = vld [vmem:[#allocation5 + $0x30] sm:$0xff]
    %v487 = vld [vmem:[#allocation5 + $0x38] sm:$0xff]
    %v488 = vld [vmem:[#allocation5 + $0x40] sm:$0xff]
    %v489 = vld [vmem:[#allocation5 + $0x48] sm:$0xff]
    %v490 = vld [vmem:[#allocation5 + $0x50] sm:$0xff]
    %v491 = vld [vmem:[#allocation5 + $0x58] sm:$0xff]
    %v492 = vld [vmem:[#allocation5 + $0x60] sm:$0xff]
    %v493 = vld [vmem:[#allocation5 + $0x68] sm:$0xff]
    %v494 = vld [vmem:[#allocation5 + $0x70] sm:$0xff]
    %v495 = vld [vmem:[#allocation5 + $0x78] sm:$0xff]
    %v496 = vld [vmem:[#allocation5 + $0x80] sm:$0xff]
    %v497 = vld [vmem:[#allocation5 + $0x88] sm:$0xff]
    %v498 = vld [vmem:[#allocation5 + $0x90] sm:$0xff]
    %v499 = vld [vmem:[#allocation5 + $0x98] sm:$0xff]
    %v500 = vld [vmem:[#allocation5 + $0xa0] sm:$0xff]
    %v501 = vld [vmem:[#allocation5 + $0xa8] sm:$0xff]
    %v502 = vld [vmem:[#allocation5 + $0xb0] sm:$0xff]
    %v503 = vld [vmem:[#allocation5 + $0xb8] sm:$0xff]
    %v504 = vld [vmem:[#allocation5 + $0xc0] sm:$0xff]
    %v505 = vld [vmem:[#allocation5 + $0xc8] sm:$0xff]
    %v506 = vld [vmem:[#allocation5 + $0xd0] sm:$0xff]
    %v507 = vld [vmem:[#allocation5 + $0xd8] sm:$0xff]
    %v508 = vld [vmem:[#allocation5 + $0xe0] sm:$0xff]
    %v509 = vld [vmem:[#allocation5 + $0xe8] sm:$0xff]
    %v510 = vld [vmem:[#allocation5 + $0xf0] sm:$0xff]
    %v511 = vld [vmem:[#allocation5 + $0xf8] sm:$0xff]
    %v512 = vld [vmem:[#allocation5 + $0x100] sm:$0xff]
    %v513 = vld [vmem:[#allocation5 + $0x108] sm:$0xff]
    %v514 = vld [vmem:[#allocation5 + $0x110] sm:$0xff]
    %v515 = vld [vmem:[#allocation5 + $0x118] sm:$0xff]
    %v516 = vld [vmem:[#allocation5 + $0x120] sm:$0xff]
    %v517 = vld [vmem:[#allocation5 + $0x128] sm:$0xff]
    %v518 = vld [vmem:[#allocation5 + $0x130] sm:$0xff]
    %v519 = vld [vmem:[#allocation5 + $0x138] sm:$0xff]
    %v520 = vld [vmem:[#allocation5 + $0x140] sm:$0xff]
    %v521 = vld [vmem:[#allocation5 + $0x148] sm:$0xff]
    %v522 = vld [vmem:[#allocation5 + $0x150] sm:$0xff]
    %v523 = vld [vmem:[#allocation5 + $0x158] sm:$0xff]
    %v524 = vld [vmem:[#allocation5 + $0x160] sm:$0xff]
    %v525 = vld [vmem:[#allocation5 + $0x168] sm:$0xff]
    %v526 = vld [vmem:[#allocation5 + $0x170] sm:$0xff]
    %v527 = vld [vmem:[#allocation5 + $0x178] sm:$0xff]
    %v528 = vld [vmem:[%s9] sm:$0x7]
    %v530 = vlaneseq
    %v531 = vshrl.u32 %v530, 7
    %v532 = vsub.s32 0, %v531
    %v533 = vrot.slane %v528, %v532
    %v534 = vlaneseq
    %v535 = vshrl.u32 %v534, 7
    %v536 = vsub.s32 1, %v535
    %v537 = vrot.slane %v528, %v536
    %v538 = vlaneseq
    %v539 = vshrl.u32 %v538, 7
    %v540 = vsub.s32 2, %v539
    %v541 = vrot.slane %v528, %v540
    %545 = vmatprep.subr.mxu0 %v481
    %546 = vmatpush1.msra.mxu0 %v480
    %547 = vmatprep.subr.mxu0 %v484
    %548 = vmatpush1.msra.mxu0 %v483
    %549 = vmatprep.subr.mxu0 %v487
    %550 = vmatpush1.msra.mxu0 %v486
    %551 = vmatprep.subr.mxu0 %v490
    %552 = vmatpush1.msra.mxu0 %v489
    %553 = vmatprep.subr.mxu0 %v493
    %554 = vmatpush1.msra.mxu0 %v492
    %555 = vmatprep.subr.mxu0 %v496
    %556 = vmatpush1.msra.mxu0 %v495
    %557 = vmatprep.subr.mxu0 %v499
    %558 = vmatpush1.msra.mxu0 %v498
    %559 = vmatprep.subr.mxu0 %v502
    %560 = vmatpush1.msra.mxu0 %v501
    %561 = vmatprep.subr.mxu0 %v505
    %562 = vmatpush1.msra.mxu0 %v504
    %563 = vmatprep.subr.mxu0 %v508
    %564 = vmatpush1.msra.mxu0 %v507
    %565 = vmatprep.subr.mxu0 %v511
    %566 = vmatpush1.msra.mxu0 %v510
    %567 = vmatprep.subr.mxu0 %v514
    %568 = vmatpush1.msra.mxu0 %v513
    %569 = vmatprep.subr.mxu0 %v517
    %570 = vmatpush1.msra.mxu0 %v516
    %571 = vmatprep.subr.mxu0 %v520
    %572 = vmatpush1.msra.mxu0 %v519
    %573 = vmatprep.subr.mxu0 %v523
    %574 = vmatpush1.msra.mxu0 %v522
    %575 = vmatprep.subr.mxu0 %v526
    %576 = vmatpush1.msra.mxu0 %v525
    %577 = vmatprep.subr.mxu0 0.0
    %578 = vmatpush1.msra.mxu0 0.0
    %579 = vmatprep.subr.mxu0 0.0
    %580 = vmatpush1.msra.mxu0 0.0
    %581 = vmatprep.subr.mxu0 0.0
    %582 = vmatpush1.msra.mxu0 0.0
    %583 = vmatprep.subr.mxu0 0.0
    %584 = vmatpush1.msra.mxu0 0.0
    %585 = vmatprep.subr.mxu0 0.0
    %586 = vmatpush1.msra.mxu0 0.0
    %587 = vmatprep.subr.mxu0 0.0
    %588 = vmatpush1.msra.mxu0 0.0
    %589 = vmatprep.subr.mxu0 0.0
    %590 = vmatpush1.msra.mxu0 0.0
    %591 = vmatprep.subr.mxu0 0.0
    %592 = vmatpush1.msra.mxu0 0.0
    %593 = vmatprep.subr.mxu0 0.0
    %594 = vmatpush1.msra.mxu0 0.0
    %595 = vmatprep.subr.mxu0 0.0
    %596 = vmatpush1.msra.mxu0 0.0
    %597 = vmatprep.subr.mxu0 0.0
    %598 = vmatpush1.msra.mxu0 0.0
    %599 = vmatprep.subr.mxu0 0.0
    %600 = vmatpush1.msra.mxu0 0.0
    %601 = vmatprep.subr.mxu0 0.0
    %602 = vmatpush1.msra.mxu0 0.0
    %603 = vmatprep.subr.mxu0 0.0
    %604 = vmatpush1.msra.mxu0 0.0
    %605 = vmatprep.subr.mxu0 0.0
    %606 = vmatpush1.msra.mxu0 0.0
    %607 = vmatprep.subr.mxu0 0.0
    %608 = vmatpush1.msra.mxu0 0.0
    %609 = vmatprep.mubr.f32.mxu0 0.0
    %610 = vmatmul.mubr.f32.gmra.mrb[0].mxu0 %v479
    %v611 = vpop.f32.mrb[0].mxu0
    %v612 = vadd.f32 %v533, %v611
    %v613 = vpop.f32.mrb[0].mxu0
    %v614 = vadd.f32 %v537, %v613
    %615 = vdwg.mxu0
    %616 = vmatprep.subr.mxu0 0.0
    %617 = vmatpush1.msra.mxu0 %v482
    %618 = vmatprep.subr.mxu0 0.0
    %619 = vmatpush1.msra.mxu0 %v485
    %620 = vmatprep.subr.mxu0 0.0
    %621 = vmatpush1.msra.mxu0 %v488
    %622 = vmatprep.subr.mxu0 0.0
    %623 = vmatpush1.msra.mxu0 %v491
    %624 = vmatprep.subr.mxu0 0.0
    %625 = vmatpush1.msra.mxu0 %v494
    %626 = vmatprep.subr.mxu0 0.0
    %627 = vmatpush1.msra.mxu0 %v497
    %628 = vmatprep.subr.mxu0 0.0
    %629 = vmatpush1.msra.mxu0 %v500
    %630 = vmatprep.subr.mxu0 0.0
    %631 = vmatpush1.msra.mxu0 %v503
    %632 = vmatprep.subr.mxu0 0.0
    %633 = vmatpush1.msra.mxu0 %v506
    %634 = vmatprep.subr.mxu0 0.0
    %635 = vmatpush1.msra.mxu0 %v509
    %636 = vmatprep.subr.mxu0 0.0
    %637 = vmatpush1.msra.mxu0 %v512
    %638 = vmatprep.subr.mxu0 0.0
    %639 = vmatpush1.msra.mxu0 %v515
    %640 = vmatprep.subr.mxu0 0.0
    %641 = vmatpush1.msra.mxu0 %v518
    %642 = vmatprep.subr.mxu0 0.0
    %643 = vmatpush1.msra.mxu0 %v521
    %644 = vmatprep.subr.mxu0 0.0
    %645 = vmatpush1.msra.mxu0 %v524
    %646 = vmatprep.subr.mxu0 0.0
    %647 = vmatpush1.msra.mxu0 %v527
    %648 = vmatprep.subr.mxu0 0.0
    %649 = vmatpush1.msra.mxu0 0.0
    %650 = vmatprep.subr.mxu0 0.0
    %651 = vmatpush1.msra.mxu0 0.0
    %652 = vmatprep.subr.mxu0 0.0
    %653 = vmatpush1.msra.mxu0 0.0
    %654 = vmatprep.subr.mxu0 0.0
    %655 = vmatpush1.msra.mxu0 0.0
    %656 = vmatprep.subr.mxu0 0.0
    %657 = vmatpush1.msra.mxu0 0.0
    %658 = vmatprep.subr.mxu0 0.0
    %659 = vmatpush1.msra.mxu0 0.0
    %660 = vmatprep.subr.mxu0 0.0
    %661 = vmatpush1.msra.mxu0 0.0
    %662 = vmatprep.subr.mxu0 0.0
    %663 = vmatpush1.msra.mxu0 0.0
    %664 = vmatprep.subr.mxu0 0.0
    %665 = vmatpush1.msra.mxu0 0.0
    %666 = vmatprep.subr.mxu0 0.0
    %667 = vmatpush1.msra.mxu0 0.0
    %668 = vmatprep.subr.mxu0 0.0
    %669 = vmatpush1.msra.mxu0 0.0
    %670 = vmatprep.subr.mxu0 0.0
    %671 = vmatpush1.msra.mxu0 0.0
    %672 = vmatprep.subr.mxu0 0.0
    %673 = vmatpush1.msra.mxu0 0.0
    %674 = vmatprep.subr.mxu0 0.0
    %675 = vmatpush1.msra.mxu0 0.0
    %676 = vmatprep.subr.mxu0 0.0
    %677 = vmatpush1.msra.mxu0 0.0
    %678 = vmatprep.subr.mxu0 0.0
    %679 = vmatpush1.msra.mxu0 0.0
    %680 = vmatprep.mubr.f32.mxu0 0.0
    %681 = vmatmul.mubr.f32.gmra.mrb[0].mxu0 %v479
    %v682 = vpop.f32.mrb[0].mxu0
    %v683 = vadd.f32 %v541, %v682
    %v684 = vpop.f32.mrb[0].mxu0
    %685 = vdwg.mxu0
    %v686 = vmul.f32 %v612, %v614
    %v687 = vsel %vm445, %v686, 0.0
    %688 = vadd.xlane.f32.xlu0 %v687
    %v689 = vpop.xlane.xlu0 %688
    %v691 = vrot.slane %v614, 2
    %v693 = vmul.f32 %v612, %v691
    %v694 = vsel %vm445, %v693, 0.0
    %695 = vadd.xlane.f32.xlu0 %v694
    %v696 = vpop.xlane.xlu0 %695
    %v697 = vrot.slane %v614, 4
    %v699 = vmul.f32 %v612, %v697
    %v700 = vsel %vm445, %v699, 0.0
    %701 = vadd.xlane.f32.xlu0 %v700
    %v702 = vpop.xlane.xlu0 %701
    %v703 = vmax.f32 %v689, %v696
    %v704 = vmax.f32 %v703, %v702
    %v705 = vsub.f32 %v689, %v704
    %v706 = vmul.f32 %v705, 1.442695
    %v707 = vpow.pop %v706
    %v708 = vsub.f32 %v696, %v704
    %v709 = vmul.f32 %v708, 1.442695
    %v710 = vpow.pop %v709
    %v711 = vsub.f32 %v702, %v704
    %v712 = vmul.f32 %v711, 1.442695
    %v713 = vpow.pop %v712
    %v714 = vadd.f32 %v707, %v710
    %v715 = vadd.f32 %v714, %v713
    %v716 = vrcp.pop %v715
    %v717 = vmul.f32 %v707, %v683
    %v719 = vrot.slane %v683, 2
    %v721 = vmul.f32 %v710, %v719
    %v722 = vadd.f32 %v717, %v721
    %v723 = vrot.slane %v683, 4
    %v725 = vmul.f32 %v713, %v723
    %v726 = vadd.f32 %v722, %v725
    %v727 = vmul.f32 %v726, %v716
    %v728 = vrot.slane %v614, 6
    %v730 = vmul.f32 %v612, %v728
    %vm731 = vcmask 1043458
    %v732 = vsel %vm731, %v730, 0.0
    %733 = vadd.xlane.f32.xlu0 %v732
    %v734 = vpop.xlane.xlu0 %733
    %v735 = vsel %vm731, %v686, 0.0
    %736 = vadd.xlane.f32.xlu0 %v735
    %v737 = vpop.xlane.xlu0 %736
    %v738 = vsel %vm731, %v693, 0.0
    %739 = vadd.xlane.f32.xlu0 %v738
    %v740 = vpop.xlane.xlu0 %739
    %v741 = vmax.f32 %v734, %v737
    %v742 = vmax.f32 %v741, %v740
    %v743 = vsub.f32 %v734, %v742
    %v744 = vmul.f32 %v743, 1.442695
    %v745 = vpow.pop %v744
    %v746 = vsub.f32 %v737, %v742
    %v747 = vmul.f32 %v746, 1.442695
    %v748 = vpow.pop %v747
    %v749 = vsub.f32 %v740, %v742
    %v750 = vmul.f32 %v749, 1.442695
    %v751 = vpow.pop %v750
    %v752 = vadd.f32 %v745, %v748
    %v753 = vadd.f32 %v752, %v751
    %v754 = vrcp.pop %v753
    %v755 = vrot.slane %v683, 6
    %v757 = vmul.f32 %v745, %v755
    %v758 = vmul.f32 %v748, %v683
    %v759 = vadd.f32 %v757, %v758
    %v760 = vmul.f32 %v751, %v719
    %v761 = vadd.f32 %v759, %v760
    %v762 = vmul.f32 %v761, %v754
    %vm763 = vcmask 1045508
    %v764 = vsel %vm763, %v699, 0.0
    %765 = vadd.xlane.f32.xlu0 %v764
    %v766 = vpop.xlane.xlu0 %765
    %v767 = vsel %vm763, %v730, 0.0
    %768 = vadd.xlane.f32.xlu0 %v767
    %v769 = vpop.xlane.xlu0 %768
    %v770 = vsel %vm763, %v686, 0.0
    %771 = vadd.xlane.f32.xlu0 %v770
    %v772 = vpop.xlane.xlu0 %771
    %v773 = vmax.f32 %v766, %v769
    %v774 = vmax.f32 %v773, %v772
    %v775 = vsub.f32 %v766, %v774
    %v776 = vmul.f32 %v775, 1.442695
    %v777 = vpow.pop %v776
    %v778 = vsub.f32 %v769, %v774
    %v779 = vmul.f32 %v778, 1.442695
    %v780 = vpow.pop %v779
    %v781 = vsub.f32 %v772, %v774
    %v782 = vmul.f32 %v781, 1.442695
    %v783 = vpow.pop %v782
    %v784 = vadd.f32 %v777, %v780
    %v785 = vadd.f32 %v784, %v783
    %v786 = vrcp.pop %v785
    %v787 = vmul.f32 %v777, %v723
    %v788 = vmul.f32 %v780, %v755
    %v789 = vadd.f32 %v787, %v788
    %v790 = vmul.f32 %v783, %v683
    %v791 = vadd.f32 %v789, %v790
    %v792 = vmul.f32 %v791, %v786
    %v793 = vsel %vm445, %v727, %v762
    %v794 = vsel %vm447, %v793, %v792
    %v795 = vld [vmem:[#allocation7] sm:$0xff]
    %v796 = vld [vmem:[#allocation7 + $0x8] sm:$0xff]
    %v797 = vld [vmem:[#allocation7 + $0x10] sm:$0xff]
    %v798 = vld [vmem:[#allocation7 + $0x18] sm:$0xff]
    %v799 = vld [vmem:[#allocation7 + $0x20] sm:$0xff]
    %v800 = vld [vmem:[#allocation7 + $0x28] sm:$0xff]
    %v801 = vld [vmem:[#allocation7 + $0x30] sm:$0xff]
    %v802 = vld [vmem:[#allocation7 + $0x38] sm:$0xff]
    %v803 = vld [vmem:[#allocation7 + $0x40] sm:$0xff]
    %v804 = vld [vmem:[#allocation7 + $0x48] sm:$0xff]
    %v805 = vld [vmem:[#allocation7 + $0x50] sm:$0xff]
    %v806 = vld [vmem:[#allocation7 + $0x58] sm:$0xff]
    %v807 = vld [vmem:[#allocation7 + $0x60] sm:$0xff]
    %v808 = vld [vmem:[#allocation7 + $0x68] sm:$0xff]
    %v809 = vld [vmem:[#allocation7 + $0x70] sm:$0xff]
    %v810 = vld [vmem:[#allocation7 + $0x78] sm:$0xff]
    %811 = vmatprep.subr.mxu0 0.0
    %812 = vmatpush1.msra.mxu0 %v795
    %813 = vmatprep.subr.mxu0 0.0
    %814 = vmatpush1.msra.mxu0 %v796
    %815 = vmatprep.subr.mxu0 0.0
    %816 = vmatpush1.msra.mxu0 %v797
    %817 = vmatprep.subr.mxu0 0.0
    %818 = vmatpush1.msra.mxu0 %v798
    %819 = vmatprep.subr.mxu0 0.0
    %820 = vmatpush1.msra.mxu0 %v799
    %821 = vmatprep.subr.mxu0 0.0
    %822 = vmatpush1.msra.mxu0 %v800
    %823 = vmatprep.subr.mxu0 0.0
    %824 = vmatpush1.msra.mxu0 %v801
    %825 = vmatprep.subr.mxu0 0.0
    %826 = vmatpush1.msra.mxu0 %v802
    %827 = vmatprep.subr.mxu0 0.0
    %828 = vmatpush1.msra.mxu0 %v803
    %829 = vmatprep.subr.mxu0 0.0
    %830 = vmatpush1.msra.mxu0 %v804
    %831 = vmatprep.subr.mxu0 0.0
    %832 = vmatpush1.msra.mxu0 %v805
    %833 = vmatprep.subr.mxu0 0.0
    %834 = vmatpush1.msra.mxu0 %v806
    %835 = vmatprep.subr.mxu0 0.0
    %836 = vmatpush1.msra.mxu0 %v807
    %837 = vmatprep.subr.mxu0 0.0
    %838 = vmatpush1.msra.mxu0 %v808
    %839 = vmatprep.subr.mxu0 0.0
    %840 = vmatpush1.msra.mxu0 %v809
    %841 = vmatprep.subr.mxu0 0.0
    %842 = vmatpush1.msra.mxu0 %v810
    %843 = vmatprep.subr.mxu0 0.0
    %844 = vmatpush1.msra.mxu0 0.0
    %845 = vmatprep.subr.mxu0 0.0
    %846 = vmatpush1.msra.mxu0 0.0
    %847 = vmatprep.subr.mxu0 0.0
    %848 = vmatpush1.msra.mxu0 0.0
    %849 = vmatprep.subr.mxu0 0.0
    %850 = vmatpush1.msra.mxu0 0.0
    %851 = vmatprep.subr.mxu0 0.0
    %852 = vmatpush1.msra.mxu0 0.0
    %853 = vmatprep.subr.mxu0 0.0
    %854 = vmatpush1.msra.mxu0 0.0
    %855 = vmatprep.subr.mxu0 0.0
    %856 = vmatpush1.msra.mxu0 0.0
    %857 = vmatprep.subr.mxu0 0.0
    %858 = vmatpush1.msra.mxu0 0.0
    %859 = vmatprep.subr.mxu0 0.0
    %860 = vmatpush1.msra.mxu0 0.0
    %861 = vmatprep.subr.mxu0 0.0
    %862 = vmatpush1.msra.mxu0 0.0
    %863 = vmatprep.subr.mxu0 0.0
    %864 = vmatpush1.msra.mxu0 0.0
    %865 = vmatprep.subr.mxu0 0.0
    %866 = vmatpush1.msra.mxu0 0.0
    %867 = vmatprep.subr.mxu0 0.0
    %868 = vmatpush1.msra.mxu0 0.0
    %869 = vmatprep.subr.mxu0 0.0
    %870 = vmatpush1.msra.mxu0 0.0
    %871 = vmatprep.subr.mxu0 0.0
    %872 = vmatpush1.msra.mxu0 0.0
    %873 = vmatprep.subr.mxu0 0.0
    %874 = vmatpush1.msra.mxu0 0.0
    %875 = vmatprep.mubr.f32.mxu0 0.0
    %876 = vmatmul.mubr.f32.gmra.mrb[0].mxu0 %v794
    %v877 = vpop.f32.mrb[0].mxu0
    %v878 = vadd.f32 0.0, %v877
    %v879 = vpop.f32.mrb[0].mxu0
    %880 = vdwg.mxu0
    %v881 = vadd.f32 %v448, %v878
    %v882 = vld [vmem:[%s11] sm:$0x1]
    %v884 = vlaneseq
    %v885 = vshrl.u32 %v884, 7
    %v886 = vsub.s32 0, %v885
    %v887 = vrot.slane %v882, %v886
    %v889 = vadd.f32 %v881, %v887
    %v890 = vld [vmem:[%s12] sm:$0x1]
    %v891 = vld [vmem:[%s13] sm:$0x1]
    %v892 = vsel %vm451, %v889, 0.0
    %893 = vadd.xlane.f32.xlu0 %v892
    %v894 = vpop.xlane.xlu0 %893
    %v895 = vmul.f32 %v894, %v455
    %v896 = vsub.f32 %v889, %v895
    %v897 = vmul.f32 %v896, %v896
    %v898 = vsel %vm451, %v897, 0.0
    %899 = vadd.xlane.f32.xlu0 %v898
    %v900 = vpop.xlane.xlu0 %899
    %v901 = vmul.f32 %v900, %v455
    %v902 = vadd.f32 %v901, 1e-05
    %v903 = vrsqrt.pop %v902
    %v904 = vmul.f32 %v896, %v903
    %v906 = vlaneseq
    %v907 = vshrl.u32 %v906, 7
    %v908 = vsub.s32 0, %v907
    %v909 = vrot.slane %v890, %v908
    %v911 = vmul.f32 %v904, %v909
    %v913 = vlaneseq
    %v914 = vshrl.u32 %v913, 7
    %v915 = vsub.s32 0, %v914
    %v916 = vrot.slane %v891, %v915
    %v918 = vadd.f32 %v911, %v916
    %v919 = vld [vmem:[#allocation8] sm:$0xff]
    %v920 = vld [vmem:[#allocation8 + $0x8] sm:$0xff]
    %v921 = vld [vmem:[#allocation8 + $0x10] sm:$0xff]
    %v922 = vld [vmem:[#allocation8 + $0x18] sm:$0xff]
    %v923 = vld [vmem:[#allocation8 + $0x20] sm:$0xff]
    %v924 = vld [vmem:[#allocation8 + $0x28] sm:$0xff]
    %v925 = vld [vmem:[#allocation8 + $0x30] sm:$0xff]
    %v926 = vld [vmem:[#allocation8 + $0x38] sm:$0xff]
    %v927 = vld [vmem:[#allocation8 + $0x40] sm:$0xff]
    %v928 = vld [vmem:[#allocation8 + $0x48] sm:$0xff]
    %v929 = vld [vmem:[#allocation8 + $0x50] sm:$0xff]
    %v930 = vld [vmem:[#allocation8 + $0x58] sm:$0xff]
    %v931 = vld [vmem:[#allocation8 + $0x60] sm:$0xff]
    %v932 = vld [vmem:[#allocation8 + $0x68] sm:$0xff]
    %v933 = vld [vmem:[#allocation8 + $0x70] sm:$0xff]
    %v934 = vld [vmem:[#allocation8 + $0x78] sm:$0xff]
    %v935 = vld [vmem:[#allocation8 + $0x80] sm:$0xff]
    %v936 = vld [vmem:[#allocation8 + $0x88] sm:$0xff]
    %v937 = vld [vmem:[#allocation8 + $0x90] sm:$0xff]
    %v938 = vld [vmem:[#allocation8 + $0x98] sm:$0xff]
    %v939 = vld [vmem:[#allocation8 + $0xa0] sm:$0xff]
    %v940 = vld [vmem:[#allocation8 + $0xa8] sm:$0xff]
    %v941 = vld [vmem:[#allocation8 + $0xb0] sm:$0xff]
    %v942 = vld [vmem:[#allocation8 + $0xb8] sm:$0xff]
    %v943 = vld [vmem:[#allocation8 + $0xc0] sm:$0xff]
    %v944 = vld [vmem:[#allocation8 + $0xc8] sm:$0xff]
    %v945 = vld [vmem:[#allocation8 + $0xd0] sm:$0xff]
    %v946 = vld [vmem:[#allocation8 + $0xd8] sm:$0xff]
    %v947 = vld [vmem:[#allocation8 + $0xe0] sm:$0xff]
    %v948 = vld [vmem:[#allocation8 + $0xe8] sm:$0xff]
    %v949 = vld [vmem:[#allocation8 + $0xf0] sm:$0xff]
    %v950 = vld [vmem:[#allocation8 + $0xf8] sm:$0xff]
    %v951 = vld [vmem:[#allocation8 + $0x100] sm:$0xff]
    %v952 = vld [vmem:[#allocation8 + $0x108] sm:$0xff]
    %v953 = vld [vmem:[#allocation8 + $0x110] sm:$0xff]
    %v954 = vld [vmem:[#allocation8 + $0x118] sm:$0xff]
    %v955 = vld [vmem:[#allocation8 + $0x120] sm:$0xff]
    %v956 = vld [vmem:[#allocation8 + $0x128] sm:$0xff]
    %v957 = vld [vmem:[#allocation8 + $0x130] sm:$0xff]
    %v958 = vld [vmem:[#allocation8 + $0x138] sm:$0xff]
    %v959 = vld [vmem:[#allocation8 + $0x140] sm:$0xff]
    %v960 = vld [vmem:[#allocation8 + $0x148] sm:$0xff]
    %v961 = vld [vmem:[#allocation8 + $0x150] sm:$0xff]
    %v962 = vld [vmem:[#allocation8 + $0x158] sm:$0xff]
    %v963 = vld [vmem:[#allocation8 + $0x160] sm:$0xff]
    %v964 = vld [vmem:[#allocation8 + $0x168] sm:$0xff]
    %v965 = vld [vmem:[#allocation8 + $0x170] sm:$0xff]
    %v966 = vld [vmem:[#allocation8 + $0x178] sm:$0xff]
    %v967 = vld [vmem:[#allocation8 + $0x180] sm:$0xff]
    %v968 = vld [vmem:[#allocation8 + $0x188] sm:$0xff]
    %v969 = vld [vmem:[#allocation8 + $0x190] sm:$0xff]
    %v970 = vld [vmem:[#allocation8 + $0x198] sm:$0xff]
    %v971 = vld [vmem:[#allocation8 + $0x1a0] sm:$0xff]
    %v972 = vld [vmem:[#allocation8 + $0x1a8] sm:$0xff]
    %v973 = vld [vmem:[#allocation8 + $0x1b0] sm:$0xff]
    %v974 = vld [vmem:[#allocation8 + $0x1b8] sm:$0xff]
    %v975 = vld [vmem:[#allocation8 + $0x1c0] sm:$0xff]
    %v976 = vld [vmem:[#allocation8 + $0x1c8] sm:$0xff]
    %v977 = vld [vmem:[#allocation8 + $0x1d0] sm:$0xff]
    %v978 = vld [vmem:[#allocation8 + $0x1d8] sm:$0xff]
    %v979 = vld [vmem:[#allocation8 + $0x1e0] sm:$0xff]
    %v980 = vld [vmem:[#allocation8 + $0x1e8] sm:$0xff]
    %v981 = vld [vmem:[#allocation8 + $0x1f0] sm:$0xff]
    %v982 = vld [vmem:[#allocation8 + $0x1f8] sm:$0xff]
    %v983 = vld [vmem:[%s15] sm:$0xf]
    %v985 = vlaneseq
    %v986 = vshrl.u32 %v985, 7
    %v987 = vsub.s32 0, %v986
    %v988 = vrot.slane %v983, %v987
    %v989 = vlaneseq
    %v990 = vshrl.u32 %v989, 7
    %v991 = vsub.s32 1, %v990
    %v992 = vrot.slane %v983, %v991
    %v993 = vlaneseq
    %v994 = vshrl.u32 %v993, 7
    %v995 = vsub.s32 2, %v994
    %v996 = vrot.slane %v983, %v995
    %v997 = vlaneseq
    %v998 = vshrl.u32 %v997, 7
    %v999 = vsub.s32 3, %v998
    %v1000 = vrot.slane %v983, %v999
    %1005 = vmatprep.subr.mxu0 %v920
    %1006 = vmatpush1.msra.mxu0 %v919
    %1007 = vmatprep.subr.mxu0 %v924
    %1008 = vmatpush1.msra.mxu0 %v923
    %1009 = vmatprep.subr.mxu0 %v928
    %1010 = vmatpush1.msra.mxu0 %v927
    %1011 = vmatprep.subr.mxu0 %v932
    %1012 = vmatpush1.msra.mxu0 %v931
    %1013 = vmatprep.subr.mxu0 %v936
    %1014 = vmatpush1.msra.mxu0 %v935
    %1015 = vmatprep.subr.mxu0 %v940
    %1016 = vmatpush1.msra.mxu0 %v939
    %1017 = vmatprep.subr.mxu0 %v944
    %1018 = vmatpush1.msra.mxu0 %v943
    %1019 = vmatprep.subr.mxu0 %v948
    %1020 = vmatpush1.msra.mxu0 %v947
    %1021 = vmatprep.subr.mxu0 %v952
    %1022 = vmatpush1.msra.mxu0 %v951
    %1023 = vmatprep.subr.mxu0 %v956
    %1024 = vmatpush1.msra.mxu0 %v955
    %1025 = vmatprep.subr.mxu0 %v960
    %1026 = vmatpush1.msra.mxu0 %v959
    %1027 = vmatprep.subr.mxu0 %v964
    %1028 = vmatpush1.msra.mxu0 %v963
    %1029 = vmatprep.subr.mxu0 %v968
    %1030 = vmatpush1.msra.mxu0 %v967
    %1031 = vmatprep.subr.mxu0 %v972
    %1032 = vmatpush1.msra.mxu0 %v971
    %1033 = vmatprep.subr.mxu0 %v976
    %1034 = vmatpush1.msra.mxu0 %v975
    %1035 = vmatprep.subr.mxu0 %v980
    %1036 = vmatpush1.msra.mxu0 %v979
    %1037 = vmatprep.subr.mxu0 0.0
    %1038 = vmatpush1.msra.mxu0 0.0
    %1039 = vmatprep.subr.mxu0 0.0
    %1040 = vmatpush1.msra.mxu0 0.0
    %1041 = vmatprep.subr.mxu0 0.0
    %1042 = vmatpush1.msra.mxu0 0.0
    %1043 = vmatprep.subr.mxu0 0.0
    %1044 = vmatpush1.msra.mxu0 0.0
    %1045 = vmatprep.subr.mxu0 0.0
    %1046 = vmatpush1.msra.mxu0 0.0
    %1047 = vmatprep.subr.mxu0 0.0
    %1048 = vmatpush1.msra.mxu0 0.0
    %1049 = vmatprep.subr.mxu0 0.0
    %1050 = vmatpush1.msra.mxu0 0.0
    %1051 = vmatprep.subr.mxu0 0.0
    %1052 = vmatpush1.msra.mxu0 0.0
    %1053 = vmatprep.subr.mxu0 0.0
    %1054 = vmatpush1.msra.mxu0 0.0
    %1055 = vmatprep.subr.mxu0 0.0
    %1056 = vmatpush1.msra.mxu0 0.0
    %1057 = vmatprep.subr.mxu0 0.0
    %1058 = vmatpush1.msra.mxu0 0.0
    %1059 = vmatprep.subr.mxu0 0.0
    %1060 = vmatpush1.msra.mxu0 0.0
    %1061 = vmatprep.subr.mxu0 0.0
    %1062 = vmatpush1.msra.mxu0 0.0
    %1063 = vmatprep.subr.mxu0 0.0
    %1064 = vmatpush1.msra.mxu0 0.0
    %1065 = vmatprep.subr.mxu0 0.0
    %1066 = vmatpush1.msra.mxu0 0.0
    %1067 = vmatprep.subr.mxu0 0.0
    %1068 = vmatpush1.msra.mxu0 0.0
    %1069 = vmatprep.mubr.f32.mxu0 0.0
    %1070 = vmatmul.mubr.f32.gmra.mrb[0].mxu0 %v918
    %v1071 = vpop.f32.mrb[0].mxu0
    %v1072 = vadd.f32 %v988, %v1071
    %v1073 = vpop.f32.mrb[0].mxu0
    %v1074 = vadd.f32 %v992, %v1073
    %1075 = vdwg.mxu0
    %1076 = vmatprep.subr.mxu0 %v922
    %1077 = vmatpush1.msra.mxu0 %v921
    %1078 = vmatprep.subr.mxu0 %v926
    %1079 = vmatpush1.msra.mxu0 %v925
    %1080 = vmatprep.subr.mxu0 %v930
    %1081 = vmatpush1.msra.mxu0 %v929
    %1082 = vmatprep.subr.mxu0 %v934
    %1083 = vmatpush1.msra.mxu0 %v933
    %1084 = vmatprep.subr.mxu0 %v938
    %1085 = vmatpush1.msra.mxu0 %v937
    %1086 = vmatprep.subr.mxu0 %v942
    %1087 = vmatpush1.msra.mxu0 %v941
    %1088 = vmatprep.subr.mxu0 %v946
    %1089 = vmatpush1.msra.mxu0 %v945
    %1090 = vmatprep.subr.mxu0 %v950
    %1091 = vmatpush1.msra.mxu0 %v949
    %1092 = vmatprep.subr.mxu0 %v954
    %1093 = vmatpush1.msra.mxu0 %v953
    %1094 = vmatprep.subr.mxu0 %v958
    %1095 = vmatpush1.msra.mxu0 %v957
    %1096 = vmatprep.subr.mxu0 %v962
    %1097 = vmatpush1.msra.mxu0 %v961
    %1098 = vmatprep.subr.mxu0 %v966
    %1099 = vmatpush1.msra.mxu0 %v965
    %1100 = vmatprep.subr.mxu0 %v970
    %1101 = vmatpush1.msra.mxu0 %v969
    %1102 = vmatprep.subr.mxu0 %v974
    %1103 = vmatpush1.msra.mxu0 %v973
    %1104 = vmatprep.subr.mxu0 %v978
    %1105 = vmatpush1.msra.mxu0 %v977
    %1106 = vmatprep.subr.mxu0 %v982
    %1107 = vmatpush1.msra.mxu0 %v981
    %1108 = vmatprep.subr.mxu0 0.0
    %1109 = vmatpush1.msra.mxu0 0.0
    %1110 = vmatprep.subr.mxu0 0.0
    %1111 = vmatpush1.msra.mxu0 0.0
    %1112 = vmatprep.subr.mxu0 0.0
    %1113 = vmatpush1.msra.mxu0 0.0
    %1114 = vmatprep.subr.mxu0 0.0
    %1115 = vmatpush1.msra.mxu0 0.0
    %1116 = vmatprep.subr.mxu0 0.0
    %1117 = vmatpush1.msra.mxu0 0.0
    %1118 = vmatprep.subr.mxu0 0.0
    %1119 = vmatpush1.msra.mxu0 0.0
    %1120 = vmatprep.subr.mxu0 0.0
    %1121 = vmatpush1.msra.mxu0 0.0
    %1122 = vmatprep.subr.mxu0 0.0
    %1123 = vmatpush1.msra.mxu0 0.0
    %1124 = vmatprep.subr.mxu0 0.0
    %1125 = vmatpush1.msra.mxu0 0.0
    %1126 = vmatprep.subr.mxu0 0.0
    %1127 = vmatpush1.msra.mxu0 0.0
    %1128 = vmatprep.subr.mxu0 0.0
    %1129 = vmatpush1.msra.mxu0 0.0
    %1130 = vmatprep.subr.mxu0 0.0
    %1131 = vmatpush1.msra.mxu0 0.0
    %1132 = vmatprep.subr.mxu0 0.0
    %1133 = vmatpush1.msra.mxu0 0.0
    %1134 = vmatprep.subr.mxu0 0.0
    %1135 = vmatpush1.msra.mxu0 0.0
    %1136 = vmatprep.subr.mxu0 0.0
    %1137 = vmatpush1.msra.mxu0 0.0
    %1138 = vmatprep.subr.mxu0 0.0
    %1139 = vmatpush1.msra.mxu0 0.0
    %1140 = vmatprep.mubr.f32.mxu0 0.0
    %1141 = vmatmul.mubr.f32.gmra.mrb[0].mxu0 %v918
    %v1142 = vpop.f32.mrb[0].mxu0
    %v1143 = vadd.f32 %v996, %v1142
    %v1144 = vpop.f32.mrb[0].mxu0
    %v1145 = vadd.f32 %v1000, %v1144
    %1146 = vdwg.mxu0
    %v1147 = vmul.f32 %v1072, 0.5
    %v1148 = vmul.f32 %v1074, 0.5
    %v1149 = vmul.f32 %v1143, 0.5
    %v1150 = vmul.f32 %v1145, 0.5
    %v1151 = vmul.f32 %v1072, 0.70710677
    %v1152 = vmul.f32 %v1074, 0.70710677
    %v1153 = vmul.f32 %v1143, 0.70710677
    %v1154 = vmul.f32 %v1145, 0.70710677
    %v1155 = verf.f32.pop %v1151
    %v1156 = verf.f32.pop %v1152
    %v1157 = verf.f32.pop %v1153
    %v1158 = verf.f32.pop %v1154
    %v1159 = vadd.f32 %v1155, 1.0
    %v1160 = vadd.f32 %v1156, 1.0
    %v1161 = vadd.f32 %v1157, 1.0
    %v1162 = vadd.f32 %v1158, 1.0
    %v1163 = vmul.f32 %v1147, %v1159
    %v1164 = vmul.f32 %v1148, %v1160
    %v1165 = vmul.f32 %v1149, %v1161
    %v1166 = vmul.f32 %v1150, %v1162
    %v1167 = vld [vmem:[#allocation10] sm:$0xff]
    %v1168 = vld [vmem:[#allocation10 + $0x8] sm:$0xff]
    %v1169 = vld [vmem:[#allocation10 + $0x10] sm:$0xff]
    %v1170 = vld [vmem:[#allocation10 + $0x18] sm:$0xff]
    %v1171 = vld [vmem:[#allocation10 + $0x20] sm:$0xff]
    %v1172 = vld [vmem:[#allocation10 + $0x28] sm:$0xff]
    %v1173 = vld [vmem:[#allocation10 + $0x30] sm:$0xff]
    %v1174 = vld [vmem:[#allocation10 + $0x38] sm:$0xff]
    %v1175 = vld [vmem:[#allocation10 + $0x40] sm:$0xff]
    %v1176 = vld [vmem:[#allocation10 + $0x48] sm:$0xff]
    %v1177 = vld [vmem:[#allocation10 + $0x50] sm:$0xff]
    %v1178 = vld [vmem:[#allocation10 + $0x58] sm:$0xff]
    %v1179 = vld [vmem:[#allocation10 + $0x60] sm:$0xff]
    %v1180 = vld [vmem:[#allocation10 + $0x68] sm:$0xff]
    %v1181 = vld [vmem:[#allocation10 + $0x70] sm:$0xff]
    %v1182 = vld [vmem:[#allocation10 + $0x78] sm:$0xff]
    %v1183 = vld [vmem:[#allocation10 + $0x80] sm:$0xff]
    %v1184 = vld [vmem:[#allocation10 + $0x88] sm:$0xff]
    %v1185 = vld [vmem:[#allocation10 + $0x90] sm:$0xff]
    %v1186 = vld [vmem:[#allocation10 + $0x98] sm:$0xff]
    %v1187 = vld [vmem:[#allocation10 + $0xa0] sm:$0xff]
    %v1188 = vld [vmem:[#allocation10 + $0xa8] sm:$0xff]
    %v1189 = vld [vmem:[#allocation10 + $0xb0] sm:$0xff]
    %v1190 = vld [vmem:[#allocation10 + $0xb8] sm:$0xff]
    %v1191 = vld [vmem:[#allocation10 + $0xc0] sm:$0xff]
    %v1192 = vld [vmem:[#allocation10 + $0xc8] sm:$0xff]
    %v1193 = vld [vmem:[#allocation10 + $0xd0] sm:$0xff]
    %v1194 = vld [vmem:[#allocation10 + $0xd8] sm:$0xff]
    %v1195 = vld [vmem:[#allocation10 + $0xe0] sm:$0xff]
    %v1196 = vld [vmem:[#allocation10 + $0xe8] sm:$0xff]
    %v1197 = vld [vmem:[#allocation10 + $0xf0] sm:$0xff]
    %v1198 = vld [vmem:[#allocation10 + $0xf8] sm:$0xff]
    %v1199 = vld [vmem:[#allocation10 + $0x100] sm:$0xff]
    %v1200 = vld [vmem:[#allocation10 + $0x108] sm:$0xff]
    %v1201 = vld [vmem:[#allocation10 + $0x110] sm:$0xff]
    %v1202 = vld [vmem:[#allocation10 + $0x118] sm:$0xff]
    %v1203 = vld [vmem:[#allocation10 + $0x120] sm:$0xff]
    %v1204 = vld [vmem:[#allocation10 + $0x128] sm:$0xff]
    %v1205 = vld [vmem:[#allocation10 + $0x130] sm:$0xff]
    %v1206 = vld [vmem:[#allocation10 + $0x138] sm:$0xff]
    %v1207 = vld [vmem:[#allocation10 + $0x140] sm:$0xff]
    %v1208 = vld [vmem:[#allocation10 + $0x148] sm:$0xff]
    %v1209 = vld [vmem:[#allocation10 + $0x150] sm:$0xff]
    %v1210 = vld [vmem:[#allocation10 + $0x158] sm:$0xff]
    %v1211 = vld [vmem:[#allocation10 + $0x160] sm:$0xff]
    %v1212 = vld [vmem:[#allocation10 + $0x168] sm:$0xff]
    %v1213 = vld [vmem:[#allocation10 + $0x170] sm:$0xff]
    %v1214 = vld [vmem:[#allocation10 + $0x178] sm:$0xff]
    %v1215 = vld [vmem:[#allocation10 + $0x180] sm:$0xff]
    %v1216 = vld [vmem:[#allocation10 + $0x188] sm:$0xff]
    %v1217 = vld [vmem:[#allocation10 + $0x190] sm:$0xff]
    %v1218 = vld [vmem:[#allocation10 + $0x198] sm:$0xff]
    %v1219 = vld [vmem:[#allocation10 + $0x1a0] sm:$0xff]
    %v1220 = vld [vmem:[#allocation10 + $0x1a8] sm:$0xff]
    %v1221 = vld [vmem:[#allocation10 + $0x1b0] sm:$0xff]
    %v1222 = vld [vmem:[#allocation10 + $0x1b8] sm:$0xff]
    %v1223 = vld [vmem:[#allocation10 + $0x1c0] sm:$0xff]
    %v1224 = vld [vmem:[#allocation10 + $0x1c8] sm:$0xff]
    %v1225 = vld [vmem:[#allocation10 + $0x1d0] sm:$0xff]
    %v1226 = vld [vmem:[#allocation10 + $0x1d8] sm:$0xff]
    %v1227 = vld [vmem:[#allocation10 + $0x1e0] sm:$0xff]
    %v1228 = vld [vmem:[#allocation10 + $0x1e8] sm:$0xff]
    %v1229 = vld [vmem:[#allocation10 + $0x1f0] sm:$0xff]
    %v1230 = vld [vmem:[#allocation10 + $0x1f8] sm:$0xff]
    %1231 = vmatprep.subr.mxu0 0.0
    %1232 = vmatpush1.msra.mxu0 %v1167
    %1233 = vmatprep.subr.mxu0 0.0
    %1234 = vmatpush1.msra.mxu0 %v1168
    %1235 = vmatprep.subr.mxu0 0.0
    %1236 = vmatpush1.msra.mxu0 %v1169
    %1237 = vmatprep.subr.mxu0 0.0
    %1238 = vmatpush1.msra.mxu0 %v1170
    %1239 = vmatprep.subr.mxu0 0.0
    %1240 = vmatpush1.msra.mxu0 %v1171
    %1241 = vmatprep.subr.mxu0 0.0
    %1242 = vmatpush1.msra.mxu0 %v1172
    %1243 = vmatprep.subr.mxu0 0.0
    %1244 = vmatpush1.msra.mxu0 %v1173
    %1245 = vmatprep.subr.mxu0 0.0
    %1246 = vmatpush1.msra.mxu0 %v1174
    %1247 = vmatprep.subr.mxu0 0.0
    %1248 = vmatpush1.msra.mxu0 %v1175
    %1249 = vmatprep.subr.mxu0 0.0
    %1250 = vmatpush1.msra.mxu0 %v1176
    %1251 = vmatprep.subr.mxu0 0.0
    %1252 = vmatpush1.msra.mxu0 %v1177
    %1253 = vmatprep.subr.mxu0 0.0
    %1254 = vmatpush1.msra.mxu0 %v1178
    %1255 = vmatprep.subr.mxu0 0.0
    %1256 = vmatpush1.msra.mxu0 %v1179
    %1257 = vmatprep.subr.mxu0 0.0
    %1258 = vmatpush1.msra.mxu0 %v1180
    %1259 = vmatprep.subr.mxu0 0.0
    %1260 = vmatpush1.msra.mxu0 %v1181
    %1261 = vmatprep.subr.mxu0 0.0
    %1262 = vmatpush1.msra.mxu0 %v1182
    %1263 = vmatprep.subr.mxu0 0.0
    %1264 = vmatpush1.msra.mxu0 %v1183
    %1265 = vmatprep.subr.mxu0 0.0
    %1266 = vmatpush1.msra.mxu0 %v1184
    %1267 = vmatprep.subr.mxu0 0.0
    %1268 = vmatpush1.msra.mxu0 %v1185
    %1269 = vmatprep.subr.mxu0 0.0
    %1270 = vmatpush1.msra.mxu0 %v1186
    %1271 = vmatprep.subr.mxu0 0.0
    %1272 = vmatpush1.msra.mxu0 %v1187
    %1273 = vmatprep.subr.mxu0 0.0
    %1274 = vmatpush1.msra.mxu0 %v1188
    %1275 = vmatprep.subr.mxu0 0.0
    %1276 = vmatpush1.msra.mxu0 %v1189
    %1277 = vmatprep.subr.mxu0 0.0
    %1278 = vmatpush1.msra.mxu0 %v1190
    %1279 = vmatprep.subr.mxu0 0.0
    %1280 = vmatpush1.msra.mxu0 %v1191
    %1281 = vmatprep.subr.mxu0 0.0
    %1282 = vmatpush1.msra.mxu0 %v1192
    %1283 = vmatprep.subr.mxu0 0.0
    %1284 = vmatpush1.msra.mxu0 %v1193
    %1285 = vmatprep.subr.mxu0 0.0
    %1286 = vmatpush1.msra.mxu0 %v1194
    %1287 = vmatprep.subr.mxu0 0.0
    %1288 = vmatpush1.msra.mxu0 %v1195
    %1289 = vmatprep.subr.mxu0 0.0
    %1290 = vmatpush1.msra.mxu0 %v1196
    %1291 = vmatprep.subr.mxu0 0.0
    %1292 = vmatpush1.msra.mxu0 %v1197
    %1293 = vmatprep.subr.mxu0 0.0
    %1294 = vmatpush1.msra.mxu0 %v1198
    %1295 = vmatprep.mubr.f32.mxu0 %v1164
    %1296 = vmatmul.mubr.f32.gmra.mrb[0].mxu0 %v1163
    %v1297 = vpop.f32.mrb[0].mxu0
    %v1298 = vadd.f32 0.0, %v1297
    %v1299 = vpop.f32.mrb[0].mxu0
    %1300 = vdwg.mxu0
    %1301 = vmatprep.subr.mxu0 0.0
    %1302 = vmatpush1.msra.mxu0 %v1199
    %1303 = vmatprep.subr.mxu0 0.0
    %1304 = vmatpush1.msra.mxu0 %v1200
    %1305 = vmatprep.subr.mxu0 0.0
    %1306 = vmatpush1.msra.mxu0 %v1201
    %1307 = vmatprep.subr.mxu0 0.0
    %1308 = vmatpush1.msra.mxu0 %v1202
    %1309 = vmatprep.subr.mxu0 0.0
    %1310 = vmatpush1.msra.mxu0 %v1203
    %1311 = vmatprep.subr.mxu0 0.0
    %1312 = vmatpush1.msra.mxu0 %v1204
    %1313 = vmatprep.subr.mxu0 0.0
    %1314 = vmatpush1.msra.mxu0 %v1205
    %1315 = vmatprep.subr.mxu0 0.0
    %1316 = vmatpush1.msra.mxu0 %v1206
    %1317 = vmatprep.subr.mxu0 0.0
    %1318 = vmatpush1.msra.mxu0 %v1207
    %1319 = vmatprep.subr.mxu0 0.0
    %1320 = vmatpush1.msra.mxu0 %v1208
    %1321 = vmatprep.subr.mxu0 0.0
    %1322 = vmatpush1.msra.mxu0 %v1209
    %1323 = vmatprep.subr.mxu0 0.0
    %1324 = vmatpush1.msra.mxu0 %v1210
    %1325 = vmatprep.subr.mxu0 0.0
    %1326 = vmatpush1.msra.mxu0 %v1211
    %1327 = vmatprep.subr.mxu0 0.0
    %1328 = vmatpush1.msra.mxu0 %v1212
    %1329 = vmatprep.subr.mxu0 0.0
    %1330 = vmatpush1.msra.mxu0 %v1213
    %1331 = vmatprep.subr.mxu0 0.0
    %1332 = vmatpush1.msra.mxu0 %v1214
    %1333 = vmatprep.subr.mxu0 0.0
    %1334 = vmatpush1.msra.mxu0 %v1215
    %1335 = vmatprep.subr.mxu0 0.0
    %1336 = vmatpush1.msra.mxu0 %v1216
    %1337 = vmatprep.subr.mxu0 0.0
    %1338 = vmatpush1.msra.mxu0 %v1217
    %1339 = vmatprep.subr.mxu0 0.0
    %1340 = vmatpush1.msra.mxu0 %v1218
    %1341 = vmatprep.subr.mxu0 0.0
    %1342 = vmatpush1.msra.mxu0 %v1219
    %1343 = vmatprep.subr.mxu0 0.0
    %1344 = vmatpush1.msra.mxu0 %v1220
    %1345 = vmatprep.subr.mxu0 0.0
    %1346 = vmatpush1.msra.mxu0 %v1221
    %1347 = vmatprep.subr.mxu0 0.0
    %1348 = vmatpush1.msra.mxu0 %v1222
    %1349 = vmatprep.subr.mxu0 0.0
    %1350 = vmatpush1.msra.mxu0 %v1223
    %1351 = vmatprep.subr.mxu0 0.0
    %1352 = vmatpush1.msra.mxu0 %v1224
    %1353 = vmatprep.subr.mxu0 0.0
    %1354 = vmatpush1.msra.mxu0 %v1225
    %1355 = vmatprep.subr.mxu0 0.0
    %1356 = vmatpush1.msra.mxu0 %v1226
    %1357 = vmatprep.subr.mxu0 0.0
    %1358 = vmatpush1.msra.mxu0 %v1227
    %1359 = vmatprep.subr.mxu0 0.0
    %1360 = vmatpush1.msra.mxu0 %v1228
    %1361 = vmatprep.subr.mxu0 0.0
    %1362 = vmatpush1.msra.mxu0 %v1229
    %1363 = vmatprep.subr.mxu0 0.0
    %1364 = vmatpush1.msra.mxu0 %v1230
    %1365 = vmatprep.mubr.f32.mxu0 %v1166
    %1366 = vmatmul.mubr.f32.gmra.mrb[0].mxu0 %v1165
    %v1367 = vpop.f32.mrb[0].mxu0
    %v1368 = vadd.f32 %v1298, %v1367
    %v1369 = vpop.f32.mrb[0].mxu0
    %1370 = vdwg.mxu0
    %v1371 = vadd.f32 %v889, %v1368
    %v1372 = vld [vmem:[%s17] sm:$0x1]
    %v1374 = vlaneseq
    %v1375 = vshrl.u32 %v1374, 7
    %v1376 = vsub.s32 0, %v1375
    %v1377 = vrot.slane %v1372, %v1376
    %v1379 = vadd.f32 %v1371, %v1377
    %s1380 = scalar_lea.vmem %s6, 1
    %v1381 = vld [vmem:[%s1380] sm:$0x1]
    %s1382 = scalar_lea.vmem %s7, 1
    %v1383 = vld [vmem:[%s1382] sm:$0x1]
    %v1384 = vsel %vm451, %v1379, 0.0
    %1385 = vadd.xlane.f32.xlu0 %v1384
    %v1386 = vpop.xlane.xlu0 %1385
    %v1387 = vmul.f32 %v1386, %v455
    %v1388 = vsub.f32 %v1379, %v1387
    %v1389 = vmul.f32 %v1388, %v1388
    %v1390 = vsel %vm451, %v1389, 0.0
    %1391 = vadd.xlane.f32.xlu0 %v1390
    %v1392 = vpop.xlane.xlu0 %1391
    %v1393 = vmul.f32 %v1392, %v455
    %v1394 = vadd.f32 %v1393, 1e-05
    %v1395 = vrsqrt.pop %v1394
    %v1396 = vmul.f32 %v1388, %v1395
    %v1398 = vlaneseq
    %v1399 = vshrl.u32 %v1398, 7
    %v1400 = vsub.s32 0, %v1399
    %v1401 = vrot.slane %v1381, %v1400
    %v1403 = vmul.f32 %v1396, %v1401
    %v1405 = vlaneseq
    %v1406 = vshrl.u32 %v1405, 7
    %v1407 = vsub.s32 0, %v1406
    %v1408 = vrot.slane %v1383, %v1407
    %v1410 = vadd.f32 %v1403, %v1408
    %s1411 = scalar_lea.vmem [#allocation5], 384
    %v1412 = vld [vmem:[%s1411] sm:$0xff]
    %v1413 = vld [vmem:[%s1411 + $0x8] sm:$0xff]
    %v1414 = vld [vmem:[%s1411 + $0x10] sm:$0xff]
    %v1415 = vld [vmem:[%s1411 + $0x18] sm:$0xff]
    %v1416 = vld [vmem:[%s1411 + $0x20] sm:$0xff]
    %v1417 = vld [vmem:[%s1411 + $0x28] sm:$0xff]
    %v1418 = vld [vmem:[%s1411 + $0x30] sm:$0xff]
    %v1419 = vld [vmem:[%s1411 + $0x38] sm:$0xff]
    %v1420 = vld [vmem:[%s1411 + $0x40] sm:$0xff]
    %v1421 = vld [vmem:[%s1411 + $0x48] sm:$0xff]
    %v1422 = vld [vmem:[%s1411 + $0x50] sm:$0xff]
    %v1423 = vld [vmem:[%s1411 + $0x58] sm:$0xff]
    %v1424 = vld [vmem:[%s1411 + $0x60] sm:$0xff]
    %v1425 = vld [vmem:[%s1411 + $0x68] sm:$0xff]
    %v1426 = vld [vmem:[%s1411 + $0x70] sm:$0xff]
    %v1427 = vld [vmem:[%s1411 + $0x78] sm:$0xff]
    %v1428 = vld [vmem:[%s1411 + $0x80] sm:$0xff]
    %v1429 = vld [vmem:[%s1411 + $0x88] sm:$0xff]
    %v1430 = vld [vmem:[%s1411 + $0x90] sm:$0xff]
    %v1431 = vld [vmem:[%s1411 + $0x98] sm:$0xff]
    %v1432 = vld [vmem:[%s1411 + $0xa0] sm:$0xff]
    %v1433 = vld [vmem:[%s1411 + $0xa8] sm:$0xff]
    %v1434 = vld [vmem:[%s1411 + $0xb0] sm:$0xff]
    %v1435 = vld [vmem:[%s1411 + $0xb8] sm:$0xff]
    %v1436 = vld [vmem:[%s1411 + $0xc0] sm:$0xff]
    %v1437 = vld [vmem:[%s1411 + $0xc8] sm:$0xff]
    %v1438 = vld [vmem:[%s1411 + $0xd0] sm:$0xff]
    %v1439 = vld [vmem:[%s1411 + $0xd8] sm:$0xff]
    %v1440 = vld [vmem:[%s1411 + $0xe0] sm:$0xff]
    %v1441 = vld [vmem:[%s1411 + $0xe8] sm:$0xff]
    %v1442 = vld [vmem:[%s1411 + $0xf0] sm:$0xff]
    %v1443 = vld [vmem:[%s1411 + $0xf8] sm:$0xff]
    %v1444 = vld [vmem:[%s1411 + $0x100] sm:$0xff]
    %v1445 = vld [vmem:[%s1411 + $0x108] sm:$0xff]
    %v1446 = vld [vmem:[%s1411 + $0x110] sm:$0xff]
    %v1447 = vld [vmem:[%s1411 + $0x118] sm:$0xff]
    %v1448 = vld [vmem:[%s1411 + $0x120] sm:$0xff]
    %v1449 = vld [vmem:[%s1411 + $0x128] sm:$0xff]
    %v1450 = vld [vmem:[%s1411 + $0x130] sm:$0xff]
    %v1451 = vld [vmem:[%s1411 + $0x138] sm:$0xff]
    %v1452 = vld [vmem:[%s1411 + $0x140] sm:$0xff]
    %v1453 = vld [vmem:[%s1411 + $0x148] sm:$0xff]
    %v1454 = vld [vmem:[%s1411 + $0x150] sm:$0xff]
    %v1455 = vld [vmem:[%s1411 + $0x158] sm:$0xff]
    %v1456 = vld [vmem:[%s1411 + $0x160] sm:$0xff]
    %v1457 = vld [vmem:[%s1411 + $0x168] sm:$0xff]
    %v1458 = vld [vmem:[%s1411 + $0x170] sm:$0xff]
    %v1459 = vld [vmem:[%s1411 + $0x178] sm:$0xff]
    %s1460 = scalar_lea.vmem %s9, 3
    %v1461 = vld [vmem:[%s1460] sm:$0x7]
    %v1463 = vlaneseq
    %v1464 = vshrl.u32 %v1463, 7
    %v1465 = vsub.s32 0, %v1464
    %v1466 = vrot.slane %v1461, %v1465
    %v1467 = vlaneseq
    %v1468 = vshrl.u32 %v1467, 7
    %v1469 = vsub.s32 1, %v1468
    %v1470 = vrot.slane %v1461, %v1469
    %v1471 = vlaneseq
    %v1472 = vshrl.u32 %v1471, 7
    %v1473 = vsub.s32 2, %v1472
    %v1474 = vrot.slane %v1461, %v1473
    %1478 = vmatprep.subr.mxu0 %v1413
    %1479 = vmatpush1.msra.mxu0 %v1412
    %1480 = vmatprep.subr.mxu0 %v1416
    %1481 = vmatpush1.msra.mxu0 %v1415
    %1482 = vmatprep.subr.mxu0 %v1419
    %1483 = vmatpush1.msra.mxu0 %v1418
    %1484 = vmatprep.subr.mxu0 %v1422
    %1485 = vmatpush1.msra.mxu0 %v1421
    %1486 = vmatprep.subr.mxu0 %v1425
    %1487 = vmatpush1.msra.mxu0 %v1424
    %1488 = vmatprep.subr.mxu0 %v1428
    %1489 = vmatpush1.msra.mxu0 %v1427
    %1490 = vmatprep.subr.mxu0 %v1431
    %1491 = vmatpush1.msra.mxu0 %v1430
    %1492 = vmatprep.subr.mxu0 %v1434
    %1493 = vmatpush1.msra.mxu0 %v1433
    %1494 = vmatprep.subr.mxu0 %v1437
    %1495 = vmatpush1.msra.mxu0 %v1436
    %1496 = vmatprep.subr.mxu0 %v1440
    %1497 = vmatpush1.msra.mxu0 %v1439
    %1498 = vmatprep.subr.mxu0 %v1443
    %1499 = vmatpush1.msra.mxu0 %v1442
    %1500 = vmatprep.subr.mxu0 %v1446
    %1501 = vmatpush1.msra.mxu0 %v1445
    %1502 = vmatprep.subr.mxu0 %v1449
    %1503 = vmatpush1.msra.mxu0 %v1448
    %1504 = vmatprep.subr.mxu0 %v1452
    %1505 = vmatpush1.msra.mxu0 %v1451
    %1506 = vmatprep.subr.mxu0 %v1455
    %1507 = vmatpush1.msra.mxu0 %v1454
    %1508 = vmatprep.subr.mxu0 %v1458
    %1509 = vmatpush1.msra.mxu0 %v1457
    %1510 = vmatprep.subr.mxu0 0.0
    %1511 = vmatpush1.msra.mxu0 0.0
    %1512 = vmatprep.subr.mxu0 0.0
    %1513 = vmatpush1.msra.mxu0 0.0
    %1514 = vmatprep.subr.mxu0 0.0
    %1515 = vmatpush1.msra.mxu0 0.0
    %1516 = vmatprep.subr.mxu0 0.0
    %1517 = vmatpush1.msra.mxu0 0.0
    %1518 = vmatprep.subr.mxu0 0.0
    %1519 = vmatpush1.msra.mxu0 0.0
    %1520 = vmatprep.subr.mxu0 0.0
    %1521 = vmatpush1.msra.mxu0 0.0
    %1522 = vmatprep.subr.mxu0 0.0
    %1523 = vmatpush1.msra.mxu0 0.0
    %1524 = vmatprep.subr.mxu0 0.0
    %1525 = vmatpush1.msra.mxu0 0.0
    %1526 = vmatprep.subr.mxu0 0.0
    %1527 = vmatpush1.msra.mxu0 0.0
    %1528 = vmatprep.subr.mxu0 0.0
    %1529 = vmatpush1.msra.mxu0 0.0
    %1530 = vmatprep.subr.mxu0 0.0
    %1531 = vmatpush1.msra.mxu0 0.0
    %1532 = vmatprep.subr.mxu0 0.0
    %1533 = vmatpush1.msra.mxu0 0.0
    %1534 = vmatprep.subr.mxu0 0.0
    %1535 = vmatpush1.msra.mxu0 0.0
    %1536 = vmatprep.subr.mxu0 0.0
    %1537 = vmatpush1.msra.mxu0 0.0
    %1538 = vmatprep.subr.mxu0 0.0
    %1539 = vmatpush1.msra.mxu0 0.0
    %1540 = vmatprep.subr.mxu0 0.0
    %1541 = vmatpush1.msra.mxu0 0.0
    %1542 = vmatprep.mubr.f32.mxu0 0.0
    %1543 = vmatmul.mubr.f32.gmra.mrb[0].mxu0 %v1410
    %v1544 = vpop.f32.mrb[0].mxu0
    %v1545 = vadd.f32 %v1466, %v1544
    %v1546 = vpop.f32.mrb[0].mxu0
    %v1547 = vadd.f32 %v1470, %v1546
    %1548 = vdwg.mxu0
    %1549 = vmatprep.subr.mxu0 0.0
    %1550 = vmatpush1.msra.mxu0 %v1414
    %1551 = vmatprep.subr.mxu0 0.0
    %1552 = vmatpush1.msra.mxu0 %v1417
    %1553 = vmatprep.subr.mxu0 0.0
    %1554 = vmatpush1.msra.mxu0 %v1420
    %1555 = vmatprep.subr.mxu0 0.0
    %1556 = vmatpush1.msra.mxu0 %v1423
    %1557 = vmatprep.subr.mxu0 0.0
    %1558 = vmatpush1.msra.mxu0 %v1426
    %1559 = vmatprep.subr.mxu0 0.0
    %1560 = vmatpush1.msra.mxu0 %v1429
    %1561 = vmatprep.subr.mxu0 0.0
    %1562 = vmatpush1.msra.mxu0 %v1432
    %1563 = vmatprep.subr.mxu0 0.0
    %1564 = vmatpush1.msra.mxu0 %v1435
    %1565 = vmatprep.subr.mxu0 0.0
    %1566 = vmatpush1.msra.mxu0 %v1438
    %1567 = vmatprep.subr.mxu0 0.0
    %1568 = vmatpush1.msra.mxu0 %v1441
    %1569 = vmatprep.subr.mxu0 0.0
    %1570 = vmatpush1.msra.mxu0 %v1444
    %1571 = vmatprep.subr.mxu0 0.0
    %1572 = vmatpush1.msra.mxu0 %v1447
    %1573 = vmatprep.subr.mxu0 0.0
    %1574 = vmatpush1.msra.mxu0 %v1450
    %1575 = vmatprep.subr.mxu0 0.0
    %1576 = vmatpush1.msra.mxu0 %v1453
    %1577 = vmatprep.subr.mxu0 0.0
    %1578 = vmatpush1.msra.mxu0 %v1456
    %1579 = vmatprep.subr.mxu0 0.0
    %1580 = vmatpush1.msra.mxu0 %v1459
    %1581 = vmatprep.subr.mxu0 0.0
    %1582 = vmatpush1.msra.mxu0 0.0
    %1583 = vmatprep.subr.mxu0 0.0
    %1584 = vmatpush1.msra.mxu0 0.0
    %1585 = vmatprep.subr.mxu0 0.0
    %1586 = vmatpush1.msra.mxu0 0.0
    %1587 = vmatprep.subr.mxu0 0.0
    %1588 = vmatpush1.msra.mxu0 0.0
    %1589 = vmatprep.subr.mxu0 0.0
    %1590 = vmatpush1.msra.mxu0 0.0
    %1591 = vmatprep.subr.mxu0 0.0
    %1592 = vmatpush1.msra.mxu0 0.0
    %1593 = vmatprep.subr.mxu0 0.0
    %1594 = vmatpush1.msra.mxu0 0.0
    %1595 = vmatprep.subr.mxu0 0.0
    %1596 = vmatpush1.msra.mxu0 0.0
    %1597 = vmatprep.subr.mxu0 0.0
    %1598 = vmatpush1.msra.mxu0 0.0
    %1599 = vmatprep.subr.mxu0 0.0
    %1600 = vmatpush1.msra.mxu0 0.0
    %1601 = vmatprep.subr.mxu0 0.0
    %1602 = vmatpush1.msra.mxu0 0.0
    %1603 = vmatprep.subr.mxu0 0.0
    %1604 = vmatpush1.msra.mxu0 0.0
    %1605 = vmatprep.subr.mxu0 0.0
    %1606 = vmatpush1.msra.mxu0 0.0
    %1607 = vmatprep.subr.mxu0 0.0
    %1608 = vmatpush1.msra.mxu0 0.0
    %1609 = vmatprep.subr.mxu0 0.0
    %1610 = vmatpush1.msra.mxu0 0.0
    %1611 = vmatprep.subr.mxu0 0.0
    %1612 = vmatpush1.msra.mxu0 0.0
    %1613 = vmatprep.mubr.f32.mxu0 0.0
    %1614 = vmatmul.mubr.f32.gmra.mrb[0].mxu0 %v1410
    %v1615 = vpop.f32.mrb[0].mxu0
    %v1616 = vadd.f32 %v1474, %v1615
    %v1617 = vpop.f32.mrb[0].mxu0
    %1618 = vdwg.mxu0
    %v1619 = vmul.f32 %v1545, %v1547
    %v1620 = vsel %vm445, %v1619, 0.0
    %1621 = vadd.xlane.f32.xlu0 %v1620
    %v1622 = vpop.xlane.xlu0 %1621
    %v1624 = vrot.slane %v1547, 2
    %v1626 = vmul.f32 %v1545, %v1624
    %v1627 = vsel %vm445, %v1626, 0.0
    %1628 = vadd.xlane.f32.xlu0 %v1627
    %v1629 = vpop.xlane.xlu0 %1628
    %v1630 = vrot.slane %v1547, 4
    %v1632 = vmul.f32 %v1545, %v1630
    %v1633 = vsel %vm445, %v1632, 0.0
    %1634 = vadd.xlane.f32.xlu0 %v1633
    %v1635 = vpop.xlane.xlu0 %1634
    %v1636 = vmax.f32 %v1622, %v1629
    %v1637 = vmax.f32 %v1636, %v1635
    %v1638 = vsub.f32 %v1622, %v1637
    %v1639 = vmul.f32 %v1638, 1.442695
    %v1640 = vpow.pop %v1639
    %v1641 = vsub.f32 %v1629, %v1637
    %v1642 = vmul.f32 %v1641, 1.442695
    %v1643 = vpow.pop %v1642
    %v1644 = vsub.f32 %v1635, %v1637
    %v1645 = vmul.f32 %v1644, 1.442695
    %v1646 = vpow.pop %v1645
    %v1647 = vadd.f32 %v1640, %v1643
    %v1648 = vadd.f32 %v1647, %v1646
    %v1649 = vrcp.pop %v1648
    %v1650 = vmul.f32 %v1640, %v1616
    %v1652 = vrot.slane %v1616, 2
    %v1654 = vmul.f32 %v1643, %v1652
    %v1655 = vadd.f32 %v1650, %v1654
    %v1656 = vrot.slane %v1616, 4
    %v1658 = vmul.f32 %v1646, %v1656
    %v1659 = vadd.f32 %v1655, %v1658
    %v1660 = vmul.f32 %v1659, %v1649
    %v1661 = vrot.slane %v1547, 6
    %v1663 = vmul.f32 %v1545, %v1661
    %v1664 = vsel %vm731, %v1663, 0.0
    %1665 = vadd.xlane.f32.xlu0 %v1664
    %v1666 = vpop.xlane.xlu0 %1665
    %v1667 = vsel %vm731, %v1619, 0.0
    %1668 = vadd.xlane.f32.xlu0 %v1667
    %v1669 = vpop.xlane.xlu0 %1668
    %v1670 = vsel %vm731, %v1626, 0.0
    %1671 = vadd.xlane.f32.xlu0 %v1670
    %v1672 = vpop.xlane.xlu0 %1671
    %v1673 = vmax.f32 %v1666, %v1669
    %v1674 = vmax.f32 %v1673, %v1672
    %v1675 = vsub.f32 %v1666, %v1674
    %v1676 = vmul.f32 %v1675, 1.442695
    %v1677 = vpow.pop %v1676
    %v1678 = vsub.f32 %v1669, %v1674
    %v1679 = vmul.f32 %v1678, 1.442695
    %v1680 = vpow.pop %v1679
    %v1681 = vsub.f32 %v1672, %v1674
    %v1682 = vmul.f32 %v1681, 1.442695
    %v1683 = vpow.pop %v1682
    %v1684 = vadd.f32 %v1677, %v1680
    %v1685 = vadd.f32 %v1684, %v1683
    %v1686 = vrcp.pop %v1685
    %v1687 = vrot.slane %v1616, 6
    %v1689 = vmul.f32 %v1677, %v1687
    %v1690 = vmul.f32 %v1680, %v1616
    %v1691 = vadd.f32 %v1689, %v1690
    %v1692 = vmul.f32 %v1683, %v1652
    %v1693 = vadd.f32 %v1691, %v1692
    %v1694 = vmul.f32 %v1693, %v1686
    %v1695 = vsel %vm763, %v1632, 0.0
    %1696 = vadd.xlane.f32.xlu0 %v1695
    %v1697 = vpop.xlane.xlu0 %1696
    %v1698 = vsel %vm763, %v1663, 0.0
    %1699 = vadd.xlane.f32.xlu0 %v1698
    %v1700 = vpop.xlane.xlu0 %1699
    %v1701 = vsel %vm763, %v1619, 0.0
    %1702 = vadd.xlane.f32.xlu0 %v1701
    %v1703 = vpop.xlane.xlu0 %1702
    %v1704 = vmax.f32 %v1697, %v1700
    %v1705 = vmax.f32 %v1704, %v1703
    %v1706 = vsub.f32 %v1697, %v1705
    %v1707 = vmul.f32 %v1706, 1.442695
    %v1708 = vpow.pop %v1707
    %v1709 = vsub.f32 %v1700, %v1705
    %v1710 = vmul.f32 %v1709, 1.442695
    %v1711 = vpow.pop %v1710
    %v1712 = vsub.f32 %v1703, %v1705
    %v1713 = vmul.f32 %v1712, 1.442695
    %v1714 = vpow.pop %v1713
    %v1715 = vadd.f32 %v1708, %v1711
    %v1716 = vadd.f32 %v1715, %v1714
    %v1717 = vrcp.pop %v1716
    %v1718 = vmul.f32 %v1708, %v1656
    %v1719 = vmul.f32 %v1711, %v1687
    %v1720 = vadd.f32 %v1718, %v1719
    %v1721 = vmul.f32 %v1714, %v1616
    %v1722 = vadd.f32 %v1720, %v1721
    %v1723 = vmul.f32 %v1722, %v1717
    %v1724 = vsel %vm445, %v1660, %v1694
    %v1725 = vsel %vm447, %v1724, %v1723
    %s1726 = scalar_lea.vmem [#allocation7], 128
    %v1727 = vld [vmem:[%s1726] sm:$0xff]
    %v1728 = vld [vmem:[%s1726 + $0x8] sm:$0xff]
    %v1729 = vld [vmem:[%s1726 + $0x10] sm:$0xff]
    %v1730 = vld [vmem:[%s1726 + $0x18] sm:$0xff]
    %v1731 = vld [vmem:[%s1726 + $0x20] sm:$0xff]
    %v1732 = vld [vmem:[%s1726 + $0x28] sm:$0xff]
    %v1733 = vld [vmem:[%s1726 + $0x30] sm:$0xff]
    %v1734 = vld [vmem:[%s1726 + $0x38] sm:$0xff]
    %v1735 = vld [vmem:[%s1726 + $0x40] sm:$0xff]
    %v1736 = vld [vmem:[%s1726 + $0x48] sm:$0xff]
    %v1737 = vld [vmem:[%s1726 + $0x50] sm:$0xff]
    %v1738 = vld [vmem:[%s1726 + $0x58] sm:$0xff]
    %v1739 = vld [vmem:[%s1726 + $0x60] sm:$0xff]
    %v1740 = vld [vmem:[%s1726 + $0x68] sm:$0xff]
    %v1741 = vld [vmem:[%s1726 + $0x70] sm:$0xff]
    %v1742 = vld [vmem:[%s1726 + $0x78] sm:$0xff]
    %1743 = vmatprep.subr.mxu0 0.0
    %1744 = vmatpush1.msra.mxu0 %v1727
    %1745 = vmatprep.subr.mxu0 0.0
    %1746 = vmatpush1.msra.mxu0 %v1728
    %1747 = vmatprep.subr.mxu0 0.0
    %1748 = vmatpush1.msra.mxu0 %v1729
    %1749 = vmatprep.subr.mxu0 0.0
    %1750 = vmatpush1.msra.mxu0 %v1730
    %1751 = vmatprep.subr.mxu0 0.0
    %1752 = vmatpush1.msra.mxu0 %v1731
    %1753 = vmatprep.subr.mxu0 0.0
    %1754 = vmatpush1.msra.mxu0 %v1732
    %1755 = vmatprep.subr.mxu0 0.0
    %1756 = vmatpush1.msra.mxu0 %v1733
    %1757 = vmatprep.subr.mxu0 0.0
    %1758 = vmatpush1.msra.mxu0 %v1734
    %1759 = vmatprep.subr.mxu0 0.0
    %1760 = vmatpush1.msra.mxu0 %v1735
    %1761 = vmatprep.subr.mxu0 0.0
    %1762 = vmatpush1.msra.mxu0 %v1736
    %1763 = vmatprep.subr.mxu0 0.0
    %1764 = vmatpush1.msra.mxu0 %v1737
    %1765 = vmatprep.subr.mxu0 0.0
    %1766 = vmatpush1.msra.mxu0 %v1738
    %1767 = vmatprep.subr.mxu0 0.0
    %1768 = vmatpush1.msra.mxu0 %v1739
    %1769 = vmatprep.subr.mxu0 0.0
    %1770 = vmatpush1.msra.mxu0 %v1740
    %1771 = vmatprep.subr.mxu0 0.0
    %1772 = vmatpush1.msra.mxu0 %v1741
    %1773 = vmatprep.subr.mxu0 0.0
    %1774 = vmatpush1.msra.mxu0 %v1742
    %1775 = vmatprep.subr.mxu0 0.0
    %1776 = vmatpush1.msra.mxu0 0.0
    %1777 = vmatprep.subr.mxu0 0.0
    %1778 = vmatpush1.msra.mxu0 0.0
    %1779 = vmatprep.subr.mxu0 0.0
    %1780 = vmatpush1.msra.mxu0 0.0
    %1781 = vmatprep.subr.mxu0 0.0
    %1782 = vmatpush1.msra.mxu0 0.0
    %1783 = vmatprep.subr.mxu0 0.0
    %1784 = vmatpush1.msra.mxu0 0.0
    %1785 = vmatprep.subr.mxu0 0.0
    %1786 = vmatpush1.msra.mxu0 0.0
    %1787 = vmatprep.subr.mxu0 0.0
    %1788 = vmatpush1.msra.mxu0 0.0
    %1789 = vmatprep.subr.mxu0 0.0
    %1790 = vmatpush1.msra.mxu0 0.0
    %1791 = vmatprep.subr.mxu0 0.0
    %1792 = vmatpush1.msra.mxu0 0.0
    %1793 = vmatprep.subr.mxu0 0.0
    %1794 = vmatpush1.msra.mxu0 0.0
    %1795 = vmatprep.subr.mxu0 0.0
    %1796 = vmatpush1.msra.mxu0 0.0
    %1797 = vmatprep.subr.mxu0 0.0
    %1798 = vmatpush1.msra.mxu0 0.0
    %1799 = vmatprep.subr.mxu0 0.0
    %1800 = vmatpush1.msra.mxu0 0.0
    %1801 = vmatprep.subr.mxu0 0.0
    %1802 = vmatpush1.msra.mxu0 0.0
    %1803 = vmatprep.subr.mxu0 0.0
    %1804 = vmatpush1.msra.mxu0 0.0
    %1805 = vmatprep.subr.mxu0 0.0
    %1806 = vmatpush1.msra.mxu0 0.0
    %1807 = vmatprep.mubr.f32.mxu0 0.0
    %1808 = vmatmul.mubr.f32.gmra.mrb[0].mxu0 %v1725
    %v1809 = vpop.f32.mrb[0].mxu0
    %v1810 = vadd.f32 0.0, %v1809
    %v1811 = vpop.f32.mrb[0].mxu0
    %1812 = vdwg.mxu0
    %v1813 = vadd.f32 %v1379, %v1810
    %s1814 = scalar_lea.vmem %s11, 1
    %v1815 = vld [vmem:[%s1814] sm:$0x1]
    %v1817 = vlaneseq
    %v1818 = vshrl.u32 %v1817, 7
    %v1819 = vsub.s32 0, %v1818
    %v1820 = vrot.slane %v1815, %v1819
    %v1822 = vadd.f32 %v1813, %v1820
    %s1823 = scalar_lea.vmem %s12, 1
    %v1824 = vld [vmem:[%s1823] sm:$0x1]
    %s1825 = scalar_lea.vmem %s13, 1
    %v1826 = vld [vmem:[%s1825] sm:$0x1]
    %v1827 = vsel %vm451, %v1822, 0.0
    %1828 = vadd.xlane.f32.xlu0 %v1827
    %v1829 = vpop.xlane.xlu0 %1828
    %v1830 = vmul.f32 %v1829, %v455
    %v1831 = vsub.f32 %v1822, %v1830
    %v1832 = vmul.f32 %v1831, %v1831
    %v1833 = vsel %vm451, %v1832, 0.0
    %1834 = vadd.xlane.f32.xlu0 %v1833
    %v1835 = vpop.xlane.xlu0 %1834
    %v1836 = vmul.f32 %v1835, %v455
    %v1837 = vadd.f32 %v1836, 1e-05
    %v1838 = vrsqrt.pop %v1837
    %v1839 = vmul.f32 %v1831, %v1838
    %v1841 = vlaneseq
    %v1842 = vshrl.u32 %v1841, 7
    %v1843 = vsub.s32 0, %v1842
    %v1844 = vrot.slane %v1824, %v1843
    %v1846 = vmul.f32 %v1839, %v1844
    %v1848 = vlaneseq
    %v1849 = vshrl.u32 %v1848, 7
    %v1850 = vsub.s32 0, %v1849
    %v1851 = vrot.slane %v1826, %v1850
    %v1853 = vadd.f32 %v1846, %v1851
    %s1854 = scalar_lea.vmem [#allocation8], 512
    %v1855 = vld [vmem:[%s1854] sm:$0xff]
    %v1856 = vld [vmem:[%s1854 + $0x8] sm:$0xff]
    %v1857 = vld [vmem:[%s1854 + $0x10] sm:$0xff]
    %v1858 = vld [vmem:[%s1854 + $0x18] sm:$0xff]
    %v1859 = vld [vmem:[%s1854 + $0x20] sm:$0xff]
    %v1860 = vld [vmem:[%s1854 + $0x28] sm:$0xff]
    %v1861 = vld [vmem:[%s1854 + $0x30] sm:$0xff]
    %v1862 = vld [vmem:[%s1854 + $0x38] sm:$0xff]
    %v1863 = vld [vmem:[%s1854 + $0x40] sm:$0xff]
    %v1864 = vld [vmem:[%s1854 + $0x48] sm:$0xff]
    %v1865 = vld [vmem:[%s1854 + $0x50] sm:$0xff]
    %v1866 = vld [vmem:[%s1854 + $0x58] sm:$0xff]
    %v1867 = vld [vmem:[%s1854 + $0x60] sm:$0xff]
    %v1868 = vld [vmem:[%s1854 + $0x68] sm:$0xff]
    %v1869 = vld [vmem:[%s1854 + $0x70] sm:$0xff]
    %v1870 = vld [vmem:[%s1854 + $0x78] sm:$0xff]
    %v1871 = vld [vmem:[%s1854 + $0x80] sm:$0xff]
    %v1872 = vld [vmem:[%s1854 + $0x88] sm:$0xff]
    %v1873 = vld [vmem:[%s1854 + $0x90] sm:$0xff]
    %v1874 = vld [vmem:[%s1854 + $0x98] sm:$0xff]
    %v1875 = vld [vmem:[%s1854 + $0xa0] sm:$0xff]
    %v1876 = vld [vmem:[%s1854 + $0xa8] sm:$0xff]
    %v1877 = vld [vmem:[%s1854 + $0xb0] sm:$0xff]
    %v1878 = vld [vmem:[%s1854 + $0xb8] sm:$0xff]
    %v1879 = vld [vmem:[%s1854 + $0xc0] sm:$0xff]
    %v1880 = vld [vmem:[%s1854 + $0xc8] sm:$0xff]
    %v1881 = vld [vmem:[%s1854 + $0xd0] sm:$0xff]
    %v1882 = vld [vmem:[%s1854 + $0xd8] sm:$0xff]
    %v1883 = vld [vmem:[%s1854 + $0xe0] sm:$0xff]
    %v1884 = vld [vmem:[%s1854 + $0xe8] sm:$0xff]
    %v1885 = vld [vmem:[%s1854 + $0xf0] sm:$0xff]
    %v1886 = vld [vmem:[%s1854 + $0xf8] sm:$0xff]
    %v1887 = vld [vmem:[%s1854 + $0x100] sm:$0xff]
    %v1888 = vld [vmem:[%s1854 + $0x108] sm:$0xff]
    %v1889 = vld [vmem:[%s1854 + $0x110] sm:$0xff]
    %v1890 = vld [vmem:[%s1854 + $0x118] sm:$0xff]
    %v1891 = vld [vmem:[%s1854 + $0x120] sm:$0xff]
    %v1892 = vld [vmem:[%s1854 + $0x128] sm:$0xff]
    %v1893 = vld [vmem:[%s1854 + $0x130] sm:$0xff]
    %v1894 = vld [vmem:[%s1854 + $0x138] sm:$0xff]
    %v1895 = vld [vmem:[%s1854 + $0x140] sm:$0xff]
    %v1896 = vld [vmem:[%s1854 + $0x148] sm:$0xff]
    %v1897 = vld [vmem:[%s1854 + $0x150] sm:$0xff]
    %v1898 = vld [vmem:[%s1854 + $0x158] sm:$0xff]
    %v1899 = vld [vmem:[%s1854 + $0x160] sm:$0xff]
    %v1900 = vld [vmem:[%s1854 + $0x168] sm:$0xff]
    %v1901 = vld [vmem:[%s1854 + $0x170] sm:$0xff]
    %v1902 = vld [vmem:[%s1854 + $0x178] sm:$0xff]
    %v1903 = vld [vmem:[%s1854 + $0x180] sm:$0xff]
    %v1904 = vld [vmem:[%s1854 + $0x188] sm:$0xff]
    %v1905 = vld [vmem:[%s1854 + $0x190] sm:$0xff]
    %v1906 = vld [vmem:[%s1854 + $0x198] sm:$0xff]
    %v1907 = vld [vmem:[%s1854 + $0x1a0] sm:$0xff]
    %v1908 = vld [vmem:[%s1854 + $0x1a8] sm:$0xff]
    %v1909 = vld [vmem:[%s1854 + $0x1b0] sm:$0xff]
    %v1910 = vld [vmem:[%s1854 + $0x1b8] sm:$0xff]
    %v1911 = vld [vmem:[%s1854 + $0x1c0] sm:$0xff]
    %v1912 = vld [vmem:[%s1854 + $0x1c8] sm:$0xff]
    %v1913 = vld [vmem:[%s1854 + $0x1d0] sm:$0xff]
    %v1914 = vld [vmem:[%s1854 + $0x1d8] sm:$0xff]
    %v1915 = vld [vmem:[%s1854 + $0x1e0] sm:$0xff]
    %v1916 = vld [vmem:[%s1854 + $0x1e8] sm:$0xff]
    %v1917 = vld [vmem:[%s1854 + $0x1f0] sm:$0xff]
    %v1918 = vld [vmem:[%s1854 + $0x1f8] sm:$0xff]
    %s1919 = scalar_lea.vmem %s15, 4
    %v1920 = vld [vmem:[%s1919] sm:$0xf]
    %v1922 = vlaneseq
    %v1923 = vshrl.u32 %v1922, 7
    %v1924 = vsub.s32 0, %v1923
    %v1925 = vrot.slane %v1920, %v1924
    %v1926 = vlaneseq
    %v1927 = vshrl.u32 %v1926, 7
    %v1928 = vsub.s32 1, %v1927
    %v1929 = vrot.slane %v1920, %v1928
    %v1930 = vlaneseq
    %v1931 = vshrl.u32 %v1930, 7
    %v1932 = vsub.s32 2, %v1931
    %v1933 = vrot.slane %v1920, %v1932
    %v1934 = vlaneseq
    %v1935 = vshrl.u32 %v1934, 7
    %v1936 = vsub.s32 3, %v1935
    %v1937 = vrot.slane %v1920, %v1936
    %1942 = vmatprep.subr.mxu0 %v1856
    %1943 = vmatpush1.msra.mxu0 %v1855
    %1944 = vmatprep.subr.mxu0 %v1860
    %1945 = vmatpush1.msra.mxu0 %v1859
    %1946 = vmatprep.subr.mxu0 %v1864
    %1947 = vmatpush1.msra.mxu0 %v1863
    %1948 = vmatprep.subr.mxu0 %v1868
    %1949 = vmatpush1.msra.mxu0 %v1867
    %1950 = vmatprep.subr.mxu0 %v1872
    %1951 = vmatpush1.msra.mxu0 %v1871
    %1952 = vmatprep.subr.mxu0 %v1876
    %1953 = vmatpush1.msra.mxu0 %v1875
    %1954 = vmatprep.subr.mxu0 %v1880
    %1955 = vmatpush1.msra.mxu0 %v1879
    %1956 = vmatprep.subr.mxu0 %v1884
    %1957 = vmatpush1.msra.mxu0 %v1883
    %1958 = vmatprep.subr.mxu0 %v1888
    %1959 = vmatpush1.msra.mxu0 %v1887
    %1960 = vmatprep.subr.mxu0 %v1892
    %1961 = vmatpush1.msra.mxu0 %v1891
    %1962 = vmatprep.subr.mxu0 %v1896
    %1963 = vmatpush1.msra.mxu0 %v1895
    %1964 = vmatprep.subr.mxu0 %v1900
    %1965 = vmatpush1.msra.mxu0 %v1899
    %1966 = vmatprep.subr.mxu0 %v1904
    %1967 = vmatpush1.msra.mxu0 %v1903
    %1968 = vmatprep.subr.mxu0 %v1908
    %1969 = vmatpush1.msra.mxu0 %v1907
    %1970 = vmatprep.subr.mxu0 %v1912
    %1971 = vmatpush1.msra.mxu0 %v1911
    %1972 = vmatprep.subr.mxu0 %v1916
    %1973 = vmatpush1.msra.mxu0 %v1915
    %1974 = vmatprep.subr.mxu0 0.0
    %1975 = vmatpush1.msra.mxu0 0.0
    %1976 = vmatprep.subr.mxu0 0.0
    %1977 = vmatpush1.msra.mxu0 0.0
    %1978 = vmatprep.subr.mxu0 0.0
    %1979 = vmatpush1.msra.mxu0 0.0
    %1980 = vmatprep.subr.mxu0 0.0
    %1981 = vmatpush1.msra.mxu0 0.0
    %1982 = vmatprep.subr.mxu0 0.0
    %1983 = vmatpush1.msra.mxu0 0.0
    %1984 = vmatprep.subr.mxu0 0.0
    %1985 = vmatpush1.msra.mxu0 0.0
    %1986 = vmatprep.subr.mxu0 0.0
    %1987 = vmatpush1.msra.mxu0 0.0
    %1988 = vmatprep.subr.mxu0 0.0
    %1989 = vmatpush1.msra.mxu0 0.0
    %1990 = vmatprep.subr.mxu0 0.0
    %1991 = vmatpush1.msra.mxu0 0.0
    %1992 = vmatprep.subr.mxu0 0.0
    %1993 = vmatpush1.msra.mxu0 0.0
    %1994 = vmatprep.subr.mxu0 0.0
    %1995 = vmatpush1.msra.mxu0 0.0
    %1996 = vmatprep.subr.mxu0 0.0
    %1997 = vmatpush1.msra.mxu0 0.0
    %1998 = vmatprep.subr.mxu0 0.0
    %1999 = vmatpush1.msra.mxu0 0.0
    %2000 = vmatprep.subr.mxu0 0.0
    %2001 = vmatpush1.msra.mxu0 0.0
    %2002 = vmatprep.subr.mxu0 0.0
    %2003 = vmatpush1.msra.mxu0 0.0
    %2004 = vmatprep.subr.mxu0 0.0
    %2005 = vmatpush1.msra.mxu0 0.0
    %2006 = vmatprep.mubr.f32.mxu0 0.0
    %2007 = vmatmul.mubr.f32.gmra.mrb[0].mxu0 %v1853
    %v2008 = vpop.f32.mrb[0].mxu0
    %v2009 = vadd.f32 %v1925, %v2008
    %v2010 = vpop.f32.mrb[0].mxu0
    %v2011 = vadd.f32 %v1929, %v2010
    %2012 = vdwg.mxu0
    %2013 = vmatprep.subr.mxu0 %v1858
    %2014 = vmatpush1.msra.mxu0 %v1857
    %2015 = vmatprep.subr.mxu0 %v1862
    %2016 = vmatpush1.msra.mxu0 %v1861
    %2017 = vmatprep.subr.mxu0 %v1866
    %2018 = vmatpush1.msra.mxu0 %v1865
    %2019 = vmatprep.subr.mxu0 %v1870
    %2020 = vmatpush1.msra.mxu0 %v1869
    %2021 = vmatprep.subr.mxu0 %v1874
    %2022 = vmatpush1.msra.mxu0 %v1873
    %2023 = vmatprep.subr.mxu0 %v1878
    %2024 = vmatpush1.msra.mxu0 %v1877
    %2025 = vmatprep.subr.mxu0 %v1882
    %2026 = vmatpush1.msra.mxu0 %v1881
    %2027 = vmatprep.subr.mxu0 %v1886
    %2028 = vmatpush1.msra.mxu0 %v1885
    %2029 = vmatprep.subr.mxu0 %v1890
    %2030 = vmatpush1.msra.mxu0 %v1889
    %2031 = vmatprep.subr.mxu0 %v1894
    %2032 = vmatpush1.msra.mxu0 %v1893
    %2033 = vmatprep.subr.mxu0 %v1898
    %2034 = vmatpush1.msra.mxu0 %v1897
    %2035 = vmatprep.subr.mxu0 %v1902
    %2036 = vmatpush1.msra.mxu0 %v1901
    %2037 = vmatprep.subr.mxu0 %v1906
    %2038 = vmatpush1.msra.mxu0 %v1905
    %2039 = vmatprep.subr.mxu0 %v1910
    %2040 = vmatpush1.msra.mxu0 %v1909
    %2041 = vmatprep.subr.mxu0 %v1914
    %2042 = vmatpush1.msra.mxu0 %v1913
    %2043 = vmatprep.subr.mxu0 %v1918
    %2044 = vmatpush1.msra.mxu0 %v1917
    %2045 = vmatprep.subr.mxu0 0.0
    %2046 = vmatpush1.msra.mxu0 0.0
    %2047 = vmatprep.subr.mxu0 0.0
    %2048 = vmatpush1.msra.mxu0 0.0
    %2049 = vmatprep.subr.mxu0 0.0
    %2050 = vmatpush1.msra.mxu0 0.0
    %2051 = vmatprep.subr.mxu0 0.0
    %2052 = vmatpush1.msra.mxu0 0.0
    %2053 = vmatprep.subr.mxu0 0.0
    %2054 = vmatpush1.msra.mxu0 0.0
    %2055 = vmatprep.subr.mxu0 0.0
    %2056 = vmatpush1.msra.mxu0 0.0
    %2057 = vmatprep.subr.mxu0 0.0
    %2058 = vmatpush1.msra.mxu0 0.0
    %2059 = vmatprep.subr.mxu0 0.0
    %2060 = vmatpush1.msra.mxu0 0.0
    %2061 = vmatprep.subr.mxu0 0.0
    %2062 = vmatpush1.msra.mxu0 0.0
    %2063 = vmatprep.subr.mxu0 0.0
    %2064 = vmatpush1.msra.mxu0 0.0
    %2065 = vmatprep.subr.mxu0 0.0
    %2066 = vmatpush1.msra.mxu0 0.0
    %2067 = vmatprep.subr.mxu0 0.0
    %2068 = vmatpush1.msra.mxu0 0.0
    %2069 = vmatprep.subr.mxu0 0.0
    %2070 = vmatpush1.msra.mxu0 0.0
    %2071 = vmatprep.subr.mxu0 0.0
    %2072 = vmatpush1.msra.mxu0 0.0
    %2073 = vmatprep.subr.mxu0 0.0
    %2074 = vmatpush1.msra.mxu0 0.0
    %2075 = vmatprep.subr.mxu0 0.0
    %2076 = vmatpush1.msra.mxu0 0.0
    %2077 = vmatprep.mubr.f32.mxu0 0.0
    %2078 = vmatmul.mubr.f32.gmra.mrb[0].mxu0 %v1853
    %v2079 = vpop.f32.mrb[0].mxu0
    %v2080 = vadd.f32 %v1933, %v2079
    %v2081 = vpop.f32.mrb[0].mxu0
    %v2082 = vadd.f32 %v1937, %v2081
    %2083 = vdwg.mxu0
    %v2084 = vmul.f32 %v2009, 0.5
    %v2085 = vmul.f32 %v2011, 0.5
    %v2086 = vmul.f32 %v2080, 0.5
    %v2087 = vmul.f32 %v2082, 0.5
    %v2088 = vmul.f32 %v2009, 0.70710677
    %v2089 = vmul.f32 %v2011, 0.70710677
    %v2090 = vmul.f32 %v2080, 0.70710677
    %v2091 = vmul.f32 %v2082, 0.70710677
    %v2092 = verf.f32.pop %v2088
    %v2093 = verf.f32.pop %v2089
    %v2094 = verf.f32.pop %v2090
    %v2095 = verf.f32.pop %v2091
    %v2096 = vadd.f32 %v2092, 1.0
    %v2097 = vadd.f32 %v2093, 1.0
    %v2098 = vadd.f32 %v2094, 1.0
    %v2099 = vadd.f32 %v2095, 1.0
    %v2100 = vmul.f32 %v2084, %v2096
    %v2101 = vmul.f32 %v2085, %v2097
    %v2102 = vmul.f32 %v2086, %v2098
    %v2103 = vmul.f32 %v2087, %v2099
    %s2104 = scalar_lea.vmem [#allocation10], 512
    %v2105 = vld [vmem:[%s2104] sm:$0xff]
    %v2106 = vld [vmem:[%s2104 + $0x8] sm:$0xff]
    %v2107 = vld [vmem:[%s2104 + $0x10] sm:$0xff]
    %v2108 = vld [vmem:[%s2104 + $0x18] sm:$0xff]
    %v2109 = vld [vmem:[%s2104 + $0x20] sm:$0xff]
    %v2110 = vld [vmem:[%s2104 + $0x28] sm:$0xff]
    %v2111 = vld [vmem:[%s2104 + $0x30] sm:$0xff]
    %v2112 = vld [vmem:[%s2104 + $0x38] sm:$0xff]
    %v2113 = vld [vmem:[%s2104 + $0x40] sm:$0xff]
    %v2114 = vld [vmem:[%s2104 + $0x48] sm:$0xff]
    %v2115 = vld [vmem:[%s2104 + $0x50] sm:$0xff]
    %v2116 = vld [vmem:[%s2104 + $0x58] sm:$0xff]
    %v2117 = vld [vmem:[%s2104 + $0x60] sm:$0xff]
    %v2118 = vld [vmem:[%s2104 + $0x68] sm:$0xff]
    %v2119 = vld [vmem:[%s2104 + $0x70] sm:$0xff]
    %v2120 = vld [vmem:[%s2104 + $0x78] sm:$0xff]
    %v2121 = vld [vmem:[%s2104 + $0x80] sm:$0xff]
    %v2122 = vld [vmem:[%s2104 + $0x88] sm:$0xff]
    %v2123 = vld [vmem:[%s2104 + $0x90] sm:$0xff]
    %v2124 = vld [vmem:[%s2104 + $0x98] sm:$0xff]
    %v2125 = vld [vmem:[%s2104 + $0xa0] sm:$0xff]
    %v2126 = vld [vmem:[%s2104 + $0xa8] sm:$0xff]
    %v2127 = vld [vmem:[%s2104 + $0xb0] sm:$0xff]
    %v2128 = vld [vmem:[%s2104 + $0xb8] sm:$0xff]
    %v2129 = vld [vmem:[%s2104 + $0xc0] sm:$0xff]
    %v2130 = vld [vmem:[%s2104 + $0xc8] sm:$0xff]
    %v2131 = vld [vmem:[%s2104 + $0xd0] sm:$0xff]
    %v2132 = vld [vmem:[%s2104 + $0xd8] sm:$0xff]
    %v2133 = vld [vmem:[%s2104 + $0xe0] sm:$0xff]
    %v2134 = vld [vmem:[%s2104 + $0xe8] sm:$0xff]
    %v2135 = vld [vmem:[%s2104 + $0xf0] sm:$0xff]
    %v2136 = vld [vmem:[%s2104 + $0xf8] sm:$0xff]
    %v2137 = vld [vmem:[%s2104 + $0x100] sm:$0xff]
    %v2138 = vld [vmem:[%s2104 + $0x108] sm:$0xff]
    %v2139 = vld [vmem:[%s2104 + $0x110] sm:$0xff]
    %v2140 = vld [vmem:[%s2104 + $0x118] sm:$0xff]
    %v2141 = vld [vmem:[%s2104 + $0x120] sm:$0xff]
    %v2142 = vld [vmem:[%s2104 + $0x128] sm:$0xff]
    %v2143 = vld [vmem:[%s2104 + $0x130] sm:$0xff]
    %v2144 = vld [vmem:[%s2104 + $0x138] sm:$0xff]
    %v2145 = vld [vmem:[%s2104 + $0x140] sm:$0xff]
    %v2146 = vld [vmem:[%s2104 + $0x148] sm:$0xff]
    %v2147 = vld [vmem:[%s2104 + $0x150] sm:$0xff]
    %v2148 = vld [vmem:[%s2104 + $0x158] sm:$0xff]
    %v2149 = vld [vmem:[%s2104 + $0x160] sm:$0xff]
    %v2150 = vld [vmem:[%s2104 + $0x168] sm:$0xff]
    %v2151 = vld [vmem:[%s2104 + $0x170] sm:$0xff]
    %v2152 = vld [vmem:[%s2104 + $0x178] sm:$0xff]
    %v2153 = vld [vmem:[%s2104 + $0x180] sm:$0xff]
    %v2154 = vld [vmem:[%s2104 + $0x188] sm:$0xff]
    %v2155 = vld [vmem:[%s2104 + $0x190] sm:$0xff]
    %v2156 = vld [vmem:[%s2104 + $0x198] sm:$0xff]
    %v2157 = vld [vmem:[%s2104 + $0x1a0] sm:$0xff]
    %v2158 = vld [vmem:[%s2104 + $0x1a8] sm:$0xff]
    %v2159 = vld [vmem:[%s2104 + $0x1b0] sm:$0xff]
    %v2160 = vld [vmem:[%s2104 + $0x1b8] sm:$0xff]
    %v2161 = vld [vmem:[%s2104 + $0x1c0] sm:$0xff]
    %v2162 = vld [vmem:[%s2104 + $0x1c8] sm:$0xff]
    %v2163 = vld [vmem:[%s2104 + $0x1d0] sm:$0xff]
    %v2164 = vld [vmem:[%s2104 + $0x1d8] sm:$0xff]
    %v2165 = vld [vmem:[%s2104 + $0x1e0] sm:$0xff]
    %v2166 = vld [vmem:[%s2104 + $0x1e8] sm:$0xff]
    %v2167 = vld [vmem:[%s2104 + $0x1f0] sm:$0xff]
    %v2168 = vld [vmem:[%s2104 + $0x1f8] sm:$0xff]
    %2169 = vmatprep.subr.mxu0 0.0
    %2170 = vmatpush1.msra.mxu0 %v2105
    %2171 = vmatprep.subr.mxu0 0.0
    %2172 = vmatpush1.msra.mxu0 %v2106
    %2173 = vmatprep.subr.mxu0 0.0
    %2174 = vmatpush1.msra.mxu0 %v2107
    %2175 = vmatprep.subr.mxu0 0.0
    %2176 = vmatpush1.msra.mxu0 %v2108
    %2177 = vmatprep.subr.mxu0 0.0
    %2178 = vmatpush1.msra.mxu0 %v2109
    %2179 = vmatprep.subr.mxu0 0.0
    %2180 = vmatpush1.msra.mxu0 %v2110
    %2181 = vmatprep.subr.mxu0 0.0
    %2182 = vmatpush1.msra.mxu0 %v2111
    %2183 = vmatprep.subr.mxu0 0.0
    %2184 = vmatpush1.msra.mxu0 %v2112
    %2185 = vmatprep.subr.mxu0 0.0
    %2186 = vmatpush1.msra.mxu0 %v2113
    %2187 = vmatprep.subr.mxu0 0.0
    %2188 = vmatpush1.msra.mxu0 %v2114
    %2189 = vmatprep.subr.mxu0 0.0
    %2190 = vmatpush1.msra.mxu0 %v2115
    %2191 = vmatprep.subr.mxu0 0.0
    %2192 = vmatpush1.msra.mxu0 %v2116
    %2193 = vmatprep.subr.mxu0 0.0
    %2194 = vmatpush1.msra.mxu0 %v2117
    %2195 = vmatprep.subr.mxu0 0.0
    %2196 = vmatpush1.msra.mxu0 %v2118
    %2197 = vmatprep.subr.mxu0 0.0
    %2198 = vmatpush1.msra.mxu0 %v2119
    %2199 = vmatprep.subr.mxu0 0.0
    %2200 = vmatpush1.msra.mxu0 %v2120
    %2201 = vmatprep.subr.mxu0 0.0
    %2202 = vmatpush1.msra.mxu0 %v2121
    %2203 = vmatprep.subr.mxu0 0.0
    %2204 = vmatpush1.msra.mxu0 %v2122
    %2205 = vmatprep.subr.mxu0 0.0
    %2206 = vmatpush1.msra.mxu0 %v2123
    %2207 = vmatprep.subr.mxu0 0.0
    %2208 = vmatpush1.msra.mxu0 %v2124
    %2209 = vmatprep.subr.mxu0 0.0
    %2210 = vmatpush1.msra.mxu0 %v2125
    %2211 = vmatprep.subr.mxu0 0.0
    %2212 = vmatpush1.msra.mxu0 %v2126
    %2213 = vmatprep.subr.mxu0 0.0
    %2214 = vmatpush1.msra.mxu0 %v2127
    %2215 = vmatprep.subr.mxu0 0.0
    %2216 = vmatpush1.msra.mxu0 %v2128
    %2217 = vmatprep.subr.mxu0 0.0
    %2218 = vmatpush1.msra.mxu0 %v2129
    %2219 = vmatprep.subr.mxu0 0.0
    %2220 = vmatpush1.msra.mxu0 %v2130
    %2221 = vmatprep.subr.mxu0 0.0
    %2222 = vmatpush1.msra.mxu0 %v2131
    %2223 = vmatprep.subr.mxu0 0.0
    %2224 = vmatpush1.msra.mxu0 %v2132
    %2225 = vmatprep.subr.mxu0 0.0
    %2226 = vmatpush1.msra.mxu0 %v2133
    %2227 = vmatprep.subr.mxu0 0.0
    %2228 = vmatpush1.msra.mxu0 %v2134
    %2229 = vmatprep.subr.mxu0 0.0
    %2230 = vmatpush1.msra.mxu0 %v2135
    %2231 = vmatprep.subr.mxu0 0.0
    %2232 = vmatpush1.msra.mxu0 %v2136
    %2233 = vmatprep.mubr.f32.mxu0 %v2101
    %2234 = vmatmul.mubr.f32.gmra.mrb[0].mxu0 %v2100
    %v2235 = vpop.f32.mrb[0].mxu0
    %v2236 = vadd.f32 0.0, %v2235
    %v2237 = vpop.f32.mrb[0].mxu0
    %2238 = vdwg.mxu0
    %2239 = vmatprep.subr.mxu0 0.0
    %2240 = vmatpush1.msra.mxu0 %v2137
    %2241 = vmatprep.subr.mxu0 0.0
    %2242 = vmatpush1.msra.mxu0 %v2138
    %2243 = vmatprep.subr.mxu0 0.0
    %2244 = vmatpush1.msra.mxu0 %v2139
    %2245 = vmatprep.subr.mxu0 0.0
    %2246 = vmatpush1.msra.mxu0 %v2140
    %2247 = vmatprep.subr.mxu0 0.0
    %2248 = vmatpush1.msra.mxu0 %v2141
    %2249 = vmatprep.subr.mxu0 0.0
    %2250 = vmatpush1.msra.mxu0 %v2142
    %2251 = vmatprep.subr.mxu0 0.0
    %2252 = vmatpush1.msra.mxu0 %v2143
    %2253 = vmatprep.subr.mxu0 0.0
    %2254 = vmatpush1.msra.mxu0 %v2144
    %2255 = vmatprep.subr.mxu0 0.0
    %2256 = vmatpush1.msra.mxu0 %v2145
    %2257 = vmatprep.subr.mxu0 0.0
    %2258 = vmatpush1.msra.mxu0 %v2146
    %2259 = vmatprep.subr.mxu0 0.0
    %2260 = vmatpush1.msra.mxu0 %v2147
    %2261 = vmatprep.subr.mxu0 0.0
    %2262 = vmatpush1.msra.mxu0 %v2148
    %2263 = vmatprep.subr.mxu0 0.0
    %2264 = vmatpush1.msra.mxu0 %v2149
    %2265 = vmatprep.subr.mxu0 0.0
    %2266 = vmatpush1.msra.mxu0 %v2150
    %2267 = vmatprep.subr.mxu0 0.0
    %2268 = vmatpush1.msra.mxu0 %v2151
    %2269 = vmatprep.subr.mxu0 0.0
    %2270 = vmatpush1.msra.mxu0 %v2152
    %2271 = vmatprep.subr.mxu0 0.0
    %2272 = vmatpush1.msra.mxu0 %v2153
    %2273 = vmatprep.subr.mxu0 0.0
    %2274 = vmatpush1.msra.mxu0 %v2154
    %2275 = vmatprep.subr.mxu0 0.0
    %2276 = vmatpush1.msra.mxu0 %v2155
    %2277 = vmatprep.subr.mxu0 0.0
    %2278 = vmatpush1.msra.mxu0 %v2156
    %2279 = vmatprep.subr.mxu0 0.0
    %2280 = vmatpush1.msra.mxu0 %v2157
    %2281 = vmatprep.subr.mxu0 0.0
    %2282 = vmatpush1.msra.mxu0 %v2158
    %2283 = vmatprep.subr.mxu0 0.0
    %2284 = vmatpush1.msra.mxu0 %v2159
    %2285 = vmatprep.subr.mxu0 0.0
    %2286 = vmatpush1.msra.mxu0 %v2160
    %2287 = vmatprep.subr.mxu0 0.0
    %2288 = vmatpush1.msra.mxu0 %v2161
    %2289 = vmatprep.subr.mxu0 0.0
    %2290 = vmatpush1.msra.mxu0 %v2162
    %2291 = vmatprep.subr.mxu0 0.0
    %2292 = vmatpush1.msra.mxu0 %v2163
    %2293 = vmatprep.subr.mxu0 0.0
    %2294 = vmatpush1.msra.mxu0 %v2164
    %2295 = vmatprep.subr.mxu0 0.0
    %2296 = vmatpush1.msra.mxu0 %v2165
    %2297 = vmatprep.subr.mxu0 0.0
    %2298 = vmatpush1.msra.mxu0 %v2166
    %2299 = vmatprep.subr.mxu0 0.0
    %2300 = vmatpush1.msra.mxu0 %v2167
    %2301 = vmatprep.subr.mxu0 0.0
    %2302 = vmatpush1.msra.mxu0 %v2168
    %2303 = vmatprep.mubr.f32.mxu0 %v2103
    %2304 = vmatmul.mubr.f32.gmra.mrb[0].mxu0 %v2102
    %v2305 = vpop.f32.mrb[0].mxu0
    %v2306 = vadd.f32 %v2236, %v2305
    %v2307 = vpop.f32.mrb[0].mxu0
    %2308 = vdwg.mxu0
    %v2309 = vadd.f32 %v1822, %v2306
    %s2310 = scalar_lea.vmem %s17, 1
    %v2311 = vld [vmem:[%s2310] sm:$0x1]
    %v2313 = vlaneseq
    %v2314 = vshrl.u32 %v2313, 7
    %v2315 = vsub.s32 0, %v2314
    %v2316 = vrot.slane %v2311, %v2315
    %v2318 = vadd.f32 %v2309, %v2316
    %v2319 = vld [vmem:[%s18] sm:$0x1]
    %v2320 = vld [vmem:[%s19] sm:$0x1]
    %v2321 = vsel %vm451, %v2318, 0.0
    %2322 = vadd.xlane.f32.xlu0 %v2321
    %v2323 = vpop.xlane.xlu0 %2322
    %v2324 = vmul.f32 %v2323, %v455
    %v2325 = vsub.f32 %v2318, %v2324
    %v2326 = vmul.f32 %v2325, %v2325
    %v2327 = vsel %vm451, %v2326, 0.0
    %2328 = vadd.xlane.f32.xlu0 %v2327
    %v2329 = vpop.xlane.xlu0 %2328
    %v2330 = vmul.f32 %v2329, %v455
    %v2331 = vadd.f32 %v2330, 1e-05
    %v2332 = vrsqrt.pop %v2331
    %v2333 = vmul.f32 %v2325, %v2332
    %v2335 = vlaneseq
    %v2336 = vshrl.u32 %v2335, 7
    %v2337 = vsub.s32 0, %v2336
    %v2338 = vrot.slane %v2319, %v2337
    %v2340 = vmul.f32 %v2333, %v2338
    %v2342 = vlaneseq
    %v2343 = vshrl.u32 %v2342, 7
    %v2344 = vsub.s32 0, %v2343
    %v2345 = vrot.slane %v2320, %v2344
    %v2347 = vadd.f32 %v2340, %v2345
    %v2349 = vcombine.high %v2347, %v2347
    %v2351 = vunpack.c.l.s4 1983009808
    %v2352 = vunpack.c.0.s8 %v2351
    %v2353 = vlaneseq
    %v2354 = vshrl.u32 %v2353, 7
    %v2355 = vsub.s32 %v2352, %v2354
    %v2356 = vrot.slane %v2347, %v2355
    %v2358 = vunpack.c.l.s4 1983009808
    %v2359 = vunpack.c.0.s8 %v2358
    %v2360 = vlaneseq
    %v2361 = vshrl.u32 %v2360, 7
    %v2362 = vsub.s32 %v2359, %v2361
    %v2363 = vrot.slane %v2349, %v2362
    %v2364 = vcombine.high %v2356, %v2356
    %2368 = vst [vmem:[#allocation11] sm:$0x3] %v2356
    %2369 = vst [vmem:[#allocation11 + $0x2] sm:$0x3] %v2364
    %2370 = vst [vmem:[#allocation11 + $0x4] sm:$0x3] %v2363
    // Predicated region
    $region102: #{mae_encoder_pretrain_forward.1} parent=1 // pred_check
      _
    $region103: #{mae_encoder_pretrain_forward.1} parent=1 // pred_check_branch
      %2372 = sbr.rel (0) target = $region105
    $region104: #{mae_encoder_pretrain_forward.1} parent=1 // pred_region
      %s2374 = ssub.s32 96, 96
      %2375 = vsyncadd [#allocation4], %s2374
      %s2376 = sshll.u32 [#allocation11], 4
      %s2377 = int_to_ptr.vmem [resolvable:$true] %s2376
      %2382 = dma.vmem_to_hbm [thread:$0]  %s2377, 96, %s20, [#allocation4], 32, 32, 2
    $region105: #{mae_encoder_pretrain_forward.1} parent=1 // pred_fallthru
      _
    // Predicated region
    $region106: #{mae_encoder_pretrain_forward.1} parent=1 // pred_check
      _
    $region107: #{mae_encoder_pretrain_forward.1} parent=1 // pred_check_branch
      %2384 = sbr.rel (0) target = $region109
    $region108: #{mae_encoder_pretrain_forward.1} parent=1 // pred_region
      %s2386 = ssub.s32 96, 96
      %2387 = vsyncadd [#allocation13], %s2386
      %s2389 = sshll.u32 [#allocation12], 4
      %s2390 = int_to_ptr.vmem [resolvable:$true] %s2389
      %2392 = dma.vmem_to_hbm [thread:$0]  %s2390, 96, %s21, [#allocation13]
    $region109: #{mae_encoder_pretrain_forward.1} parent=1 // pred_fallthru
      _
    // Predicated region
    $region110: #{mae_encoder_pretrain_forward.1} parent=1 // pred_check
      _
    $region111: #{mae_encoder_pretrain_forward.1} parent=1 // pred_check_branch
      %2394 = sbr.rel (0) target = $region113
    $region112: #{mae_encoder_pretrain_forward.1} parent=1 // pred_region
      %2395 = dma.done [#allocation4], 96
    $region113: #{mae_encoder_pretrain_forward.1} parent=1 // pred_fallthru
      _
    // Predicated region
    $region114: #{mae_encoder_pretrain_forward.1} parent=1 // pred_check
      _
    $region115: #{mae_encoder_pretrain_forward.1} parent=1 // pred_check_branch
      %2397 = sbr.rel (0) target = $region117
    $region116: #{mae_encoder_pretrain_forward.1} parent=1 // pred_region
      %2398 = dma.done [#allocation13], 96
    $region117: #{mae_encoder_pretrain_forward.1} parent=1 // pred_fallthru
      _
    %2399 = vsyncpa [#allocation3], 1
    %2400 = vsyncpa [#allocation6], 1
    %2401 = vsyncpa [#allocation9], 1
    %2402 = vsyncpa [#allocation4], 1
    %2403 = vsyncpa [#allocation13], 1

</llo_original>
